<compile_context>
chip_gen: v7x
topology: tpu7x:2x2x1
jax: 0.10.0
libtpu: 0.0.40
codegen_flags: <defaults>
</compile_context>

<pallas_src>
import functools

import jax
import jax.numpy as jnp
import numpy as np
from jax.experimental import pallas as pl
from jax.experimental.pallas import tpu as pltpu


# -----------------------------------------------------------------------------
# Pallas kernel: CGCNN conv trunk + per-graph site-mean pooling for a group of
# `sub_batch` graphs flattened into the matmul M dimension.
# -----------------------------------------------------------------------------
def _cgcnn_kernel(g12_ref, sc_ref, pool_ref, sites_ref, bonds_ref,
                  w_site_ref, w_bond_ref, b_all_ref, pooled_ref, zbond_ref,
                  *, n_blocks, site_len, sub_batch, n_edges):
    S = site_len
    BbE = sub_batch * n_edges

    s = sites_ref[0]            # (Bb*N, S)   flattened embedded sites
    bonds = bonds_ref[0]        # (Bb*E, Bn)  flattened embedded bonds
    g12 = g12_ref[...]          # (2*Bb*E, Bb*N) stacked block-diag gather (idx1|idx2)
    sc = sc_ref[...]            # (Bb*N, Bb*E)   block-diag scatter_add by idx1

    # --- layer-invariant bond projection, hoisted out of the layer loop:
    # one matmul with n_blocks*2S output lanes instead of n_blocks tiny ones.
    zb_all = (jnp.dot(bonds, w_bond_ref[...], preferred_element_type=jnp.float32)
              + b_all_ref[...])                            # (Bb*E, n_blocks*2S)
    for l in range(n_blocks):                              # static lane slices, done once
        zbond_ref[l] = zb_all[:, l * 2 * S:(l + 1) * 2 * S]

    def layer(l, s):
        # gather sites1|sites2 with ONE stacked one-hot matmul
        s12 = jnp.dot(g12, s, preferred_element_type=jnp.float32)     # (2*Bb*E, S)
        s1 = s12[:BbE]                                                 # aligned sublane slices
        s2 = s12[BbE:]
        wl = w_site_ref[l]                                             # (2S, 2S)
        # fused Linear(concat([s1, s2, bonds])) with [W_sig | W_soft] packed
        # along the output dim; bond term comes from the hoisted scratch.
        z = (jnp.dot(s1, wl[:S], preferred_element_type=jnp.float32)
             + jnp.dot(s2, wl[S:], preferred_element_type=jnp.float32)
             + zbond_ref[l])                                           # (Bb*E, 2S)
        # lanes 0:S -> sigmoid gate, lanes S:2S -> relu branch
        # (switch approx=True once VALU-bound at realistic sizes; exact here)
        gate = pl.reciprocal(1.0 + jnp.exp(-z[:, :S]), approx=False)
        vectors = gate * jnp.maximum(z[:, S:], 0.0)                    # (Bb*E, S)
        # residual scatter_add along the flattened site dim
        return s + jnp.dot(sc, vectors, preferred_element_type=jnp.float32)

    s = jax.lax.fori_loop(0, n_blocks, layer, s, unroll=True)

    # per-graph mean over sites as a lane-dense (Bb, Bb*N) x (Bb*N, S) matmul
    pooled_ref[0] = jnp.dot(pool_ref[...], s, preferred_element_type=jnp.float32)


# -----------------------------------------------------------------------------
# Wrapper: batch-invariant graph operators + pallas_call.
# -----------------------------------------------------------------------------
def _graph_operators(idx1, idx2, n_sites, n_edges, sub_batch):
    """One-hot gather / scatter / pooling operators for `sub_batch` flattened
    graphs that all share the same (idx1, idx2) topology."""
    offs = (jnp.arange(sub_batch, dtype=jnp.int32) * n_sites)[:, None]       # (Bb,1)
    i1 = (idx1[None, :].astype(jnp.int32) + offs).reshape(-1)                # (Bb*E,)
    i2 = (idx2[None, :].astype(jnp.int32) + offs).reshape(-1)
    g1 = jax.nn.one_hot(i1, sub_batch * n_sites, dtype=jnp.float32)          # (Bb*E, Bb*N)
    g2 = jax.nn.one_hot(i2, sub_batch * n_sites, dtype=jnp.float32)
    g12 = jnp.concatenate([g1, g2], axis=0)                                  # (2*Bb*E, Bb*N)
    scat = g1.T                                                              # (Bb*N, Bb*E)
    site_graph = jnp.repeat(jnp.arange(sub_batch, dtype=jnp.int32), n_sites)
    pool = jax.nn.one_hot(site_graph, sub_batch, dtype=jnp.float32).T / float(n_sites)
    return g12, scat, pool                                                   # + (Bb, Bb*N)


def cgcnn_pallas_trunk(sites_emb, bonds_emb, idx1, idx2, w_site, w_bond_all,
                       b_all, *, n_blocks, sub_batch):
    B, N, S = sites_emb.shape
    _, E, Bn = bonds_emb.shape
    assert B % sub_batch == 0, "batch must be divisible by sub_batch"
    G = B // sub_batch
    BbN, BbE = sub_batch * N, sub_batch * E

    g12, scat, pool = _graph_operators(idx1, idx2, N, E, sub_batch)

    sites_flat = sites_emb.reshape(G, BbN, S).astype(jnp.float32)
    bonds_flat = bonds_emb.reshape(G, BbE, Bn).astype(jnp.float32)

    kernel = functools.partial(_cgcnn_kernel, n_blocks=n_blocks, site_len=S,
                               sub_batch=sub_batch, n_edges=E)

    pooled = pl.pallas_call(
        kernel,
        out_shape=jax.ShapeDtypeStruct((G, sub_batch, S), jnp.float32),
        grid_spec=pltpu.PrefetchScalarGridSpec(
            num_scalar_prefetch=0,
            grid=(G,),
            in_specs=[
                pl.BlockSpec((2 * BbE, BbN), lambda g: (0, 0)),              # gather op
                pl.BlockSpec((BbN, BbE), lambda g: (0, 0)),                  # scatter op
                pl.BlockSpec((sub_batch, BbN), lambda g: (0, 0)),            # mean-pool op
                pl.BlockSpec((1, BbN, S), lambda g: (g, 0, 0)),              # sites
                pl.BlockSpec((1, BbE, Bn), lambda g: (g, 0, 0)),             # bonds
                pl.BlockSpec((n_blocks, 2 * S, 2 * S), lambda g: (0, 0, 0)), # site weights
                pl.BlockSpec((Bn, n_blocks * 2 * S), lambda g: (0, 0)),      # bond weights (fused)
                pl.BlockSpec((1, n_blocks * 2 * S), lambda g: (0, 0)),       # fused biases
            ],
            out_specs=pl.BlockSpec((1, sub_batch, S), lambda g: (g, 0, 0)),
            scratch_shapes=[pltpu.VMEM((n_blocks, BbE, 2 * S), jnp.float32)],
        ),
        compiler_params=pltpu.CompilerParams(
            dimension_semantics=("parallel",),
            vmem_limit_bytes=32 * 1024 * 1024),
    )(g12, scat, pool, sites_flat, bonds_flat, w_site, w_bond_all, b_all)
    return pooled.reshape(B, S)


# -----------------------------------------------------------------------------
# JAX glue: gaussian basis, embeddings, weight fusion, batched FC head.
# -----------------------------------------------------------------------------
def gaussian_basis(d, *, max_distance, num_centers, width, min_distance):
    # TODO(synk): gaussian_basis definition not provided in source; assumed the
    # standard RBF expansion exp(-(d - mu)^2 / width^2), mu = linspace(min, max).
    mu = jnp.linspace(min_distance, max_distance, num_centers, dtype=jnp.float32)
    return jnp.exp(-((d[..., None] - mu) ** 2) / (width ** 2))


def cgcnn_forward(params, sites_raw, bonds_raw, idx1, idx2, cfg, *, sub_batch):
    gb = gaussian_basis(bonds_raw, max_distance=cfg["mx_d"], num_centers=cfg["centers"],
                        width=cfg["width"], min_distance=cfg["mn_d"])
    # TODO(synk): EmbeddingLayer definition not provided; assumed nn.Linear(in, out).
    sites_emb = sites_raw @ params["site_emb_w"] + params["site_emb_b"]   # (B, N, S)
    bonds_emb = gb @ params["bond_emb_w"] + params["bond_emb_b"]          # (B, E, Bn)

    S, L = cfg["site_emb"], cfg["n_blocks"]
    # Fuse the two gate Linears along the output dim: (L, C, 2S) / (L, 2S).
    w_fused = jnp.concatenate([params["conv_wsig"], params["conv_wsoft"]], axis=-1)
    b_fused = jnp.concatenate([params["conv_bsig"], params["conv_bsoft"]], axis=-1)
    w_site = w_fused[:, :2 * S, :].astype(jnp.float32)                    # (L, 2S, 2S)
    # Bond rows regrouped as one (Bn, L*2S) weight so the bond projection is a
    # single matmul hoisted out of the layer loop.
    w_bond_all = jnp.transpose(w_fused[:, 2 * S:, :], (1, 0, 2)).reshape(
        w_fused.shape[1] - 2 * S, L * 2 * S).astype(jnp.float32)
    b_all = b_fused.reshape(1, L * 2 * S).astype(jnp.float32)

    pooled = cgcnn_pallas_trunk(sites_emb, bonds_emb, idx1, idx2,
                                w_site, w_bond_all, b_all,
                                n_blocks=L, sub_batch=sub_batch)          # (B, S)

    # 3-layer FC head, batched over B, outside the kernel (plain XLA matmuls).
    h = jax.nn.relu(pooled @ params["fc_w1"] + params["fc_b1"])
    h = jax.nn.relu(h @ params["fc_w2"] + params["fc_b2"])
    return h @ params["fc_w3"] + params["fc_b3"]                          # (B, 1)


def cgcnn_reference(params, sites_raw, bonds_raw, idx1, idx2, cfg):
    """Pure-JAX reference mirroring the PyTorch forward semantics."""
    B, N, _ = sites_raw.shape
    gb = gaussian_basis(bonds_raw, max_distance=cfg["mx_d"], num_centers=cfg["centers"],
                        width=cfg["width"], min_distance=cfg["mn_d"])
    s = sites_raw @ params["site_emb_w"] + params["site_emb_b"]
    bonds = gb @ params["bond_emb_w"] + params["bond_emb_b"]
    # TODO(synk): scatter_add not defined in source; assumed index_add into N sites.
    sc = jax.nn.one_hot(idx1, N, dtype=jnp.float32).T
    for l in range(cfg["n_blocks"]):
        s1 = jnp.take(s, idx1, axis=1)
        s2 = jnp.take(s, idx2, axis=1)
        v = jnp.concatenate([s1, s2, bonds], axis=2)
        z = (jax.nn.sigmoid(v @ params["conv_wsig"][l] + params["conv_bsig"][l])
             * jax.nn.relu(v @ params["conv_wsoft"][l] + params["conv_bsoft"][l]))
        s = s + jnp.einsum("ne,bef->bnf", sc, z)
    vec = s.mean(1)
    h = jax.nn.relu(vec @ params["fc_w1"] + params["fc_b1"])
    h = jax.nn.relu(h @ params["fc_w2"] + params["fc_b2"])
    return h @ params["fc_w3"] + params["fc_b3"]


# -----------------------------------------------------------------------------
# Deterministic parameter init (PyTorch nn.Linear-style uniform bounds).
# -----------------------------------------------------------------------------
def _linear_params(key, fan_in, fan_out):
    kw, kb = jax.random.split(key)
    bound = 1.0 / np.sqrt(fan_in)
    w = jax.random.uniform(kw, (fan_in, fan_out), jnp.float32, -bound, bound)
    b = jax.random.uniform(kb, (fan_out,), jnp.float32, -bound, bound)
    return w, b


def init_params(key, cfg):
    S, Bn = cfg["site_emb"], cfg["bond_emb"]
    C = 2 * S + Bn
    h1, h2, L = cfg["h1"], cfg["h2"], cfg["n_blocks"]
    keys = jax.random.split(key, 5 + 2 * L)
    p = {}
    p["site_emb_w"], p["site_emb_b"] = _linear_params(keys[0], 1, S)
    p["bond_emb_w"], p["bond_emb_b"] = _linear_params(keys[1], cfg["centers"], Bn)
    wsig, bsig, wsoft, bsoft = [], [], [], []
    for l in range(L):
        w, b = _linear_params(keys[2 + 2 * l], C, S)
        wsig.append(w); bsig.append(b)
        w, b = _linear_params(keys[3 + 2 * l], C, S)
        wsoft.append(w); bsoft.append(b)
    p["conv_wsig"] = jnp.stack(wsig); p["conv_bsig"] = jnp.stack(bsig)
    p["conv_wsoft"] = jnp.stack(wsoft); p["conv_bsoft"] = jnp.stack(bsoft)
    p["fc_w1"], p["fc_b1"] = _linear_params(keys[2 + 2 * L], S, h1)
    p["fc_w2"], p["fc_b2"] = _linear_params(keys[3 + 2 * L], h1, h2)
    p["fc_w3"], p["fc_b3"] = _linear_params(keys[4 + 2 * L], h2, 1)
    return p


if __name__ == "__main__":
    cfg = dict(site_emb=8, bond_emb=8, centers=10, width=1.0, mx_d=10.0, mn_d=0.0,
               h1=24, h2=24, n_blocks=6)

    # B=4 graphs, Bb=2 per grid step -> grid=(2,) (2 parallel steps, M=Bb*E=32).
    B, N, E, SUB_BATCH = 4, 8, 16, 2
    key = jax.random.PRNGKey(0)
    k_p, k_s, k_b, k_i1, k_i2 = jax.random.split(key, 5)

    params = init_params(k_p, cfg)
    sites_raw = jax.random.normal(k_s, (B, N, 1), jnp.float32)           # raw site feature
    bonds_raw = jax.random.uniform(k_b, (B, E), jnp.float32, 0.0, 10.0)  # bond distances
    idx1 = jax.random.randint(k_i1, (E,), 0, N, jnp.int32)
    idx2 = jax.random.randint(k_i2, (E,), 0, N, jnp.int32)

    out = cgcnn_forward(params, sites_raw, bonds_raw, idx1, idx2, cfg,
                        sub_batch=SUB_BATCH)
    out = jax.block_until_ready(out)

    ref = cgcnn_reference(params, sites_raw, bonds_raw, idx1, idx2, cfg)
    ref = jax.block_until_ready(ref)

    assert out.shape == (B, 1), out.shape
    np.testing.assert_allclose(np.asarray(out), np.asarray(ref), rtol=1e-4, atol=1e-4)
    print("KERNEL_OK")
</pallas_src>

<mosaic_0001>
module attributes {stable_mosaic.version = 11 : i64} {
  func.func @_cgcnn_kernel(%arg0: i32, %arg1: memref<64x16xf32, #tpu.memory_space<vmem>>, %arg2: memref<16x32xf32, #tpu.memory_space<vmem>>, %arg3: memref<2x16xf32, #tpu.memory_space<vmem>>, %arg4: memref<1x16x8xf32, #tpu.memory_space<vmem>>, %arg5: memref<1x32x8xf32, #tpu.memory_space<vmem>>, %arg6: memref<6x16x16xf32, #tpu.memory_space<vmem>>, %arg7: memref<8x96xf32, #tpu.memory_space<vmem>>, %arg8: memref<1x96xf32, #tpu.memory_space<vmem>>, %arg9: memref<1x2x8xf32, #tpu.memory_space<vmem>>, %arg10: memref<6x32x16xf32, #tpu.memory_space<vmem>>) attributes {dimension_semantics = [#tpu.dimension_semantics<parallel>], iteration_bounds = array<i64: 2>, scalar_prefetch = 0 : i64, scratch_operands = 1 : i64, tpu.core_type = #tpu.core_type<tc>, window_params = [{pipeline_mode = #tpu.pipeline_mode<synchronous>, transform_indices = @transform_0, window_bounds = array<i64: 64, 16>}, {pipeline_mode = #tpu.pipeline_mode<synchronous>, transform_indices = @transform_1, window_bounds = array<i64: 16, 32>}, {pipeline_mode = #tpu.pipeline_mode<synchronous>, transform_indices = @transform_2, window_bounds = array<i64: 2, 16>}, {transform_indices = @transform_3, window_bounds = array<i64: 1, 16, 8>}, {transform_indices = @transform_4, window_bounds = array<i64: 1, 32, 8>}, {pipeline_mode = #tpu.pipeline_mode<synchronous>, transform_indices = @transform_5, window_bounds = array<i64: 6, 16, 16>}, {pipeline_mode = #tpu.pipeline_mode<synchronous>, transform_indices = @transform_6, window_bounds = array<i64: 8, 96>}, {pipeline_mode = #tpu.pipeline_mode<synchronous>, transform_indices = @transform_7, window_bounds = array<i64: 1, 96>}, {transform_indices = @transform_8, window_bounds = array<i64: 1, 2, 8>}]} {
    %c0 = arith.constant 0 : index
    %c0_0 = arith.constant 0 : index
    %c0_1 = arith.constant 0 : index
    %0 = vector.load %arg4[%c0, %c0_0, %c0_1] : memref<1x16x8xf32, #tpu.memory_space<vmem>>, vector<1x16x8xf32>
    %1 = vector.shape_cast %0 : vector<1x16x8xf32> to vector<16x8xf32>
    %c0_2 = arith.constant 0 : index
    %c0_3 = arith.constant 0 : index
    %c0_4 = arith.constant 0 : index
    %2 = vector.load %arg5[%c0_2, %c0_3, %c0_4] : memref<1x32x8xf32, #tpu.memory_space<vmem>>, vector<1x32x8xf32>
    %3 = vector.shape_cast %2 : vector<1x32x8xf32> to vector<32x8xf32>
    %c0_5 = arith.constant 0 : index
    %c0_6 = arith.constant 0 : index
    %4 = vector.load %arg1[%c0_5, %c0_6] : memref<64x16xf32, #tpu.memory_space<vmem>>, vector<64x16xf32>
    %c0_7 = arith.constant 0 : index
    %c0_8 = arith.constant 0 : index
    %5 = vector.load %arg2[%c0_7, %c0_8] : memref<16x32xf32, #tpu.memory_space<vmem>>, vector<16x32xf32>
    %c0_9 = arith.constant 0 : index
    %c0_10 = arith.constant 0 : index
    %6 = vector.load %arg7[%c0_9, %c0_10] : memref<8x96xf32, #tpu.memory_space<vmem>>, vector<8x96xf32>
    %cst = arith.constant dense<0.000000e+00> : vector<32x96xf32>
    %7 = tpu.matmul %3, %6, %cst {dimension_numbers = #tpu.dot_dimension_numbers<[1], [0], [0], [1], [0, 0, 1, 1], [], []>} : vector<32x8xf32>, vector<8x96xf32>, vector<32x96xf32> -> vector<32x96xf32>
    %c0_11 = arith.constant 0 : index
    %c0_12 = arith.constant 0 : index
    %8 = vector.load %arg8[%c0_11, %c0_12] : memref<1x96xf32, #tpu.memory_space<vmem>>, vector<1x96xf32>
    %9 = vector.broadcast %8 : vector<1x96xf32> to vector<32x96xf32>
    %10 = arith.addf %7, %9 : vector<32x96xf32>
    %11 = vector.extract_strided_slice %10 {offsets = [0, 0], sizes = [32, 16], strides = [1, 1]} : vector<32x96xf32> to vector<32x16xf32>
    %c0_13 = arith.constant 0 : index
    %c0_14 = arith.constant 0 : index
    %c0_15 = arith.constant 0 : index
    %12 = vector.load %arg10[%c0_13, %c0_14, %c0_15] : memref<6x32x16xf32, #tpu.memory_space<vmem>>, vector<1x32x16xf32>
    %13 = vector.shape_cast %12 : vector<1x32x16xf32> to vector<32x16xf32>
    %14 = vector.shape_cast %11 : vector<32x16xf32> to vector<1x32x16xf32>
    tpu.vector_store %arg10[%c0_13, %c0_14, %c0_15], %14 {strides = array<i32>} : memref<6x32x16xf32, #tpu.memory_space<vmem>>, vector<1x32x16xf32>,
    %15 = vector.extract_strided_slice %10 {offsets = [0, 16], sizes = [32, 16], strides = [1, 1]} : vector<32x96xf32> to vector<32x16xf32>
    %c1 = arith.constant 1 : index
    %c0_16 = arith.constant 0 : index
    %c0_17 = arith.constant 0 : index
    %16 = vector.load %arg10[%c1, %c0_16, %c0_17] : memref<6x32x16xf32, #tpu.memory_space<vmem>>, vector<1x32x16xf32>
    %17 = vector.shape_cast %16 : vector<1x32x16xf32> to vector<32x16xf32>
    %18 = vector.shape_cast %15 : vector<32x16xf32> to vector<1x32x16xf32>
    tpu.vector_store %arg10[%c1, %c0_16, %c0_17], %18 {strides = array<i32>} : memref<6x32x16xf32, #tpu.memory_space<vmem>>, vector<1x32x16xf32>,
    %19 = vector.extract_strided_slice %10 {offsets = [0, 32], sizes = [32, 16], strides = [1, 1]} : vector<32x96xf32> to vector<32x16xf32>
    %c2 = arith.constant 2 : index
    %c0_18 = arith.constant 0 : index
    %c0_19 = arith.constant 0 : index
    %20 = vector.load %arg10[%c2, %c0_18, %c0_19] : memref<6x32x16xf32, #tpu.memory_space<vmem>>, vector<1x32x16xf32>
    %21 = vector.shape_cast %20 : vector<1x32x16xf32> to vector<32x16xf32>
    %22 = vector.shape_cast %19 : vector<32x16xf32> to vector<1x32x16xf32>
    tpu.vector_store %arg10[%c2, %c0_18, %c0_19], %22 {strides = array<i32>} : memref<6x32x16xf32, #tpu.memory_space<vmem>>, vector<1x32x16xf32>,
    %23 = vector.extract_strided_slice %10 {offsets = [0, 48], sizes = [32, 16], strides = [1, 1]} : vector<32x96xf32> to vector<32x16xf32>
    %c3 = arith.constant 3 : index
    %c0_20 = arith.constant 0 : index
    %c0_21 = arith.constant 0 : index
    %24 = vector.load %arg10[%c3, %c0_20, %c0_21] : memref<6x32x16xf32, #tpu.memory_space<vmem>>, vector<1x32x16xf32>
    %25 = vector.shape_cast %24 : vector<1x32x16xf32> to vector<32x16xf32>
    %26 = vector.shape_cast %23 : vector<32x16xf32> to vector<1x32x16xf32>
    tpu.vector_store %arg10[%c3, %c0_20, %c0_21], %26 {strides = array<i32>} : memref<6x32x16xf32, #tpu.memory_space<vmem>>, vector<1x32x16xf32>,
    %27 = vector.extract_strided_slice %10 {offsets = [0, 64], sizes = [32, 16], strides = [1, 1]} : vector<32x96xf32> to vector<32x16xf32>
    %c4 = arith.constant 4 : index
    %c0_22 = arith.constant 0 : index
    %c0_23 = arith.constant 0 : index
    %28 = vector.load %arg10[%c4, %c0_22, %c0_23] : memref<6x32x16xf32, #tpu.memory_space<vmem>>, vector<1x32x16xf32>
    %29 = vector.shape_cast %28 : vector<1x32x16xf32> to vector<32x16xf32>
    %30 = vector.shape_cast %27 : vector<32x16xf32> to vector<1x32x16xf32>
    tpu.vector_store %arg10[%c4, %c0_22, %c0_23], %30 {strides = array<i32>} : memref<6x32x16xf32, #tpu.memory_space<vmem>>, vector<1x32x16xf32>,
    %31 = vector.extract_strided_slice %10 {offsets = [0, 80], sizes = [32, 16], strides = [1, 1]} : vector<32x96xf32> to vector<32x16xf32>
    %c5 = arith.constant 5 : index
    %c0_24 = arith.constant 0 : index
    %c0_25 = arith.constant 0 : index
    %32 = vector.load %arg10[%c5, %c0_24, %c0_25] : memref<6x32x16xf32, #tpu.memory_space<vmem>>, vector<1x32x16xf32>
    %33 = vector.shape_cast %32 : vector<1x32x16xf32> to vector<32x16xf32>
    %34 = vector.shape_cast %31 : vector<32x16xf32> to vector<1x32x16xf32>
    tpu.vector_store %arg10[%c5, %c0_24, %c0_25], %34 {strides = array<i32>} : memref<6x32x16xf32, #tpu.memory_space<vmem>>, vector<1x32x16xf32>,
    %c0_i32 = arith.constant 0 : i32
    %cst_26 = arith.constant dense<0.000000e+00> : vector<64x8xf32>
    %35 = tpu.matmul %4, %1, %cst_26 {dimension_numbers = #tpu.dot_dimension_numbers<[1], [0], [0], [1], [0, 0, 1, 1], [], []>} : vector<64x16xf32>, vector<16x8xf32>, vector<64x8xf32> -> vector<64x8xf32>
    %36 = vector.extract_strided_slice %35 {offsets = [0, 0], sizes = [32, 8], strides = [1, 1]} : vector<64x8xf32> to vector<32x8xf32>
    %37 = vector.extract_strided_slice %35 {offsets = [32, 0], sizes = [32, 8], strides = [1, 1]} : vector<64x8xf32> to vector<32x8xf32>
    %38 = arith.index_cast %c0_i32 : i32 to index
    %c0_27 = arith.constant 0 : index
    %c0_28 = arith.constant 0 : index
    %39 = vector.load %arg6[%38, %c0_27, %c0_28] : memref<6x16x16xf32, #tpu.memory_space<vmem>>, vector<1x16x16xf32>
    %40 = vector.shape_cast %39 : vector<1x16x16xf32> to vector<16x16xf32>
    %41 = vector.extract_strided_slice %40 {offsets = [0, 0], sizes = [8, 16], strides = [1, 1]} : vector<16x16xf32> to vector<8x16xf32>
    %cst_29 = arith.constant dense<0.000000e+00> : vector<32x16xf32>
    %42 = tpu.matmul %36, %41, %cst_29 {dimension_numbers = #tpu.dot_dimension_numbers<[1], [0], [0], [1], [0, 0, 1, 1], [], []>} : vector<32x8xf32>, vector<8x16xf32>, vector<32x16xf32> -> vector<32x16xf32>
    %43 = vector.extract_strided_slice %40 {offsets = [8, 0], sizes = [8, 16], strides = [1, 1]} : vector<16x16xf32> to vector<8x16xf32>
    %cst_30 = arith.constant dense<0.000000e+00> : vector<32x16xf32>
    %44 = tpu.matmul %37, %43, %cst_30 {dimension_numbers = #tpu.dot_dimension_numbers<[1], [0], [0], [1], [0, 0, 1, 1], [], []>} : vector<32x8xf32>, vector<8x16xf32>, vector<32x16xf32> -> vector<32x16xf32>
    %45 = arith.addf %42, %44 : vector<32x16xf32>
    %46 = arith.index_cast %c0_i32 : i32 to index
    %c0_31 = arith.constant 0 : index
    %c0_32 = arith.constant 0 : index
    %47 = vector.load %arg10[%46, %c0_31, %c0_32] : memref<6x32x16xf32, #tpu.memory_space<vmem>>, vector<1x32x16xf32>
    %48 = vector.shape_cast %47 : vector<1x32x16xf32> to vector<32x16xf32>
    %49 = arith.addf %45, %48 : vector<32x16xf32>
    %50 = vector.extract_strided_slice %49 {offsets = [0, 0], sizes = [32, 8], strides = [1, 1]} : vector<32x16xf32> to vector<32x8xf32>
    %cst_33 = arith.constant 0.000000e+00 : f32
    %51 = vector.broadcast %cst_33 : f32 to vector<32x8xf32>
    %52 = arith.subf %51, %50 : vector<32x8xf32>
    %53 = math.exp %52 : vector<32x8xf32>
    %cst_34 = arith.constant 1.000000e+00 : f32
    %54 = vector.broadcast %cst_34 : f32 to vector<32x8xf32>
    %55 = arith.addf %54, %53 : vector<32x8xf32>
    %56 = tpu.reciprocal %55 : vector<32x8xf32> -> vector<32x8xf32>
    %57 = vector.extract_strided_slice %49 {offsets = [0, 8], sizes = [32, 8], strides = [1, 1]} : vector<32x16xf32> to vector<32x8xf32>
    %cst_35 = arith.constant 0.000000e+00 : f32
    %58 = vector.broadcast %cst_35 : f32 to vector<32x8xf32>
    %59 = arith.maximumf %57, %58 : vector<32x8xf32>
    %60 = arith.mulf %56, %59 : vector<32x8xf32>
    %cst_36 = arith.constant dense<0.000000e+00> : vector<16x8xf32>
    %61 = tpu.matmul %5, %60, %cst_36 {dimension_numbers = #tpu.dot_dimension_numbers<[1], [0], [0], [1], [0, 0, 1, 1], [], []>} : vector<16x32xf32>, vector<32x8xf32>, vector<16x8xf32> -> vector<16x8xf32>
    %62 = arith.addf %1, %61 : vector<16x8xf32>
    %c1_i32 = arith.constant 1 : i32
    %cst_37 = arith.constant dense<0.000000e+00> : vector<64x8xf32>
    %63 = tpu.matmul %4, %62, %cst_37 {dimension_numbers = #tpu.dot_dimension_numbers<[1], [0], [0], [1], [0, 0, 1, 1], [], []>} : vector<64x16xf32>, vector<16x8xf32>, vector<64x8xf32> -> vector<64x8xf32>
    %64 = vector.extract_strided_slice %63 {offsets = [0, 0], sizes = [32, 8], strides = [1, 1]} : vector<64x8xf32> to vector<32x8xf32>
    %65 = vector.extract_strided_slice %63 {offsets = [32, 0], sizes = [32, 8], strides = [1, 1]} : vector<64x8xf32> to vector<32x8xf32>
    %66 = arith.index_cast %c1_i32 : i32 to index
    %c0_38 = arith.constant 0 : index
    %c0_39 = arith.constant 0 : index
    %67 = vector.load %arg6[%66, %c0_38, %c0_39] : memref<6x16x16xf32, #tpu.memory_space<vmem>>, vector<1x16x16xf32>
    %68 = vector.shape_cast %67 : vector<1x16x16xf32> to vector<16x16xf32>
    %69 = vector.extract_strided_slice %68 {offsets = [0, 0], sizes = [8, 16], strides = [1, 1]} : vector<16x16xf32> to vector<8x16xf32>
    %cst_40 = arith.constant dense<0.000000e+00> : vector<32x16xf32>
    %70 = tpu.matmul %64, %69, %cst_40 {dimension_numbers = #tpu.dot_dimension_numbers<[1], [0], [0], [1], [0, 0, 1, 1], [], []>} : vector<32x8xf32>, vector<8x16xf32>, vector<32x16xf32> -> vector<32x16xf32>
    %71 = vector.extract_strided_slice %68 {offsets = [8, 0], sizes = [8, 16], strides = [1, 1]} : vector<16x16xf32> to vector<8x16xf32>
    %cst_41 = arith.constant dense<0.000000e+00> : vector<32x16xf32>
    %72 = tpu.matmul %65, %71, %cst_41 {dimension_numbers = #tpu.dot_dimension_numbers<[1], [0], [0], [1], [0, 0, 1, 1], [], []>} : vector<32x8xf32>, vector<8x16xf32>, vector<32x16xf32> -> vector<32x16xf32>
    %73 = arith.addf %70, %72 : vector<32x16xf32>
    %74 = arith.index_cast %c1_i32 : i32 to index
    %c0_42 = arith.constant 0 : index
    %c0_43 = arith.constant 0 : index
    %75 = vector.load %arg10[%74, %c0_42, %c0_43] : memref<6x32x16xf32, #tpu.memory_space<vmem>>, vector<1x32x16xf32>
    %76 = vector.shape_cast %75 : vector<1x32x16xf32> to vector<32x16xf32>
    %77 = arith.addf %73, %76 : vector<32x16xf32>
    %78 = vector.extract_strided_slice %77 {offsets = [0, 0], sizes = [32, 8], strides = [1, 1]} : vector<32x16xf32> to vector<32x8xf32>
    %cst_44 = arith.constant 0.000000e+00 : f32
    %79 = vector.broadcast %cst_44 : f32 to vector<32x8xf32>
    %80 = arith.subf %79, %78 : vector<32x8xf32>
    %81 = math.exp %80 : vector<32x8xf32>
    %cst_45 = arith.constant 1.000000e+00 : f32
    %82 = vector.broadcast %cst_45 : f32 to vector<32x8xf32>
    %83 = arith.addf %82, %81 : vector<32x8xf32>
    %84 = tpu.reciprocal %83 : vector<32x8xf32> -> vector<32x8xf32>
    %85 = vector.extract_strided_slice %77 {offsets = [0, 8], sizes = [32, 8], strides = [1, 1]} : vector<32x16xf32> to vector<32x8xf32>
    %cst_46 = arith.constant 0.000000e+00 : f32
    %86 = vector.broadcast %cst_46 : f32 to vector<32x8xf32>
    %87 = arith.maximumf %85, %86 : vector<32x8xf32>
    %88 = arith.mulf %84, %87 : vector<32x8xf32>
    %cst_47 = arith.constant dense<0.000000e+00> : vector<16x8xf32>
    %89 = tpu.matmul %5, %88, %cst_47 {dimension_numbers = #tpu.dot_dimension_numbers<[1], [0], [0], [1], [0, 0, 1, 1], [], []>} : vector<16x32xf32>, vector<32x8xf32>, vector<16x8xf32> -> vector<16x8xf32>
    %90 = arith.addf %62, %89 : vector<16x8xf32>
    %c2_i32 = arith.constant 2 : i32
    %cst_48 = arith.constant dense<0.000000e+00> : vector<64x8xf32>
    %91 = tpu.matmul %4, %90, %cst_48 {dimension_numbers = #tpu.dot_dimension_numbers<[1], [0], [0], [1], [0, 0, 1, 1], [], []>} : vector<64x16xf32>, vector<16x8xf32>, vector<64x8xf32> -> vector<64x8xf32>
    %92 = vector.extract_strided_slice %91 {offsets = [0, 0], sizes = [32, 8], strides = [1, 1]} : vector<64x8xf32> to vector<32x8xf32>
    %93 = vector.extract_strided_slice %91 {offsets = [32, 0], sizes = [32, 8], strides = [1, 1]} : vector<64x8xf32> to vector<32x8xf32>
    %94 = arith.index_cast %c2_i32 : i32 to index
    %c0_49 = arith.constant 0 : index
    %c0_50 = arith.constant 0 : index
    %95 = vector.load %arg6[%94, %c0_49, %c0_50] : memref<6x16x16xf32, #tpu.memory_space<vmem>>, vector<1x16x16xf32>
    %96 = vector.shape_cast %95 : vector<1x16x16xf32> to vector<16x16xf32>
    %97 = vector.extract_strided_slice %96 {offsets = [0, 0], sizes = [8, 16], strides = [1, 1]} : vector<16x16xf32> to vector<8x16xf32>
    %cst_51 = arith.constant dense<0.000000e+00> : vector<32x16xf32>
    %98 = tpu.matmul %92, %97, %cst_51 {dimension_numbers = #tpu.dot_dimension_numbers<[1], [0], [0], [1], [0, 0, 1, 1], [], []>} : vector<32x8xf32>, vector<8x16xf32>, vector<32x16xf32> -> vector<32x16xf32>
    %99 = vector.extract_strided_slice %96 {offsets = [8, 0], sizes = [8, 16], strides = [1, 1]} : vector<16x16xf32> to vector<8x16xf32>
    %cst_52 = arith.constant dense<0.000000e+00> : vector<32x16xf32>
    %100 = tpu.matmul %93, %99, %cst_52 {dimension_numbers = #tpu.dot_dimension_numbers<[1], [0], [0], [1], [0, 0, 1, 1], [], []>} : vector<32x8xf32>, vector<8x16xf32>, vector<32x16xf32> -> vector<32x16xf32>
    %101 = arith.addf %98, %100 : vector<32x16xf32>
    %102 = arith.index_cast %c2_i32 : i32 to index
    %c0_53 = arith.constant 0 : index
    %c0_54 = arith.constant 0 : index
    %103 = vector.load %arg10[%102, %c0_53, %c0_54] : memref<6x32x16xf32, #tpu.memory_space<vmem>>, vector<1x32x16xf32>
    %104 = vector.shape_cast %103 : vector<1x32x16xf32> to vector<32x16xf32>
    %105 = arith.addf %101, %104 : vector<32x16xf32>
    %106 = vector.extract_strided_slice %105 {offsets = [0, 0], sizes = [32, 8], strides = [1, 1]} : vector<32x16xf32> to vector<32x8xf32>
    %cst_55 = arith.constant 0.000000e+00 : f32
    %107 = vector.broadcast %cst_55 : f32 to vector<32x8xf32>
    %108 = arith.subf %107, %106 : vector<32x8xf32>
    %109 = math.exp %108 : vector<32x8xf32>
    %cst_56 = arith.constant 1.000000e+00 : f32
    %110 = vector.broadcast %cst_56 : f32 to vector<32x8xf32>
    %111 = arith.addf %110, %109 : vector<32x8xf32>
    %112 = tpu.reciprocal %111 : vector<32x8xf32> -> vector<32x8xf32>
    %113 = vector.extract_strided_slice %105 {offsets = [0, 8], sizes = [32, 8], strides = [1, 1]} : vector<32x16xf32> to vector<32x8xf32>
    %cst_57 = arith.constant 0.000000e+00 : f32
    %114 = vector.broadcast %cst_57 : f32 to vector<32x8xf32>
    %115 = arith.maximumf %113, %114 : vector<32x8xf32>
    %116 = arith.mulf %112, %115 : vector<32x8xf32>
    %cst_58 = arith.constant dense<0.000000e+00> : vector<16x8xf32>
    %117 = tpu.matmul %5, %116, %cst_58 {dimension_numbers = #tpu.dot_dimension_numbers<[1], [0], [0], [1], [0, 0, 1, 1], [], []>} : vector<16x32xf32>, vector<32x8xf32>, vector<16x8xf32> -> vector<16x8xf32>
    %118 = arith.addf %90, %117 : vector<16x8xf32>
    %c3_i32 = arith.constant 3 : i32
    %cst_59 = arith.constant dense<0.000000e+00> : vector<64x8xf32>
    %119 = tpu.matmul %4, %118, %cst_59 {dimension_numbers = #tpu.dot_dimension_numbers<[1], [0], [0], [1], [0, 0, 1, 1], [], []>} : vector<64x16xf32>, vector<16x8xf32>, vector<64x8xf32> -> vector<64x8xf32>
    %120 = vector.extract_strided_slice %119 {offsets = [0, 0], sizes = [32, 8], strides = [1, 1]} : vector<64x8xf32> to vector<32x8xf32>
    %121 = vector.extract_strided_slice %119 {offsets = [32, 0], sizes = [32, 8], strides = [1, 1]} : vector<64x8xf32> to vector<32x8xf32>
    %122 = arith.index_cast %c3_i32 : i32 to index
    %c0_60 = arith.constant 0 : index
    %c0_61 = arith.constant 0 : index
    %123 = vector.load %arg6[%122, %c0_60, %c0_61] : memref<6x16x16xf32, #tpu.memory_space<vmem>>, vector<1x16x16xf32>
    %124 = vector.shape_cast %123 : vector<1x16x16xf32> to vector<16x16xf32>
    %125 = vector.extract_strided_slice %124 {offsets = [0, 0], sizes = [8, 16], strides = [1, 1]} : vector<16x16xf32> to vector<8x16xf32>
    %cst_62 = arith.constant dense<0.000000e+00> : vector<32x16xf32>
    %126 = tpu.matmul %120, %125, %cst_62 {dimension_numbers = #tpu.dot_dimension_numbers<[1], [0], [0], [1], [0, 0, 1, 1], [], []>} : vector<32x8xf32>, vector<8x16xf32>, vector<32x16xf32> -> vector<32x16xf32>
    %127 = vector.extract_strided_slice %124 {offsets = [8, 0], sizes = [8, 16], strides = [1, 1]} : vector<16x16xf32> to vector<8x16xf32>
    %cst_63 = arith.constant dense<0.000000e+00> : vector<32x16xf32>
    %128 = tpu.matmul %121, %127, %cst_63 {dimension_numbers = #tpu.dot_dimension_numbers<[1], [0], [0], [1], [0, 0, 1, 1], [], []>} : vector<32x8xf32>, vector<8x16xf32>, vector<32x16xf32> -> vector<32x16xf32>
    %129 = arith.addf %126, %128 : vector<32x16xf32>
    %130 = arith.index_cast %c3_i32 : i32 to index
    %c0_64 = arith.constant 0 : index
    %c0_65 = arith.constant 0 : index
    %131 = vector.load %arg10[%130, %c0_64, %c0_65] : memref<6x32x16xf32, #tpu.memory_space<vmem>>, vector<1x32x16xf32>
    %132 = vector.shape_cast %131 : vector<1x32x16xf32> to vector<32x16xf32>
    %133 = arith.addf %129, %132 : vector<32x16xf32>
    %134 = vector.extract_strided_slice %133 {offsets = [0, 0], sizes = [32, 8], strides = [1, 1]} : vector<32x16xf32> to vector<32x8xf32>
    %cst_66 = arith.constant 0.000000e+00 : f32
    %135 = vector.broadcast %cst_66 : f32 to vector<32x8xf32>
    %136 = arith.subf %135, %134 : vector<32x8xf32>
    %137 = math.exp %136 : vector<32x8xf32>
    %cst_67 = arith.constant 1.000000e+00 : f32
    %138 = vector.broadcast %cst_67 : f32 to vector<32x8xf32>
    %139 = arith.addf %138, %137 : vector<32x8xf32>
    %140 = tpu.reciprocal %139 : vector<32x8xf32> -> vector<32x8xf32>
    %141 = vector.extract_strided_slice %133 {offsets = [0, 8], sizes = [32, 8], strides = [1, 1]} : vector<32x16xf32> to vector<32x8xf32>
    %cst_68 = arith.constant 0.000000e+00 : f32
    %142 = vector.broadcast %cst_68 : f32 to vector<32x8xf32>
    %143 = arith.maximumf %141, %142 : vector<32x8xf32>
    %144 = arith.mulf %140, %143 : vector<32x8xf32>
    %cst_69 = arith.constant dense<0.000000e+00> : vector<16x8xf32>
    %145 = tpu.matmul %5, %144, %cst_69 {dimension_numbers = #tpu.dot_dimension_numbers<[1], [0], [0], [1], [0, 0, 1, 1], [], []>} : vector<16x32xf32>, vector<32x8xf32>, vector<16x8xf32> -> vector<16x8xf32>
    %146 = arith.addf %118, %145 : vector<16x8xf32>
    %c4_i32 = arith.constant 4 : i32
    %cst_70 = arith.constant dense<0.000000e+00> : vector<64x8xf32>
    %147 = tpu.matmul %4, %146, %cst_70 {dimension_numbers = #tpu.dot_dimension_numbers<[1], [0], [0], [1], [0, 0, 1, 1], [], []>} : vector<64x16xf32>, vector<16x8xf32>, vector<64x8xf32> -> vector<64x8xf32>
    %148 = vector.extract_strided_slice %147 {offsets = [0, 0], sizes = [32, 8], strides = [1, 1]} : vector<64x8xf32> to vector<32x8xf32>
    %149 = vector.extract_strided_slice %147 {offsets = [32, 0], sizes = [32, 8], strides = [1, 1]} : vector<64x8xf32> to vector<32x8xf32>
    %150 = arith.index_cast %c4_i32 : i32 to index
    %c0_71 = arith.constant 0 : index
    %c0_72 = arith.constant 0 : index
    %151 = vector.load %arg6[%150, %c0_71, %c0_72] : memref<6x16x16xf32, #tpu.memory_space<vmem>>, vector<1x16x16xf32>
    %152 = vector.shape_cast %151 : vector<1x16x16xf32> to vector<16x16xf32>
    %153 = vector.extract_strided_slice %152 {offsets = [0, 0], sizes = [8, 16], strides = [1, 1]} : vector<16x16xf32> to vector<8x16xf32>
    %cst_73 = arith.constant dense<0.000000e+00> : vector<32x16xf32>
    %154 = tpu.matmul %148, %153, %cst_73 {dimension_numbers = #tpu.dot_dimension_numbers<[1], [0], [0], [1], [0, 0, 1, 1], [], []>} : vector<32x8xf32>, vector<8x16xf32>, vector<32x16xf32> -> vector<32x16xf32>
    %155 = vector.extract_strided_slice %152 {offsets = [8, 0], sizes = [8, 16], strides = [1, 1]} : vector<16x16xf32> to vector<8x16xf32>
    %cst_74 = arith.constant dense<0.000000e+00> : vector<32x16xf32>
    %156 = tpu.matmul %149, %155, %cst_74 {dimension_numbers = #tpu.dot_dimension_numbers<[1], [0], [0], [1], [0, 0, 1, 1], [], []>} : vector<32x8xf32>, vector<8x16xf32>, vector<32x16xf32> -> vector<32x16xf32>
    %157 = arith.addf %154, %156 : vector<32x16xf32>
    %158 = arith.index_cast %c4_i32 : i32 to index
    %c0_75 = arith.constant 0 : index
    %c0_76 = arith.constant 0 : index
    %159 = vector.load %arg10[%158, %c0_75, %c0_76] : memref<6x32x16xf32, #tpu.memory_space<vmem>>, vector<1x32x16xf32>
    %160 = vector.shape_cast %159 : vector<1x32x16xf32> to vector<32x16xf32>
    %161 = arith.addf %157, %160 : vector<32x16xf32>
    %162 = vector.extract_strided_slice %161 {offsets = [0, 0], sizes = [32, 8], strides = [1, 1]} : vector<32x16xf32> to vector<32x8xf32>
    %cst_77 = arith.constant 0.000000e+00 : f32
    %163 = vector.broadcast %cst_77 : f32 to vector<32x8xf32>
    %164 = arith.subf %163, %162 : vector<32x8xf32>
    %165 = math.exp %164 : vector<32x8xf32>
    %cst_78 = arith.constant 1.000000e+00 : f32
    %166 = vector.broadcast %cst_78 : f32 to vector<32x8xf32>
    %167 = arith.addf %166, %165 : vector<32x8xf32>
    %168 = tpu.reciprocal %167 : vector<32x8xf32> -> vector<32x8xf32>
    %169 = vector.extract_strided_slice %161 {offsets = [0, 8], sizes = [32, 8], strides = [1, 1]} : vector<32x16xf32> to vector<32x8xf32>
    %cst_79 = arith.constant 0.000000e+00 : f32
    %170 = vector.broadcast %cst_79 : f32 to vector<32x8xf32>
    %171 = arith.maximumf %169, %170 : vector<32x8xf32>
    %172 = arith.mulf %168, %171 : vector<32x8xf32>
    %cst_80 = arith.constant dense<0.000000e+00> : vector<16x8xf32>
    %173 = tpu.matmul %5, %172, %cst_80 {dimension_numbers = #tpu.dot_dimension_numbers<[1], [0], [0], [1], [0, 0, 1, 1], [], []>} : vector<16x32xf32>, vector<32x8xf32>, vector<16x8xf32> -> vector<16x8xf32>
    %174 = arith.addf %146, %173 : vector<16x8xf32>
    %c5_i32 = arith.constant 5 : i32
    %cst_81 = arith.constant dense<0.000000e+00> : vector<64x8xf32>
    %175 = tpu.matmul %4, %174, %cst_81 {dimension_numbers = #tpu.dot_dimension_numbers<[1], [0], [0], [1], [0, 0, 1, 1], [], []>} : vector<64x16xf32>, vector<16x8xf32>, vector<64x8xf32> -> vector<64x8xf32>
    %176 = vector.extract_strided_slice %175 {offsets = [0, 0], sizes = [32, 8], strides = [1, 1]} : vector<64x8xf32> to vector<32x8xf32>
    %177 = vector.extract_strided_slice %175 {offsets = [32, 0], sizes = [32, 8], strides = [1, 1]} : vector<64x8xf32> to vector<32x8xf32>
    %178 = arith.index_cast %c5_i32 : i32 to index
    %c0_82 = arith.constant 0 : index
    %c0_83 = arith.constant 0 : index
    %179 = vector.load %arg6[%178, %c0_82, %c0_83] : memref<6x16x16xf32, #tpu.memory_space<vmem>>, vector<1x16x16xf32>
    %180 = vector.shape_cast %179 : vector<1x16x16xf32> to vector<16x16xf32>
    %181 = vector.extract_strided_slice %180 {offsets = [0, 0], sizes = [8, 16], strides = [1, 1]} : vector<16x16xf32> to vector<8x16xf32>
    %cst_84 = arith.constant dense<0.000000e+00> : vector<32x16xf32>
    %182 = tpu.matmul %176, %181, %cst_84 {dimension_numbers = #tpu.dot_dimension_numbers<[1], [0], [0], [1], [0, 0, 1, 1], [], []>} : vector<32x8xf32>, vector<8x16xf32>, vector<32x16xf32> -> vector<32x16xf32>
    %183 = vector.extract_strided_slice %180 {offsets = [8, 0], sizes = [8, 16], strides = [1, 1]} : vector<16x16xf32> to vector<8x16xf32>
    %cst_85 = arith.constant dense<0.000000e+00> : vector<32x16xf32>
    %184 = tpu.matmul %177, %183, %cst_85 {dimension_numbers = #tpu.dot_dimension_numbers<[1], [0], [0], [1], [0, 0, 1, 1], [], []>} : vector<32x8xf32>, vector<8x16xf32>, vector<32x16xf32> -> vector<32x16xf32>
    %185 = arith.addf %182, %184 : vector<32x16xf32>
    %186 = arith.index_cast %c5_i32 : i32 to index
    %c0_86 = arith.constant 0 : index
    %c0_87 = arith.constant 0 : index
    %187 = vector.load %arg10[%186, %c0_86, %c0_87] : memref<6x32x16xf32, #tpu.memory_space<vmem>>, vector<1x32x16xf32>
    %188 = vector.shape_cast %187 : vector<1x32x16xf32> to vector<32x16xf32>
    %189 = arith.addf %185, %188 : vector<32x16xf32>
    %190 = vector.extract_strided_slice %189 {offsets = [0, 0], sizes = [32, 8], strides = [1, 1]} : vector<32x16xf32> to vector<32x8xf32>
    %cst_88 = arith.constant 0.000000e+00 : f32
    %191 = vector.broadcast %cst_88 : f32 to vector<32x8xf32>
    %192 = arith.subf %191, %190 : vector<32x8xf32>
    %193 = math.exp %192 : vector<32x8xf32>
    %cst_89 = arith.constant 1.000000e+00 : f32
    %194 = vector.broadcast %cst_89 : f32 to vector<32x8xf32>
    %195 = arith.addf %194, %193 : vector<32x8xf32>
    %196 = tpu.reciprocal %195 : vector<32x8xf32> -> vector<32x8xf32>
    %197 = vector.extract_strided_slice %189 {offsets = [0, 8], sizes = [32, 8], strides = [1, 1]} : vector<32x16xf32> to vector<32x8xf32>
    %cst_90 = arith.constant 0.000000e+00 : f32
    %198 = vector.broadcast %cst_90 : f32 to vector<32x8xf32>
    %199 = arith.maximumf %197, %198 : vector<32x8xf32>
    %200 = arith.mulf %196, %199 : vector<32x8xf32>
    %cst_91 = arith.constant dense<0.000000e+00> : vector<16x8xf32>
    %201 = tpu.matmul %5, %200, %cst_91 {dimension_numbers = #tpu.dot_dimension_numbers<[1], [0], [0], [1], [0, 0, 1, 1], [], []>} : vector<16x32xf32>, vector<32x8xf32>, vector<16x8xf32> -> vector<16x8xf32>
    %202 = arith.addf %174, %201 : vector<16x8xf32>
    %c6_i32 = arith.constant 6 : i32
    %c0_92 = arith.constant 0 : index
    %c0_93 = arith.constant 0 : index
    %203 = vector.load %arg3[%c0_92, %c0_93] : memref<2x16xf32, #tpu.memory_space<vmem>>, vector<2x16xf32>
    %cst_94 = arith.constant dense<0.000000e+00> : vector<2x8xf32>
    %204 = tpu.matmul %203, %202, %cst_94 {dimension_numbers = #tpu.dot_dimension_numbers<[1], [0], [0], [1], [0, 0, 1, 1], [], []>} : vector<2x16xf32>, vector<16x8xf32>, vector<2x8xf32> -> vector<2x8xf32>
    %c0_95 = arith.constant 0 : index
    %c0_96 = arith.constant 0 : index
    %c0_97 = arith.constant 0 : index
    %205 = vector.load %arg9[%c0_95, %c0_96, %c0_97] : memref<1x2x8xf32, #tpu.memory_space<vmem>>, vector<1x2x8xf32>
    %206 = vector.shape_cast %205 : vector<1x2x8xf32> to vector<2x8xf32>
    %207 = vector.shape_cast %204 : vector<2x8xf32> to vector<1x2x8xf32>
    tpu.vector_store %arg9[%c0_95, %c0_96, %c0_97], %207 {strides = array<i32>} : memref<1x2x8xf32, #tpu.memory_space<vmem>>, vector<1x2x8xf32>,
    return
  }
  func.func @transform_0(%arg0: i32) -> (i32, i32) {
    %c0_i32 = arith.constant 0 : i32
    %c0_i32_0 = arith.constant 0 : i32
    %c0_i32_1 = arith.constant 0 : i32
    return %c0_i32, %c0_i32_0 : i32, i32
  }
  func.func @transform_1(%arg0: i32) -> (i32, i32) {
    %c0_i32 = arith.constant 0 : i32
    %c0_i32_0 = arith.constant 0 : i32
    %c0_i32_1 = arith.constant 0 : i32
    return %c0_i32, %c0_i32_0 : i32, i32
  }
  func.func @transform_2(%arg0: i32) -> (i32, i32) {
    %c0_i32 = arith.constant 0 : i32
    %c0_i32_0 = arith.constant 0 : i32
    %c0_i32_1 = arith.constant 0 : i32
    return %c0_i32, %c0_i32_0 : i32, i32
  }
  func.func @transform_3(%arg0: i32) -> (i32, i32, i32) {
    %c0_i32 = arith.constant 0 : i32
    %c0_i32_0 = arith.constant 0 : i32
    %c0_i32_1 = arith.constant 0 : i32
    return %arg0, %c0_i32, %c0_i32_0 : i32, i32, i32
  }
  func.func @transform_4(%arg0: i32) -> (i32, i32, i32) {
    %c0_i32 = arith.constant 0 : i32
    %c0_i32_0 = arith.constant 0 : i32
    %c0_i32_1 = arith.constant 0 : i32
    return %arg0, %c0_i32, %c0_i32_0 : i32, i32, i32
  }
  func.func @transform_5(%arg0: i32) -> (i32, i32, i32) {
    %c0_i32 = arith.constant 0 : i32
    %c0_i32_0 = arith.constant 0 : i32
    %c0_i32_1 = arith.constant 0 : i32
    %c0_i32_2 = arith.constant 0 : i32
    return %c0_i32, %c0_i32_0, %c0_i32_1 : i32, i32, i32
  }
  func.func @transform_6(%arg0: i32) -> (i32, i32) {
    %c0_i32 = arith.constant 0 : i32
    %c0_i32_0 = arith.constant 0 : i32
    %c0_i32_1 = arith.constant 0 : i32
    return %c0_i32, %c0_i32_0 : i32, i32
  }
  func.func @transform_7(%arg0: i32) -> (i32, i32) {
    %c0_i32 = arith.constant 0 : i32
    %c0_i32_0 = arith.constant 0 : i32
    %c0_i32_1 = arith.constant 0 : i32
    return %c0_i32, %c0_i32_0 : i32, i32
  }
  func.func @transform_8(%arg0: i32) -> (i32, i32, i32) {
    %c0_i32 = arith.constant 0 : i32
    %c0_i32_0 = arith.constant 0 : i32
    %c0_i32_1 = arith.constant 0 : i32
    return %arg0, %c0_i32, %c0_i32_0 : i32, i32, i32
  }
}

</mosaic_0001>

<llo_original>
// kernel: tpu_custom_call.1
$region0: #{tpu_custom_call.1}
  #allocation0 [shape = 'u32[]', space=smem, size = 0x4, offset = 0x4, fixed_abs, tag = 'smem constant byte address 0x4 - core index']
  #allocation1 [shape = 'u32[144,128]{1,0:T(1,128)}', space=vmem, size = 0x12000, scoped, tag = 'internal scratch']
  #allocation2 [shape = 'f32[6,32,16]{2,1,0:T(8,128)}', space=vmem, size = 0x18000, scoped, tag = 'scratch operand']
  %s0 = inlined_call_operand.vmem [shape: f32[64,16], index: 0, kind: input, shape index: {}]
  %s1 = inlined_call_operand.vmem [shape: f32[16,32], index: 1, kind: input, shape index: {}]
  %s2 = inlined_call_operand.vmem [shape: f32[2,16], index: 2, kind: input, shape index: {}]
  %s3 = inlined_call_operand.vmem [shape: f32[2,16,8], index: 3, kind: input, shape index: {}]
  %s4 = inlined_call_operand.vmem [shape: f32[2,32,8], index: 4, kind: input, shape index: {}]
  %s5 = inlined_call_operand.vmem [shape: f32[6,16,16], index: 5, kind: input, shape index: {}]
  %s6 = inlined_call_operand.vmem [shape: f32[8,96], index: 6, kind: input, shape index: {}]
  %s7 = inlined_call_operand.vmem [shape: f32[1,96], index: 7, kind: input, shape index: {}]
  %s8 = inlined_call_operand.hbm [shape: f32[2,2,8], index: 8, kind: output, shape index: {}]
  %s9 = sld [smem:[#allocation0]]
  $region65: #{tpu_custom_call.1} parent=0
    _
  %s11 = ssub.s32 1, %s9
  %s12 = scalar_select 0, %s11, %s9
  $region1: #{tpu_custom_call.1} parent=0
    #allocation3 [shape = 'u8[2048]{0}', space=vmem, size = 0x800, scoped, tag = 'output window, operand 0']
    #allocation4 [shape = 's32[2]{0}', space=sflag, size = 0x8, scoped, tag = 'scoped memory for tpu_custom_call.1']
    %13 = vsyncpa [#allocation4], 0
    %s14 = scalar_lea.sflag [#allocation4], 1
    %15 = vsyncpa %s14, 0
    loop: start=0, step=1, limit=4
    $region2: #{tpu_custom_call.1} parent=1 // loop_pre_header
      _
    $region3: #{tpu_custom_call.1} parent=1 // loop_header
      %s17 = sphi 0, %s21
      %p18 = scmp.ge.s32.totalorder %s17, 4
      %s25 = sphi 0, %s25
      %s27 = sphi 0, %s25
      %s28 = sphi 0, %s27
      %s42 = sphi 0, %s28
      %s46 = sphi 0, %s46
      %s48 = sphi 0, %s46
      %s49 = sphi 0, %s48
      %s63 = sphi 0, %s49
      %s67 = sphi 0, %s67
      %s69 = sphi 0, %s67
      %s70 = sphi 0, %s69
      %s84 = sphi 0, %s70
      %s90 = sphi 0, %s92
      %s93 = sphi 0, %s90
      %s94 = sphi 0, %s93
      %s110 = sphi 0, %s94
      %s116 = sphi 0, %s118
      %s119 = sphi 0, %s116
      %s120 = sphi 0, %s119
      %s136 = sphi 0, %s120
      %s140 = sphi 0, %s140
      %s142 = sphi 0, %s140
      %s143 = sphi 0, %s142
      %s157 = sphi 0, %s143
      %s161 = sphi 0, %s161
      %s163 = sphi 0, %s161
      %s164 = sphi 0, %s163
      %s178 = sphi 0, %s164
      %s182 = sphi 0, %s182
      %s184 = sphi 0, %s182
      %s185 = sphi 0, %s184
      %s199 = sphi 0, %s185
      %s205 = sphi 0, %s207
      %s208 = sphi 0, %s205
      %s209 = sphi 0, %s208
      %s225 = sphi 0, %s209
    $region4: #{tpu_custom_call.1} parent=1 // loop_header_branch
      %20 = sbr.rel (%p18) target = $region8
    $region5: #{tpu_custom_call.1} parent=1 // loop_body
      %s22 = ssub.s32 %s17, 1
      %s23 = ssub.s32 %s17, 2
      %s24 = sadd.s32 %s17, 1
      %s26 = sadd.s32 %s25, 1
      %p29 = scmp.eq.s32.totalorder %s17, 1
      %p30 = scmp.ne.s32.totalorder %s25, %s27
      %p31 = scmp.eq.s32.totalorder %s17, 0
      %p32 = por %p30, %p31
      %p33 = scmp.ne.s32.totalorder %s25, %s27
      %p34 = scmp.eq.s32.totalorder %s22, 1
      %p35 = por %p33, %p34
      %p36 = scmp.ne.s32.totalorder %s27, %s28
      %p37 = scmp.eq.s32.totalorder %s22, 0
      %p38 = por %p36, %p37
      %p39 = scmp.ne.s32.totalorder %s27, %s28
      %p40 = scmp.eq.s32.totalorder %s23, 1
      %p41 = por %p39, %p40
      %p43 = scmp.ne.s32.totalorder %s28, %s42
      %p44 = scmp.eq.s32.totalorder %s23, 0
      %p45 = por %p43, %p44
      %s47 = sadd.s32 %s46, 1
      %p50 = scmp.eq.s32.totalorder %s17, 1
      %p51 = scmp.ne.s32.totalorder %s46, %s48
      %p52 = scmp.eq.s32.totalorder %s17, 0
      %p53 = por %p51, %p52
      %p54 = scmp.ne.s32.totalorder %s46, %s48
      %p55 = scmp.eq.s32.totalorder %s22, 1
      %p56 = por %p54, %p55
      %p57 = scmp.ne.s32.totalorder %s48, %s49
      %p58 = scmp.eq.s32.totalorder %s22, 0
      %p59 = por %p57, %p58
      %p60 = scmp.ne.s32.totalorder %s48, %s49
      %p61 = scmp.eq.s32.totalorder %s23, 1
      %p62 = por %p60, %p61
      %p64 = scmp.ne.s32.totalorder %s49, %s63
      %p65 = scmp.eq.s32.totalorder %s23, 0
      %p66 = por %p64, %p65
      %s68 = sadd.s32 %s67, 1
      %p71 = scmp.eq.s32.totalorder %s17, 1
      %p72 = scmp.ne.s32.totalorder %s67, %s69
      %p73 = scmp.eq.s32.totalorder %s17, 0
      %p74 = por %p72, %p73
      %p75 = scmp.ne.s32.totalorder %s67, %s69
      %p76 = scmp.eq.s32.totalorder %s22, 1
      %p77 = por %p75, %p76
      %p78 = scmp.ne.s32.totalorder %s69, %s70
      %p79 = scmp.eq.s32.totalorder %s22, 0
      %p80 = por %p78, %p79
      %p81 = scmp.ne.s32.totalorder %s69, %s70
      %p82 = scmp.eq.s32.totalorder %s23, 1
      %p83 = por %p81, %p82
      %p85 = scmp.ne.s32.totalorder %s70, %s84
      %p86 = scmp.eq.s32.totalorder %s23, 0
      %p87 = por %p85, %p86
      %s88 = ssub.s32 %s17, %s24
      %p89 = scmp.eq.s32.totalorder %s88, 0
      %s91 = sadd.s32 %s90, 1
      %s92 = scalar_select %p89, %s90, %s91
      %p95 = pneg %p89
      %p96 = scmp.eq.s32.totalorder %s17, 1
      %p97 = por %p95, %p96
      %p98 = scmp.ne.s32.totalorder %s90, %s93
      %p99 = scmp.eq.s32.totalorder %s17, 0
      %p100 = por %p98, %p99
      %p101 = scmp.ne.s32.totalorder %s90, %s93
      %p102 = scmp.eq.s32.totalorder %s22, 1
      %p103 = por %p101, %p102
      %p104 = scmp.ne.s32.totalorder %s93, %s94
      %p105 = scmp.eq.s32.totalorder %s22, 0
      %p106 = por %p104, %p105
      %p107 = scmp.ne.s32.totalorder %s93, %s94
      %p108 = scmp.eq.s32.totalorder %s23, 1
      %p109 = por %p107, %p108
      %p111 = scmp.ne.s32.totalorder %s94, %s110
      %p112 = scmp.eq.s32.totalorder %s23, 0
      %p113 = por %p111, %p112
      %s114 = ssub.s32 %s17, %s24
      %p115 = scmp.eq.s32.totalorder %s114, 0
      %s117 = sadd.s32 %s116, 1
      %s118 = scalar_select %p115, %s116, %s117
      %p121 = pneg %p115
      %p122 = scmp.eq.s32.totalorder %s17, 1
      %p123 = por %p121, %p122
      %p124 = scmp.ne.s32.totalorder %s116, %s119
      %p125 = scmp.eq.s32.totalorder %s17, 0
      %p126 = por %p124, %p125
      %p127 = scmp.ne.s32.totalorder %s116, %s119
      %p128 = scmp.eq.s32.totalorder %s22, 1
      %p129 = por %p127, %p128
      %p130 = scmp.ne.s32.totalorder %s119, %s120
      %p131 = scmp.eq.s32.totalorder %s22, 0
      %p132 = por %p130, %p131
      %p133 = scmp.ne.s32.totalorder %s119, %s120
      %p134 = scmp.eq.s32.totalorder %s23, 1
      %p135 = por %p133, %p134
      %p137 = scmp.ne.s32.totalorder %s120, %s136
      %p138 = scmp.eq.s32.totalorder %s23, 0
      %p139 = por %p137, %p138
      %s141 = sadd.s32 %s140, 1
      %p144 = scmp.eq.s32.totalorder %s17, 1
      %p145 = scmp.ne.s32.totalorder %s140, %s142
      %p146 = scmp.eq.s32.totalorder %s17, 0
      %p147 = por %p145, %p146
      %p148 = scmp.ne.s32.totalorder %s140, %s142
      %p149 = scmp.eq.s32.totalorder %s22, 1
      %p150 = por %p148, %p149
      %p151 = scmp.ne.s32.totalorder %s142, %s143
      %p152 = scmp.eq.s32.totalorder %s22, 0
      %p153 = por %p151, %p152
      %p154 = scmp.ne.s32.totalorder %s142, %s143
      %p155 = scmp.eq.s32.totalorder %s23, 1
      %p156 = por %p154, %p155
      %p158 = scmp.ne.s32.totalorder %s143, %s157
      %p159 = scmp.eq.s32.totalorder %s23, 0
      %p160 = por %p158, %p159
      %s162 = sadd.s32 %s161, 1
      %p165 = scmp.eq.s32.totalorder %s17, 1
      %p166 = scmp.ne.s32.totalorder %s161, %s163
      %p167 = scmp.eq.s32.totalorder %s17, 0
      %p168 = por %p166, %p167
      %p169 = scmp.ne.s32.totalorder %s161, %s163
      %p170 = scmp.eq.s32.totalorder %s22, 1
      %p171 = por %p169, %p170
      %p172 = scmp.ne.s32.totalorder %s163, %s164
      %p173 = scmp.eq.s32.totalorder %s22, 0
      %p174 = por %p172, %p173
      %p175 = scmp.ne.s32.totalorder %s163, %s164
      %p176 = scmp.eq.s32.totalorder %s23, 1
      %p177 = por %p175, %p176
      %p179 = scmp.ne.s32.totalorder %s164, %s178
      %p180 = scmp.eq.s32.totalorder %s23, 0
      %p181 = por %p179, %p180
      %s183 = sadd.s32 %s182, 1
      %p186 = scmp.eq.s32.totalorder %s17, 1
      %p187 = scmp.ne.s32.totalorder %s182, %s184
      %p188 = scmp.eq.s32.totalorder %s17, 0
      %p189 = por %p187, %p188
      %p190 = scmp.ne.s32.totalorder %s182, %s184
      %p191 = scmp.eq.s32.totalorder %s22, 1
      %p192 = por %p190, %p191
      %p193 = scmp.ne.s32.totalorder %s184, %s185
      %p194 = scmp.eq.s32.totalorder %s22, 0
      %p195 = por %p193, %p194
      %p196 = scmp.ne.s32.totalorder %s184, %s185
      %p197 = scmp.eq.s32.totalorder %s23, 1
      %p198 = por %p196, %p197
      %p200 = scmp.ne.s32.totalorder %s185, %s199
      %p201 = scmp.eq.s32.totalorder %s23, 0
      %p202 = por %p200, %p201
      %s203 = ssub.s32 %s17, %s24
      %p204 = scmp.eq.s32.totalorder %s203, 0
      %s206 = sadd.s32 %s205, 1
      %s207 = scalar_select %p204, %s205, %s206
      %p210 = pneg %p204
      %p211 = scmp.eq.s32.totalorder %s17, 1
      %p212 = por %p210, %p211
      %p213 = scmp.ne.s32.totalorder %s205, %s208
      %p214 = scmp.eq.s32.totalorder %s17, 0
      %p215 = por %p213, %p214
      %p216 = scmp.ne.s32.totalorder %s205, %s208
      %p217 = scmp.eq.s32.totalorder %s22, 1
      %p218 = por %p216, %p217
      %p219 = scmp.ne.s32.totalorder %s208, %s209
      %p220 = scmp.eq.s32.totalorder %s22, 0
      %p221 = por %p219, %p220
      %p222 = scmp.ne.s32.totalorder %s208, %s209
      %p223 = scmp.eq.s32.totalorder %s23, 1
      %p224 = por %p222, %p223
      %p226 = scmp.ne.s32.totalorder %s209, %s225
      %p227 = scmp.eq.s32.totalorder %s23, 0
      %p228 = por %p226, %p227
      %p229 = scmp.le.s32.totalorder 1, %s17
      %p230 = scmp.lt.s32.totalorder %s17, 3
      %p231 = pnand %p229, %p230
      %p232 = pneg %p231
      // Predicated region
      $region9: #{tpu_custom_call.1} parent=5 // pred_check
        _
      $region10: #{tpu_custom_call.1} parent=5 // pred_check_branch
        %234 = sbr.rel (%p231) target = $region12
      $region11: #{tpu_custom_call.1} parent=5 // pred_region
        %s235 = ssub.s32 %s17, 1
        // Predicated region
        $region13: #{tpu_custom_call.1} parent=11 // pred_check
          %p236 = pneg %p38
        $region14: #{tpu_custom_call.1} parent=11 // pred_check_branch
          %238 = sbr.rel (%p236) target = $region16
        $region15: #{tpu_custom_call.1} parent=11 // pred_region
          _
        $region16: #{tpu_custom_call.1} parent=11 // pred_fallthru
          _
        // Predicated region
        $region17: #{tpu_custom_call.1} parent=11 // pred_check
          %p239 = pneg %p59
        $region18: #{tpu_custom_call.1} parent=11 // pred_check_branch
          %241 = sbr.rel (%p239) target = $region20
        $region19: #{tpu_custom_call.1} parent=11 // pred_region
          _
        $region20: #{tpu_custom_call.1} parent=11 // pred_fallthru
          _
        // Predicated region
        $region21: #{tpu_custom_call.1} parent=11 // pred_check
          %p242 = pneg %p80
        $region22: #{tpu_custom_call.1} parent=11 // pred_check_branch
          %244 = sbr.rel (%p242) target = $region24
        $region23: #{tpu_custom_call.1} parent=11 // pred_region
          _
        $region24: #{tpu_custom_call.1} parent=11 // pred_fallthru
          _
        // Predicated region
        $region25: #{tpu_custom_call.1} parent=11 // pred_check
          %p245 = pneg %p153
        $region26: #{tpu_custom_call.1} parent=11 // pred_check_branch
          %247 = sbr.rel (%p245) target = $region28
        $region27: #{tpu_custom_call.1} parent=11 // pred_region
          _
        $region28: #{tpu_custom_call.1} parent=11 // pred_fallthru
          _
        // Predicated region
        $region29: #{tpu_custom_call.1} parent=11 // pred_check
          %p248 = pneg %p174
        $region30: #{tpu_custom_call.1} parent=11 // pred_check_branch
          %250 = sbr.rel (%p248) target = $region32
        $region31: #{tpu_custom_call.1} parent=11 // pred_region
          _
        $region32: #{tpu_custom_call.1} parent=11 // pred_fallthru
          _
        // Predicated region
        $region33: #{tpu_custom_call.1} parent=11 // pred_check
          %p251 = pneg %p195
        $region34: #{tpu_custom_call.1} parent=11 // pred_check_branch
          %253 = sbr.rel (%p251) target = $region36
        $region35: #{tpu_custom_call.1} parent=11 // pred_region
          _
        $region36: #{tpu_custom_call.1} parent=11 // pred_fallthru
          _
      $region12: #{tpu_custom_call.1} parent=5 // pred_fallthru
        _
      %p254 = scmp.lt.s32.totalorder %s17, 2
      // Predicated region
      $region37: #{tpu_custom_call.1} parent=5 // pred_check
        %p255 = pneg %p254
      $region38: #{tpu_custom_call.1} parent=5 // pred_check_branch
        %257 = sbr.rel (%p255) target = $region40
      $region39: #{tpu_custom_call.1} parent=5 // pred_region
        // Predicated region
        $region41: #{tpu_custom_call.1} parent=39 // pred_check
          %p258 = pneg %p100
        $region42: #{tpu_custom_call.1} parent=39 // pred_check_branch
          %260 = sbr.rel (%p258) target = $region44
        $region43: #{tpu_custom_call.1} parent=39 // pred_region
          %p261 = scmp.lt.s32.totalorder %s17, 1
          %s262 = scalar_select %p261, %s17, 1
          %s263 = smul.addr %s262, 2
          %s264 = smul.addr %s263, 8
          %s265 = scalar_lea.vmem %s3, %s264
        $region44: #{tpu_custom_call.1} parent=39 // pred_fallthru
          _
        // Predicated region
        $region45: #{tpu_custom_call.1} parent=39 // pred_check
          %p266 = pneg %p126
        $region46: #{tpu_custom_call.1} parent=39 // pred_check_branch
          %268 = sbr.rel (%p266) target = $region48
        $region47: #{tpu_custom_call.1} parent=39 // pred_region
          %p269 = scmp.lt.s32.totalorder %s17, 1
          %s270 = scalar_select %p269, %s17, 1
          %s271 = smul.addr %s270, 4
          %s272 = smul.addr %s271, 8
          %s273 = scalar_lea.vmem %s4, %s272
        $region48: #{tpu_custom_call.1} parent=39 // pred_fallthru
          _
      $region40: #{tpu_custom_call.1} parent=5 // pred_fallthru
        _
      %p274 = scmp.le.s32.totalorder 1, %s17
      %p275 = scmp.lt.s32.totalorder %s17, 3
      %p276 = pnand %p274, %p275
      %p277 = pneg %p276
      // Predicated region
      $region49: #{tpu_custom_call.1} parent=5 // pred_check
        _
      $region50: #{tpu_custom_call.1} parent=5 // pred_check_branch
        %279 = sbr.rel (%p276) target = $region52
      $region51: #{tpu_custom_call.1} parent=5 // pred_region
        %s280 = ssub.s32 %s17, 1
        %p281 = pneg %p38
        %p282 = pneg %p35
        %p283 = pneg %p59
        %p284 = pneg %p56
        %p285 = pneg %p80
        %p286 = pneg %p77
        %p287 = scmp.lt.s32.totalorder %s22, 1
        %s288 = scalar_select %p287, %s22, 1
        %s289 = smul.addr %s288, 2
        %s290 = smul.addr %s289, 8
        %s291 = scalar_lea.vmem %s3, %s290
        %p292 = pneg %p106
        %p293 = pneg %p103
        %p294 = scmp.lt.s32.totalorder %s22, 1
        %s295 = scalar_select %p294, %s22, 1
        %s296 = smul.addr %s295, 4
        %s297 = smul.addr %s296, 8
        %s298 = scalar_lea.vmem %s4, %s297
        %p299 = pneg %p132
        %p300 = pneg %p129
        %p301 = pneg %p153
        %p302 = pneg %p150
        %p303 = pneg %p174
        %p304 = pneg %p171
        %p305 = pneg %p195
        %p306 = pneg %p192
        %p307 = pneg %p221
        %p308 = pneg %p218
        %s309 = sand.u32 %s208, 1
        %s310 = scalar_lea.sflag [#allocation4], %s309
        %s311 = sand.u32 %s208, 1
        %s312 = smul.addr %s311, 2
        %s313 = scalar_lea.vmem [#allocation3], %s312
        %p314 = scmp.lt.s32.totalorder %s22, 1
        %s315 = scalar_select %p314, %s22, 1
        %s316 = smul.addr %s315, 2
        %s317 = smul.addr %s316, 8
        %s318 = scalar_lea.vmem %s3, %s317
        %p319 = scmp.lt.s32.totalorder %s22, 1
        %s320 = scalar_select %p319, %s22, 1
        %s321 = smul.addr %s320, 4
        %s322 = smul.addr %s321, 8
        %s323 = scalar_lea.vmem %s4, %s322
        %v324 = vld [vmem:[%s318] sm:$0xff]
        %v325 = vld [vmem:[%s318 + $0x8] sm:$0xff]
        %v326 = vld [vmem:[%s323] sm:$0xff]
        %v327 = vld [vmem:[%s323 + $0x8] sm:$0xff]
        %v328 = vld [vmem:[%s323 + $0x10] sm:$0xff]
        %v329 = vld [vmem:[%s323 + $0x18] sm:$0xff]
        %v330 = vld [vmem:[%s0] sm:$0xff]
        %v331 = vld [vmem:[%s0 + $0x8] sm:$0xff]
        %v332 = vld [vmem:[%s0 + $0x10] sm:$0xff]
        %v333 = vld [vmem:[%s0 + $0x18] sm:$0xff]
        %v334 = vld [vmem:[%s0 + $0x20] sm:$0xff]
        %v335 = vld [vmem:[%s0 + $0x28] sm:$0xff]
        %v336 = vld [vmem:[%s0 + $0x30] sm:$0xff]
        %v337 = vld [vmem:[%s0 + $0x38] sm:$0xff]
        %v338 = vld [vmem:[%s1] sm:$0xff]
        %v339 = vld [vmem:[%s1 + $0x8] sm:$0xff]
        %v340 = vld [vmem:[%s6] sm:$0xff]
        %v341 = vld [vmem:[%s7] sm:$0x1]
        %v343 = vlaneseq
        %v344 = vshrl.u32 %v343, 7
        %v345 = vsub.s32 0, %v344
        %v346 = vrot.slane %v341, %v345
        %vm348 = vcmask 64512
        %v350 = vsel %vm348, %v326, 0
        %v353 = vsel %vm348, %v327, 0
        %v356 = vsel %vm348, %v328, 0
        %v359 = vsel %vm348, %v329, 0
        %361 = vmatprep.subr.mxu0 0.0
        %362 = vmatpush1.msra.mxu0 %v340
        %363 = vmatprep.subr.mxu0 0.0
        %364 = vmatpush1.msra.mxu0 0.0
        %365 = vmatprep.subr.mxu0 0.0
        %366 = vmatpush1.msra.mxu0 0.0
        %367 = vmatprep.subr.mxu0 0.0
        %368 = vmatpush1.msra.mxu0 0.0
        %369 = vmatprep.subr.mxu0 0.0
        %370 = vmatpush1.msra.mxu0 0.0
        %371 = vmatprep.subr.mxu0 0.0
        %372 = vmatpush1.msra.mxu0 0.0
        %373 = vmatprep.subr.mxu0 0.0
        %374 = vmatpush1.msra.mxu0 0.0
        %375 = vmatprep.subr.mxu0 0.0
        %376 = vmatpush1.msra.mxu0 0.0
        %377 = vmatprep.subr.mxu0 0.0
        %378 = vmatpush1.msra.mxu0 0.0
        %379 = vmatprep.subr.mxu0 0.0
        %380 = vmatpush1.msra.mxu0 0.0
        %381 = vmatprep.subr.mxu0 0.0
        %382 = vmatpush1.msra.mxu0 0.0
        %383 = vmatprep.subr.mxu0 0.0
        %384 = vmatpush1.msra.mxu0 0.0
        %385 = vmatprep.subr.mxu0 0.0
        %386 = vmatpush1.msra.mxu0 0.0
        %387 = vmatprep.subr.mxu0 0.0
        %388 = vmatpush1.msra.mxu0 0.0
        %389 = vmatprep.subr.mxu0 0.0
        %390 = vmatpush1.msra.mxu0 0.0
        %391 = vmatprep.subr.mxu0 0.0
        %392 = vmatpush1.msra.mxu0 0.0
        %393 = vmatprep.subr.mxu0 0.0
        %394 = vmatpush1.msra.mxu0 0.0
        %395 = vmatprep.subr.mxu0 0.0
        %396 = vmatpush1.msra.mxu0 0.0
        %397 = vmatprep.subr.mxu0 0.0
        %398 = vmatpush1.msra.mxu0 0.0
        %399 = vmatprep.subr.mxu0 0.0
        %400 = vmatpush1.msra.mxu0 0.0
        %401 = vmatprep.subr.mxu0 0.0
        %402 = vmatpush1.msra.mxu0 0.0
        %403 = vmatprep.subr.mxu0 0.0
        %404 = vmatpush1.msra.mxu0 0.0
        %405 = vmatprep.subr.mxu0 0.0
        %406 = vmatpush1.msra.mxu0 0.0
        %407 = vmatprep.subr.mxu0 0.0
        %408 = vmatpush1.msra.mxu0 0.0
        %409 = vmatprep.subr.mxu0 0.0
        %410 = vmatpush1.msra.mxu0 0.0
        %411 = vmatprep.subr.mxu0 0.0
        %412 = vmatpush1.msra.mxu0 0.0
        %413 = vmatprep.subr.mxu0 0.0
        %414 = vmatpush1.msra.mxu0 0.0
        %415 = vmatprep.subr.mxu0 0.0
        %416 = vmatpush1.msra.mxu0 0.0
        %417 = vmatprep.subr.mxu0 0.0
        %418 = vmatpush1.msra.mxu0 0.0
        %419 = vmatprep.subr.mxu0 0.0
        %420 = vmatpush1.msra.mxu0 0.0
        %421 = vmatprep.subr.mxu0 0.0
        %422 = vmatpush1.msra.mxu0 0.0
        %423 = vmatprep.subr.mxu0 0.0
        %424 = vmatpush1.msra.mxu0 0.0
        %425 = vmatprep.mubr.f32.mxu0 0.0
        %426 = vmatmul.mubr.f32.gmra.mrb[0].mxu0 %v350
        %v427 = vpop.f32.mrb[0].mxu0
        %v428 = vadd.f32 %v346, %v427
        %v429 = vpop.f32.mrb[0].mxu0
        %430 = vmatprep.mubr.f32.mxu0 0.0
        %431 = vmatmul.mubr.f32.gmra.mrb[0].mxu0 %v353
        %v432 = vpop.f32.mrb[0].mxu0
        %v433 = vadd.f32 %v346, %v432
        %v434 = vpop.f32.mrb[0].mxu0
        %435 = vmatprep.mubr.f32.mxu0 0.0
        %436 = vmatmul.mubr.f32.gmra.mrb[0].mxu0 %v356
        %v437 = vpop.f32.mrb[0].mxu0
        %v438 = vadd.f32 %v346, %v437
        %v439 = vpop.f32.mrb[0].mxu0
        %440 = vmatprep.mubr.f32.mxu0 0.0
        %441 = vmatmul.mubr.f32.gmra.mrb[0].mxu0 %v359
        %v442 = vpop.f32.mrb[0].mxu0
        %v443 = vadd.f32 %v346, %v442
        %v444 = vpop.f32.mrb[0].mxu0
        %445 = vdwg.mxu0
        %vm446 = vcmask 130048
        %447 = vst.msk [vmem:[#allocation2] sm:$0xff] %vm446, %v428
        %448 = vst.msk [vmem:[#allocation2 + $0x8] sm:$0xff] %vm446, %v433
        %449 = vst.msk [vmem:[#allocation2 + $0x10] sm:$0xff] %vm446, %v438
        %450 = vst.msk [vmem:[#allocation2 + $0x18] sm:$0xff] %vm446, %v443
        %455 = vrot.lane.b32.xlu0 %v428, 112
        %v456 = vpop.permute.xlu0 %455
        %457 = vrot.lane.b32.xlu0 %v433, 112
        %v458 = vpop.permute.xlu0 %457
        %459 = vrot.lane.b32.xlu0 %v438, 112
        %v460 = vpop.permute.xlu0 %459
        %461 = vrot.lane.b32.xlu0 %v443, 112
        %v462 = vpop.permute.xlu0 %461
        %s467 = scalar_lea.vmem [#allocation2], 32
        %468 = vst.msk [vmem:[%s467] sm:$0xff] %vm446, %v456
        %469 = vst.msk [vmem:[%s467 + $0x8] sm:$0xff] %vm446, %v458
        %470 = vst.msk [vmem:[%s467 + $0x10] sm:$0xff] %vm446, %v460
        %471 = vst.msk [vmem:[%s467 + $0x18] sm:$0xff] %vm446, %v462
        %472 = vrot.lane.b32.xlu0 %v428, 96
        %v473 = vpop.permute.xlu0 %472
        %474 = vrot.lane.b32.xlu0 %v433, 96
        %v475 = vpop.permute.xlu0 %474
        %476 = vrot.lane.b32.xlu0 %v438, 96
        %v477 = vpop.permute.xlu0 %476
        %478 = vrot.lane.b32.xlu0 %v443, 96
        %v479 = vpop.permute.xlu0 %478
        %s484 = scalar_lea.vmem [#allocation2], 64
        %485 = vst.msk [vmem:[%s484] sm:$0xff] %vm446, %v473
        %486 = vst.msk [vmem:[%s484 + $0x8] sm:$0xff] %vm446, %v475
        %487 = vst.msk [vmem:[%s484 + $0x10] sm:$0xff] %vm446, %v477
        %488 = vst.msk [vmem:[%s484 + $0x18] sm:$0xff] %vm446, %v479
        %489 = vrot.lane.b32.xlu0 %v428, 80
        %v490 = vpop.permute.xlu0 %489
        %491 = vrot.lane.b32.xlu0 %v433, 80
        %v492 = vpop.permute.xlu0 %491
        %493 = vrot.lane.b32.xlu0 %v438, 80
        %v494 = vpop.permute.xlu0 %493
        %495 = vrot.lane.b32.xlu0 %v443, 80
        %v496 = vpop.permute.xlu0 %495
        %s501 = scalar_lea.vmem [#allocation2], 96
        %502 = vst.msk [vmem:[%s501] sm:$0xff] %vm446, %v490
        %503 = vst.msk [vmem:[%s501 + $0x8] sm:$0xff] %vm446, %v492
        %504 = vst.msk [vmem:[%s501 + $0x10] sm:$0xff] %vm446, %v494
        %505 = vst.msk [vmem:[%s501 + $0x18] sm:$0xff] %vm446, %v496
        %506 = vrot.lane.b32.xlu0 %v428, 64
        %v507 = vpop.permute.xlu0 %506
        %508 = vrot.lane.b32.xlu0 %v433, 64
        %v509 = vpop.permute.xlu0 %508
        %510 = vrot.lane.b32.xlu0 %v438, 64
        %v511 = vpop.permute.xlu0 %510
        %512 = vrot.lane.b32.xlu0 %v443, 64
        %v513 = vpop.permute.xlu0 %512
        %s518 = scalar_lea.vmem [#allocation2], 128
        %519 = vst.msk [vmem:[%s518] sm:$0xff] %vm446, %v507
        %520 = vst.msk [vmem:[%s518 + $0x8] sm:$0xff] %vm446, %v509
        %521 = vst.msk [vmem:[%s518 + $0x10] sm:$0xff] %vm446, %v511
        %522 = vst.msk [vmem:[%s518 + $0x18] sm:$0xff] %vm446, %v513
        %523 = vrot.lane.b32.xlu0 %v428, 48
        %v524 = vpop.permute.xlu0 %523
        %525 = vrot.lane.b32.xlu0 %v433, 48
        %v526 = vpop.permute.xlu0 %525
        %527 = vrot.lane.b32.xlu0 %v438, 48
        %v528 = vpop.permute.xlu0 %527
        %529 = vrot.lane.b32.xlu0 %v443, 48
        %v530 = vpop.permute.xlu0 %529
        %s535 = scalar_lea.vmem [#allocation2], 160
        %536 = vst.msk [vmem:[%s535] sm:$0xff] %vm446, %v524
        %537 = vst.msk [vmem:[%s535 + $0x8] sm:$0xff] %vm446, %v526
        %538 = vst.msk [vmem:[%s535 + $0x10] sm:$0xff] %vm446, %v528
        %539 = vst.msk [vmem:[%s535 + $0x18] sm:$0xff] %vm446, %v530
        %v541 = vsel %vm446, %v330, 0
        %v544 = vsel %vm446, %v331, 0
        %v547 = vsel %vm446, %v332, 0
        %v550 = vsel %vm446, %v333, 0
        %v553 = vsel %vm446, %v334, 0
        %v556 = vsel %vm446, %v335, 0
        %v559 = vsel %vm446, %v336, 0
        %v562 = vsel %vm446, %v337, 0
        %564 = vmatprep.subr.mxu0 0.0
        %565 = vmatpush1.msra.mxu0 %v324
        %566 = vmatprep.subr.mxu0 0.0
        %567 = vmatpush1.msra.mxu0 %v325
        %568 = vmatprep.subr.mxu0 0.0
        %569 = vmatpush1.msra.mxu0 0.0
        %570 = vmatprep.subr.mxu0 0.0
        %571 = vmatpush1.msra.mxu0 0.0
        %572 = vmatprep.subr.mxu0 0.0
        %573 = vmatpush1.msra.mxu0 0.0
        %574 = vmatprep.subr.mxu0 0.0
        %575 = vmatpush1.msra.mxu0 0.0
        %576 = vmatprep.subr.mxu0 0.0
        %577 = vmatpush1.msra.mxu0 0.0
        %578 = vmatprep.subr.mxu0 0.0
        %579 = vmatpush1.msra.mxu0 0.0
        %580 = vmatprep.subr.mxu0 0.0
        %581 = vmatpush1.msra.mxu0 0.0
        %582 = vmatprep.subr.mxu0 0.0
        %583 = vmatpush1.msra.mxu0 0.0
        %584 = vmatprep.subr.mxu0 0.0
        %585 = vmatpush1.msra.mxu0 0.0
        %586 = vmatprep.subr.mxu0 0.0
        %587 = vmatpush1.msra.mxu0 0.0
        %588 = vmatprep.subr.mxu0 0.0
        %589 = vmatpush1.msra.mxu0 0.0
        %590 = vmatprep.subr.mxu0 0.0
        %591 = vmatpush1.msra.mxu0 0.0
        %592 = vmatprep.subr.mxu0 0.0
        %593 = vmatpush1.msra.mxu0 0.0
        %594 = vmatprep.subr.mxu0 0.0
        %595 = vmatpush1.msra.mxu0 0.0
        %596 = vmatprep.subr.mxu0 0.0
        %597 = vmatpush1.msra.mxu0 0.0
        %598 = vmatprep.subr.mxu0 0.0
        %599 = vmatpush1.msra.mxu0 0.0
        %600 = vmatprep.subr.mxu0 0.0
        %601 = vmatpush1.msra.mxu0 0.0
        %602 = vmatprep.subr.mxu0 0.0
        %603 = vmatpush1.msra.mxu0 0.0
        %604 = vmatprep.subr.mxu0 0.0
        %605 = vmatpush1.msra.mxu0 0.0
        %606 = vmatprep.subr.mxu0 0.0
        %607 = vmatpush1.msra.mxu0 0.0
        %608 = vmatprep.subr.mxu0 0.0
        %609 = vmatpush1.msra.mxu0 0.0
        %610 = vmatprep.subr.mxu0 0.0
        %611 = vmatpush1.msra.mxu0 0.0
        %612 = vmatprep.subr.mxu0 0.0
        %613 = vmatpush1.msra.mxu0 0.0
        %614 = vmatprep.subr.mxu0 0.0
        %615 = vmatpush1.msra.mxu0 0.0
        %616 = vmatprep.subr.mxu0 0.0
        %617 = vmatpush1.msra.mxu0 0.0
        %618 = vmatprep.subr.mxu0 0.0
        %619 = vmatpush1.msra.mxu0 0.0
        %620 = vmatprep.subr.mxu0 0.0
        %621 = vmatpush1.msra.mxu0 0.0
        %622 = vmatprep.subr.mxu0 0.0
        %623 = vmatpush1.msra.mxu0 0.0
        %624 = vmatprep.subr.mxu0 0.0
        %625 = vmatpush1.msra.mxu0 0.0
        %626 = vmatprep.subr.mxu0 0.0
        %627 = vmatpush1.msra.mxu0 0.0
        %628 = vmatprep.mubr.f32.mxu0 0.0
        %629 = vmatmul.mubr.f32.gmra.mrb[0].mxu0 %v541
        %v630 = vpop.f32.mrb[0].mxu0
        %v631 = vadd.f32 0.0, %v630
        %v632 = vpop.f32.mrb[0].mxu0
        %633 = vmatprep.mubr.f32.mxu0 0.0
        %634 = vmatmul.mubr.f32.gmra.mrb[0].mxu0 %v544
        %v635 = vpop.f32.mrb[0].mxu0
        %v636 = vadd.f32 0.0, %v635
        %v637 = vpop.f32.mrb[0].mxu0
        %638 = vmatprep.mubr.f32.mxu0 0.0
        %639 = vmatmul.mubr.f32.gmra.mrb[0].mxu0 %v547
        %v640 = vpop.f32.mrb[0].mxu0
        %v641 = vadd.f32 0.0, %v640
        %v642 = vpop.f32.mrb[0].mxu0
        %643 = vmatprep.mubr.f32.mxu0 0.0
        %644 = vmatmul.mubr.f32.gmra.mrb[0].mxu0 %v550
        %v645 = vpop.f32.mrb[0].mxu0
        %v646 = vadd.f32 0.0, %v645
        %v647 = vpop.f32.mrb[0].mxu0
        %648 = vmatprep.mubr.f32.mxu0 0.0
        %649 = vmatmul.mubr.f32.gmra.mrb[0].mxu0 %v553
        %v650 = vpop.f32.mrb[0].mxu0
        %v651 = vadd.f32 0.0, %v650
        %v652 = vpop.f32.mrb[0].mxu0
        %653 = vmatprep.mubr.f32.mxu0 0.0
        %654 = vmatmul.mubr.f32.gmra.mrb[0].mxu0 %v556
        %v655 = vpop.f32.mrb[0].mxu0
        %v656 = vadd.f32 0.0, %v655
        %v657 = vpop.f32.mrb[0].mxu0
        %658 = vmatprep.mubr.f32.mxu0 0.0
        %659 = vmatmul.mubr.f32.gmra.mrb[0].mxu0 %v559
        %v660 = vpop.f32.mrb[0].mxu0
        %v661 = vadd.f32 0.0, %v660
        %v662 = vpop.f32.mrb[0].mxu0
        %663 = vmatprep.mubr.f32.mxu0 0.0
        %664 = vmatmul.mubr.f32.gmra.mrb[0].mxu0 %v562
        %v665 = vpop.f32.mrb[0].mxu0
        %v666 = vadd.f32 0.0, %v665
        %v667 = vpop.f32.mrb[0].mxu0
        %668 = vdwg.mxu0
        %v669 = vld [vmem:[%s5] sm:$0xff]
        %v670 = vld [vmem:[%s5 + $0x8] sm:$0xff]
        %v672 = vsel %vm348, %v651, 0
        %v675 = vsel %vm348, %v656, 0
        %v678 = vsel %vm348, %v661, 0
        %v681 = vsel %vm348, %v666, 0
        %683 = vmatprep.subr.mxu0 0.0
        %684 = vmatpush1.msra.mxu0 %v670
        %685 = vmatprep.subr.mxu0 0.0
        %686 = vmatpush1.msra.mxu0 0.0
        %687 = vmatprep.subr.mxu0 0.0
        %688 = vmatpush1.msra.mxu0 0.0
        %689 = vmatprep.subr.mxu0 0.0
        %690 = vmatpush1.msra.mxu0 0.0
        %691 = vmatprep.subr.mxu0 0.0
        %692 = vmatpush1.msra.mxu0 0.0
        %693 = vmatprep.subr.mxu0 0.0
        %694 = vmatpush1.msra.mxu0 0.0
        %695 = vmatprep.subr.mxu0 0.0
        %696 = vmatpush1.msra.mxu0 0.0
        %697 = vmatprep.subr.mxu0 0.0
        %698 = vmatpush1.msra.mxu0 0.0
        %699 = vmatprep.subr.mxu0 0.0
        %700 = vmatpush1.msra.mxu0 0.0
        %701 = vmatprep.subr.mxu0 0.0
        %702 = vmatpush1.msra.mxu0 0.0
        %703 = vmatprep.subr.mxu0 0.0
        %704 = vmatpush1.msra.mxu0 0.0
        %705 = vmatprep.subr.mxu0 0.0
        %706 = vmatpush1.msra.mxu0 0.0
        %707 = vmatprep.subr.mxu0 0.0
        %708 = vmatpush1.msra.mxu0 0.0
        %709 = vmatprep.subr.mxu0 0.0
        %710 = vmatpush1.msra.mxu0 0.0
        %711 = vmatprep.subr.mxu0 0.0
        %712 = vmatpush1.msra.mxu0 0.0
        %713 = vmatprep.subr.mxu0 0.0
        %714 = vmatpush1.msra.mxu0 0.0
        %715 = vmatprep.subr.mxu0 0.0
        %716 = vmatpush1.msra.mxu0 0.0
        %717 = vmatprep.subr.mxu0 0.0
        %718 = vmatpush1.msra.mxu0 0.0
        %719 = vmatprep.subr.mxu0 0.0
        %720 = vmatpush1.msra.mxu0 0.0
        %721 = vmatprep.subr.mxu0 0.0
        %722 = vmatpush1.msra.mxu0 0.0
        %723 = vmatprep.subr.mxu0 0.0
        %724 = vmatpush1.msra.mxu0 0.0
        %725 = vmatprep.subr.mxu0 0.0
        %726 = vmatpush1.msra.mxu0 0.0
        %727 = vmatprep.subr.mxu0 0.0
        %728 = vmatpush1.msra.mxu0 0.0
        %729 = vmatprep.subr.mxu0 0.0
        %730 = vmatpush1.msra.mxu0 0.0
        %731 = vmatprep.subr.mxu0 0.0
        %732 = vmatpush1.msra.mxu0 0.0
        %733 = vmatprep.subr.mxu0 0.0
        %734 = vmatpush1.msra.mxu0 0.0
        %735 = vmatprep.subr.mxu0 0.0
        %736 = vmatpush1.msra.mxu0 0.0
        %737 = vmatprep.subr.mxu0 0.0
        %738 = vmatpush1.msra.mxu0 0.0
        %739 = vmatprep.subr.mxu0 0.0
        %740 = vmatpush1.msra.mxu0 0.0
        %741 = vmatprep.subr.mxu0 0.0
        %742 = vmatpush1.msra.mxu0 0.0
        %743 = vmatprep.subr.mxu0 0.0
        %744 = vmatpush1.msra.mxu0 0.0
        %745 = vmatprep.subr.mxu0 0.0
        %746 = vmatpush1.msra.mxu0 0.0
        %747 = vmatprep.mubr.f32.mxu0 0.0
        %748 = vmatmul.mubr.f32.gmra.mrb[0].mxu0 %v672
        %v749 = vpop.f32.mrb[0].mxu0
        %v750 = vadd.f32 0.0, %v749
        %v751 = vpop.f32.mrb[0].mxu0
        %752 = vmatprep.mubr.f32.mxu0 0.0
        %753 = vmatmul.mubr.f32.gmra.mrb[0].mxu0 %v675
        %v754 = vpop.f32.mrb[0].mxu0
        %v755 = vadd.f32 0.0, %v754
        %v756 = vpop.f32.mrb[0].mxu0
        %757 = vmatprep.mubr.f32.mxu0 0.0
        %758 = vmatmul.mubr.f32.gmra.mrb[0].mxu0 %v678
        %v759 = vpop.f32.mrb[0].mxu0
        %v760 = vadd.f32 0.0, %v759
        %v761 = vpop.f32.mrb[0].mxu0
        %762 = vmatprep.mubr.f32.mxu0 0.0
        %763 = vmatmul.mubr.f32.gmra.mrb[0].mxu0 %v681
        %v764 = vpop.f32.mrb[0].mxu0
        %v765 = vadd.f32 0.0, %v764
        %v766 = vpop.f32.mrb[0].mxu0
        %767 = vdwg.mxu0
        %v769 = vsel %vm348, %v631, 0
        %v772 = vsel %vm348, %v636, 0
        %v775 = vsel %vm348, %v641, 0
        %v778 = vsel %vm348, %v646, 0
        %780 = vmatprep.subr.mxu0 0.0
        %781 = vmatpush1.msra.mxu0 %v669
        %782 = vmatprep.subr.mxu0 0.0
        %783 = vmatpush1.msra.mxu0 0.0
        %784 = vmatprep.subr.mxu0 0.0
        %785 = vmatpush1.msra.mxu0 0.0
        %786 = vmatprep.subr.mxu0 0.0
        %787 = vmatpush1.msra.mxu0 0.0
        %788 = vmatprep.subr.mxu0 0.0
        %789 = vmatpush1.msra.mxu0 0.0
        %790 = vmatprep.subr.mxu0 0.0
        %791 = vmatpush1.msra.mxu0 0.0
        %792 = vmatprep.subr.mxu0 0.0
        %793 = vmatpush1.msra.mxu0 0.0
        %794 = vmatprep.subr.mxu0 0.0
        %795 = vmatpush1.msra.mxu0 0.0
        %796 = vmatprep.subr.mxu0 0.0
        %797 = vmatpush1.msra.mxu0 0.0
        %798 = vmatprep.subr.mxu0 0.0
        %799 = vmatpush1.msra.mxu0 0.0
        %800 = vmatprep.subr.mxu0 0.0
        %801 = vmatpush1.msra.mxu0 0.0
        %802 = vmatprep.subr.mxu0 0.0
        %803 = vmatpush1.msra.mxu0 0.0
        %804 = vmatprep.subr.mxu0 0.0
        %805 = vmatpush1.msra.mxu0 0.0
        %806 = vmatprep.subr.mxu0 0.0
        %807 = vmatpush1.msra.mxu0 0.0
        %808 = vmatprep.subr.mxu0 0.0
        %809 = vmatpush1.msra.mxu0 0.0
        %810 = vmatprep.subr.mxu0 0.0
        %811 = vmatpush1.msra.mxu0 0.0
        %812 = vmatprep.subr.mxu0 0.0
        %813 = vmatpush1.msra.mxu0 0.0
        %814 = vmatprep.subr.mxu0 0.0
        %815 = vmatpush1.msra.mxu0 0.0
        %816 = vmatprep.subr.mxu0 0.0
        %817 = vmatpush1.msra.mxu0 0.0
        %818 = vmatprep.subr.mxu0 0.0
        %819 = vmatpush1.msra.mxu0 0.0
        %820 = vmatprep.subr.mxu0 0.0
        %821 = vmatpush1.msra.mxu0 0.0
        %822 = vmatprep.subr.mxu0 0.0
        %823 = vmatpush1.msra.mxu0 0.0
        %824 = vmatprep.subr.mxu0 0.0
        %825 = vmatpush1.msra.mxu0 0.0
        %826 = vmatprep.subr.mxu0 0.0
        %827 = vmatpush1.msra.mxu0 0.0
        %828 = vmatprep.subr.mxu0 0.0
        %829 = vmatpush1.msra.mxu0 0.0
        %830 = vmatprep.subr.mxu0 0.0
        %831 = vmatpush1.msra.mxu0 0.0
        %832 = vmatprep.subr.mxu0 0.0
        %833 = vmatpush1.msra.mxu0 0.0
        %834 = vmatprep.subr.mxu0 0.0
        %835 = vmatpush1.msra.mxu0 0.0
        %836 = vmatprep.subr.mxu0 0.0
        %837 = vmatpush1.msra.mxu0 0.0
        %838 = vmatprep.subr.mxu0 0.0
        %839 = vmatpush1.msra.mxu0 0.0
        %840 = vmatprep.subr.mxu0 0.0
        %841 = vmatpush1.msra.mxu0 0.0
        %842 = vmatprep.subr.mxu0 0.0
        %843 = vmatpush1.msra.mxu0 0.0
        %844 = vmatprep.mubr.f32.mxu0 0.0
        %845 = vmatmul.mubr.f32.gmra.mrb[0].mxu0 %v769
        %v846 = vpop.f32.mrb[0].mxu0
        %v847 = vadd.f32 %v750, %v846
        %v848 = vpop.f32.mrb[0].mxu0
        %849 = vmatprep.mubr.f32.mxu0 0.0
        %850 = vmatmul.mubr.f32.gmra.mrb[0].mxu0 %v772
        %v851 = vpop.f32.mrb[0].mxu0
        %v852 = vadd.f32 %v755, %v851
        %v853 = vpop.f32.mrb[0].mxu0
        %854 = vmatprep.mubr.f32.mxu0 0.0
        %855 = vmatmul.mubr.f32.gmra.mrb[0].mxu0 %v775
        %v856 = vpop.f32.mrb[0].mxu0
        %v857 = vadd.f32 %v760, %v856
        %v858 = vpop.f32.mrb[0].mxu0
        %859 = vmatprep.mubr.f32.mxu0 0.0
        %860 = vmatmul.mubr.f32.gmra.mrb[0].mxu0 %v778
        %v861 = vpop.f32.mrb[0].mxu0
        %v862 = vadd.f32 %v765, %v861
        %v863 = vpop.f32.mrb[0].mxu0
        %864 = vdwg.mxu0
        %v865 = vld [vmem:[#allocation2] sm:$0xff]
        %v866 = vld [vmem:[#allocation2 + $0x8] sm:$0xff]
        %v867 = vld [vmem:[#allocation2 + $0x10] sm:$0xff]
        %v868 = vld [vmem:[#allocation2 + $0x18] sm:$0xff]
        %v869 = vadd.f32 %v847, %v865
        %v870 = vadd.f32 %v852, %v866
        %v871 = vadd.f32 %v857, %v867
        %v872 = vadd.f32 %v862, %v868
        %v873 = vsub.f32 0.0, %v869
        %v874 = vsub.f32 0.0, %v870
        %v875 = vsub.f32 0.0, %v871
        %v876 = vsub.f32 0.0, %v872
        %v877 = vmul.f32 %v873, 1.442695
        %v878 = vpow.pop %v877
        %v879 = vmul.f32 %v874, 1.442695
        %v880 = vpow.pop %v879
        %v881 = vmul.f32 %v875, 1.442695
        %v882 = vpow.pop %v881
        %v883 = vmul.f32 %v876, 1.442695
        %v884 = vpow.pop %v883
        %v885 = vadd.f32 %v878, 1.0
        %v886 = vadd.f32 %v880, 1.0
        %v887 = vadd.f32 %v882, 1.0
        %v888 = vadd.f32 %v884, 1.0
        %v889 = vrcp.pop %v885
        %v890 = vrcp.pop %v886
        %v891 = vrcp.pop %v887
        %v892 = vrcp.pop %v888
        %v893 = vmax.f32 %v869, 0.0
        %v894 = vmax.f32 %v870, 0.0
        %v895 = vmax.f32 %v871, 0.0
        %v896 = vmax.f32 %v872, 0.0
        %901 = vrot.lane.b32.xlu0 %v893, 120
        %v902 = vpop.permute.xlu0 %901
        %903 = vrot.lane.b32.xlu0 %v894, 120
        %v904 = vpop.permute.xlu0 %903
        %905 = vrot.lane.b32.xlu0 %v895, 120
        %v906 = vpop.permute.xlu0 %905
        %907 = vrot.lane.b32.xlu0 %v896, 120
        %v908 = vpop.permute.xlu0 %907
        %v913 = vmul.f32 %v889, %v902
        %v914 = vmul.f32 %v890, %v904
        %v915 = vmul.f32 %v891, %v906
        %v916 = vmul.f32 %v892, %v908
        %vm917 = vcmask 261120
        %v919 = vsel %vm917, %v338, 0
        %v922 = vsel %vm917, %v339, 0
        %924 = vmatprep.subr.mxu0 0.0
        %925 = vmatpush1.msra.mxu0 %v913
        %926 = vmatprep.subr.mxu0 0.0
        %927 = vmatpush1.msra.mxu0 %v914
        %928 = vmatprep.subr.mxu0 0.0
        %929 = vmatpush1.msra.mxu0 %v915
        %930 = vmatprep.subr.mxu0 0.0
        %931 = vmatpush1.msra.mxu0 %v916
        %932 = vmatprep.subr.mxu0 0.0
        %933 = vmatpush1.msra.mxu0 0.0
        %934 = vmatprep.subr.mxu0 0.0
        %935 = vmatpush1.msra.mxu0 0.0
        %936 = vmatprep.subr.mxu0 0.0
        %937 = vmatpush1.msra.mxu0 0.0
        %938 = vmatprep.subr.mxu0 0.0
        %939 = vmatpush1.msra.mxu0 0.0
        %940 = vmatprep.subr.mxu0 0.0
        %941 = vmatpush1.msra.mxu0 0.0
        %942 = vmatprep.subr.mxu0 0.0
        %943 = vmatpush1.msra.mxu0 0.0
        %944 = vmatprep.subr.mxu0 0.0
        %945 = vmatpush1.msra.mxu0 0.0
        %946 = vmatprep.subr.mxu0 0.0
        %947 = vmatpush1.msra.mxu0 0.0
        %948 = vmatprep.subr.mxu0 0.0
        %949 = vmatpush1.msra.mxu0 0.0
        %950 = vmatprep.subr.mxu0 0.0
        %951 = vmatpush1.msra.mxu0 0.0
        %952 = vmatprep.subr.mxu0 0.0
        %953 = vmatpush1.msra.mxu0 0.0
        %954 = vmatprep.subr.mxu0 0.0
        %955 = vmatpush1.msra.mxu0 0.0
        %956 = vmatprep.subr.mxu0 0.0
        %957 = vmatpush1.msra.mxu0 0.0
        %958 = vmatprep.subr.mxu0 0.0
        %959 = vmatpush1.msra.mxu0 0.0
        %960 = vmatprep.subr.mxu0 0.0
        %961 = vmatpush1.msra.mxu0 0.0
        %962 = vmatprep.subr.mxu0 0.0
        %963 = vmatpush1.msra.mxu0 0.0
        %964 = vmatprep.subr.mxu0 0.0
        %965 = vmatpush1.msra.mxu0 0.0
        %966 = vmatprep.subr.mxu0 0.0
        %967 = vmatpush1.msra.mxu0 0.0
        %968 = vmatprep.subr.mxu0 0.0
        %969 = vmatpush1.msra.mxu0 0.0
        %970 = vmatprep.subr.mxu0 0.0
        %971 = vmatpush1.msra.mxu0 0.0
        %972 = vmatprep.subr.mxu0 0.0
        %973 = vmatpush1.msra.mxu0 0.0
        %974 = vmatprep.subr.mxu0 0.0
        %975 = vmatpush1.msra.mxu0 0.0
        %976 = vmatprep.subr.mxu0 0.0
        %977 = vmatpush1.msra.mxu0 0.0
        %978 = vmatprep.subr.mxu0 0.0
        %979 = vmatpush1.msra.mxu0 0.0
        %980 = vmatprep.subr.mxu0 0.0
        %981 = vmatpush1.msra.mxu0 0.0
        %982 = vmatprep.subr.mxu0 0.0
        %983 = vmatpush1.msra.mxu0 0.0
        %984 = vmatprep.subr.mxu0 0.0
        %985 = vmatpush1.msra.mxu0 0.0
        %986 = vmatprep.subr.mxu0 0.0
        %987 = vmatpush1.msra.mxu0 0.0
        %988 = vmatprep.mubr.f32.mxu0 0.0
        %989 = vmatmul.mubr.f32.gmra.mrb[0].mxu0 %v919
        %v990 = vpop.f32.mrb[0].mxu0
        %v991 = vadd.f32 0.0, %v990
        %v992 = vpop.f32.mrb[0].mxu0
        %993 = vmatprep.mubr.f32.mxu0 0.0
        %994 = vmatmul.mubr.f32.gmra.mrb[0].mxu0 %v922
        %v995 = vpop.f32.mrb[0].mxu0
        %v996 = vadd.f32 0.0, %v995
        %v997 = vpop.f32.mrb[0].mxu0
        %998 = vdwg.mxu0
        %v999 = vadd.f32 %v324, %v991
        %v1000 = vadd.f32 %v325, %v996
        %1001 = vmatprep.subr.mxu0 0.0
        %1002 = vmatpush1.msra.mxu0 %v999
        %1003 = vmatprep.subr.mxu0 0.0
        %1004 = vmatpush1.msra.mxu0 %v1000
        %1005 = vmatprep.subr.mxu0 0.0
        %1006 = vmatpush1.msra.mxu0 0.0
        %1007 = vmatprep.subr.mxu0 0.0
        %1008 = vmatpush1.msra.mxu0 0.0
        %1009 = vmatprep.subr.mxu0 0.0
        %1010 = vmatpush1.msra.mxu0 0.0
        %1011 = vmatprep.subr.mxu0 0.0
        %1012 = vmatpush1.msra.mxu0 0.0
        %1013 = vmatprep.subr.mxu0 0.0
        %1014 = vmatpush1.msra.mxu0 0.0
        %1015 = vmatprep.subr.mxu0 0.0
        %1016 = vmatpush1.msra.mxu0 0.0
        %1017 = vmatprep.subr.mxu0 0.0
        %1018 = vmatpush1.msra.mxu0 0.0
        %1019 = vmatprep.subr.mxu0 0.0
        %1020 = vmatpush1.msra.mxu0 0.0
        %1021 = vmatprep.subr.mxu0 0.0
        %1022 = vmatpush1.msra.mxu0 0.0
        %1023 = vmatprep.subr.mxu0 0.0
        %1024 = vmatpush1.msra.mxu0 0.0
        %1025 = vmatprep.subr.mxu0 0.0
        %1026 = vmatpush1.msra.mxu0 0.0
        %1027 = vmatprep.subr.mxu0 0.0
        %1028 = vmatpush1.msra.mxu0 0.0
        %1029 = vmatprep.subr.mxu0 0.0
        %1030 = vmatpush1.msra.mxu0 0.0
        %1031 = vmatprep.subr.mxu0 0.0
        %1032 = vmatpush1.msra.mxu0 0.0
        %1033 = vmatprep.subr.mxu0 0.0
        %1034 = vmatpush1.msra.mxu0 0.0
        %1035 = vmatprep.subr.mxu0 0.0
        %1036 = vmatpush1.msra.mxu0 0.0
        %1037 = vmatprep.subr.mxu0 0.0
        %1038 = vmatpush1.msra.mxu0 0.0
        %1039 = vmatprep.subr.mxu0 0.0
        %1040 = vmatpush1.msra.mxu0 0.0
        %1041 = vmatprep.subr.mxu0 0.0
        %1042 = vmatpush1.msra.mxu0 0.0
        %1043 = vmatprep.subr.mxu0 0.0
        %1044 = vmatpush1.msra.mxu0 0.0
        %1045 = vmatprep.subr.mxu0 0.0
        %1046 = vmatpush1.msra.mxu0 0.0
        %1047 = vmatprep.subr.mxu0 0.0
        %1048 = vmatpush1.msra.mxu0 0.0
        %1049 = vmatprep.subr.mxu0 0.0
        %1050 = vmatpush1.msra.mxu0 0.0
        %1051 = vmatprep.subr.mxu0 0.0
        %1052 = vmatpush1.msra.mxu0 0.0
        %1053 = vmatprep.subr.mxu0 0.0
        %1054 = vmatpush1.msra.mxu0 0.0
        %1055 = vmatprep.subr.mxu0 0.0
        %1056 = vmatpush1.msra.mxu0 0.0
        %1057 = vmatprep.subr.mxu0 0.0
        %1058 = vmatpush1.msra.mxu0 0.0
        %1059 = vmatprep.subr.mxu0 0.0
        %1060 = vmatpush1.msra.mxu0 0.0
        %1061 = vmatprep.subr.mxu0 0.0
        %1062 = vmatpush1.msra.mxu0 0.0
        %1063 = vmatprep.subr.mxu0 0.0
        %1064 = vmatpush1.msra.mxu0 0.0
        %1065 = vmatprep.mubr.f32.mxu0 0.0
        %1066 = vmatmul.mubr.f32.gmra.mrb[0].mxu0 %v541
        %v1067 = vpop.f32.mrb[0].mxu0
        %v1068 = vadd.f32 0.0, %v1067
        %v1069 = vpop.f32.mrb[0].mxu0
        %1070 = vmatprep.mubr.f32.mxu0 0.0
        %1071 = vmatmul.mubr.f32.gmra.mrb[0].mxu0 %v544
        %v1072 = vpop.f32.mrb[0].mxu0
        %v1073 = vadd.f32 0.0, %v1072
        %v1074 = vpop.f32.mrb[0].mxu0
        %1075 = vmatprep.mubr.f32.mxu0 0.0
        %1076 = vmatmul.mubr.f32.gmra.mrb[0].mxu0 %v547
        %v1077 = vpop.f32.mrb[0].mxu0
        %v1078 = vadd.f32 0.0, %v1077
        %v1079 = vpop.f32.mrb[0].mxu0
        %1080 = vmatprep.mubr.f32.mxu0 0.0
        %1081 = vmatmul.mubr.f32.gmra.mrb[0].mxu0 %v550
        %v1082 = vpop.f32.mrb[0].mxu0
        %v1083 = vadd.f32 0.0, %v1082
        %v1084 = vpop.f32.mrb[0].mxu0
        %1085 = vmatprep.mubr.f32.mxu0 0.0
        %1086 = vmatmul.mubr.f32.gmra.mrb[0].mxu0 %v553
        %v1087 = vpop.f32.mrb[0].mxu0
        %v1088 = vadd.f32 0.0, %v1087
        %v1089 = vpop.f32.mrb[0].mxu0
        %1090 = vmatprep.mubr.f32.mxu0 0.0
        %1091 = vmatmul.mubr.f32.gmra.mrb[0].mxu0 %v556
        %v1092 = vpop.f32.mrb[0].mxu0
        %v1093 = vadd.f32 0.0, %v1092
        %v1094 = vpop.f32.mrb[0].mxu0
        %1095 = vmatprep.mubr.f32.mxu0 0.0
        %1096 = vmatmul.mubr.f32.gmra.mrb[0].mxu0 %v559
        %v1097 = vpop.f32.mrb[0].mxu0
        %v1098 = vadd.f32 0.0, %v1097
        %v1099 = vpop.f32.mrb[0].mxu0
        %1100 = vmatprep.mubr.f32.mxu0 0.0
        %1101 = vmatmul.mubr.f32.gmra.mrb[0].mxu0 %v562
        %v1102 = vpop.f32.mrb[0].mxu0
        %v1103 = vadd.f32 0.0, %v1102
        %v1104 = vpop.f32.mrb[0].mxu0
        %1105 = vdwg.mxu0
        %s1106 = scalar_lea.vmem %s5, 16
        %v1107 = vld [vmem:[%s1106] sm:$0xff]
        %v1108 = vld [vmem:[%s1106 + $0x8] sm:$0xff]
        %v1110 = vsel %vm348, %v1088, 0
        %v1113 = vsel %vm348, %v1093, 0
        %v1116 = vsel %vm348, %v1098, 0
        %v1119 = vsel %vm348, %v1103, 0
        %1121 = vmatprep.subr.mxu0 0.0
        %1122 = vmatpush1.msra.mxu0 %v1108
        %1123 = vmatprep.subr.mxu0 0.0
        %1124 = vmatpush1.msra.mxu0 0.0
        %1125 = vmatprep.subr.mxu0 0.0
        %1126 = vmatpush1.msra.mxu0 0.0
        %1127 = vmatprep.subr.mxu0 0.0
        %1128 = vmatpush1.msra.mxu0 0.0
        %1129 = vmatprep.subr.mxu0 0.0
        %1130 = vmatpush1.msra.mxu0 0.0
        %1131 = vmatprep.subr.mxu0 0.0
        %1132 = vmatpush1.msra.mxu0 0.0
        %1133 = vmatprep.subr.mxu0 0.0
        %1134 = vmatpush1.msra.mxu0 0.0
        %1135 = vmatprep.subr.mxu0 0.0
        %1136 = vmatpush1.msra.mxu0 0.0
        %1137 = vmatprep.subr.mxu0 0.0
        %1138 = vmatpush1.msra.mxu0 0.0
        %1139 = vmatprep.subr.mxu0 0.0
        %1140 = vmatpush1.msra.mxu0 0.0
        %1141 = vmatprep.subr.mxu0 0.0
        %1142 = vmatpush1.msra.mxu0 0.0
        %1143 = vmatprep.subr.mxu0 0.0
        %1144 = vmatpush1.msra.mxu0 0.0
        %1145 = vmatprep.subr.mxu0 0.0
        %1146 = vmatpush1.msra.mxu0 0.0
        %1147 = vmatprep.subr.mxu0 0.0
        %1148 = vmatpush1.msra.mxu0 0.0
        %1149 = vmatprep.subr.mxu0 0.0
        %1150 = vmatpush1.msra.mxu0 0.0
        %1151 = vmatprep.subr.mxu0 0.0
        %1152 = vmatpush1.msra.mxu0 0.0
        %1153 = vmatprep.subr.mxu0 0.0
        %1154 = vmatpush1.msra.mxu0 0.0
        %1155 = vmatprep.subr.mxu0 0.0
        %1156 = vmatpush1.msra.mxu0 0.0
        %1157 = vmatprep.subr.mxu0 0.0
        %1158 = vmatpush1.msra.mxu0 0.0
        %1159 = vmatprep.subr.mxu0 0.0
        %1160 = vmatpush1.msra.mxu0 0.0
        %1161 = vmatprep.subr.mxu0 0.0
        %1162 = vmatpush1.msra.mxu0 0.0
        %1163 = vmatprep.subr.mxu0 0.0
        %1164 = vmatpush1.msra.mxu0 0.0
        %1165 = vmatprep.subr.mxu0 0.0
        %1166 = vmatpush1.msra.mxu0 0.0
        %1167 = vmatprep.subr.mxu0 0.0
        %1168 = vmatpush1.msra.mxu0 0.0
        %1169 = vmatprep.subr.mxu0 0.0
        %1170 = vmatpush1.msra.mxu0 0.0
        %1171 = vmatprep.subr.mxu0 0.0
        %1172 = vmatpush1.msra.mxu0 0.0
        %1173 = vmatprep.subr.mxu0 0.0
        %1174 = vmatpush1.msra.mxu0 0.0
        %1175 = vmatprep.subr.mxu0 0.0
        %1176 = vmatpush1.msra.mxu0 0.0
        %1177 = vmatprep.subr.mxu0 0.0
        %1178 = vmatpush1.msra.mxu0 0.0
        %1179 = vmatprep.subr.mxu0 0.0
        %1180 = vmatpush1.msra.mxu0 0.0
        %1181 = vmatprep.subr.mxu0 0.0
        %1182 = vmatpush1.msra.mxu0 0.0
        %1183 = vmatprep.subr.mxu0 0.0
        %1184 = vmatpush1.msra.mxu0 0.0
        %1185 = vmatprep.mubr.f32.mxu0 0.0
        %1186 = vmatmul.mubr.f32.gmra.mrb[0].mxu0 %v1110
        %v1187 = vpop.f32.mrb[0].mxu0
        %v1188 = vadd.f32 0.0, %v1187
        %v1189 = vpop.f32.mrb[0].mxu0
        %1190 = vmatprep.mubr.f32.mxu0 0.0
        %1191 = vmatmul.mubr.f32.gmra.mrb[0].mxu0 %v1113
        %v1192 = vpop.f32.mrb[0].mxu0
        %v1193 = vadd.f32 0.0, %v1192
        %v1194 = vpop.f32.mrb[0].mxu0
        %1195 = vmatprep.mubr.f32.mxu0 0.0
        %1196 = vmatmul.mubr.f32.gmra.mrb[0].mxu0 %v1116
        %v1197 = vpop.f32.mrb[0].mxu0
        %v1198 = vadd.f32 0.0, %v1197
        %v1199 = vpop.f32.mrb[0].mxu0
        %1200 = vmatprep.mubr.f32.mxu0 0.0
        %1201 = vmatmul.mubr.f32.gmra.mrb[0].mxu0 %v1119
        %v1202 = vpop.f32.mrb[0].mxu0
        %v1203 = vadd.f32 0.0, %v1202
        %v1204 = vpop.f32.mrb[0].mxu0
        %1205 = vdwg.mxu0
        %v1207 = vsel %vm348, %v1068, 0
        %v1210 = vsel %vm348, %v1073, 0
        %v1213 = vsel %vm348, %v1078, 0
        %v1216 = vsel %vm348, %v1083, 0
        %1218 = vmatprep.subr.mxu0 0.0
        %1219 = vmatpush1.msra.mxu0 %v1107
        %1220 = vmatprep.subr.mxu0 0.0
        %1221 = vmatpush1.msra.mxu0 0.0
        %1222 = vmatprep.subr.mxu0 0.0
        %1223 = vmatpush1.msra.mxu0 0.0
        %1224 = vmatprep.subr.mxu0 0.0
        %1225 = vmatpush1.msra.mxu0 0.0
        %1226 = vmatprep.subr.mxu0 0.0
        %1227 = vmatpush1.msra.mxu0 0.0
        %1228 = vmatprep.subr.mxu0 0.0
        %1229 = vmatpush1.msra.mxu0 0.0
        %1230 = vmatprep.subr.mxu0 0.0
        %1231 = vmatpush1.msra.mxu0 0.0
        %1232 = vmatprep.subr.mxu0 0.0
        %1233 = vmatpush1.msra.mxu0 0.0
        %1234 = vmatprep.subr.mxu0 0.0
        %1235 = vmatpush1.msra.mxu0 0.0
        %1236 = vmatprep.subr.mxu0 0.0
        %1237 = vmatpush1.msra.mxu0 0.0
        %1238 = vmatprep.subr.mxu0 0.0
        %1239 = vmatpush1.msra.mxu0 0.0
        %1240 = vmatprep.subr.mxu0 0.0
        %1241 = vmatpush1.msra.mxu0 0.0
        %1242 = vmatprep.subr.mxu0 0.0
        %1243 = vmatpush1.msra.mxu0 0.0
        %1244 = vmatprep.subr.mxu0 0.0
        %1245 = vmatpush1.msra.mxu0 0.0
        %1246 = vmatprep.subr.mxu0 0.0
        %1247 = vmatpush1.msra.mxu0 0.0
        %1248 = vmatprep.subr.mxu0 0.0
        %1249 = vmatpush1.msra.mxu0 0.0
        %1250 = vmatprep.subr.mxu0 0.0
        %1251 = vmatpush1.msra.mxu0 0.0
        %1252 = vmatprep.subr.mxu0 0.0
        %1253 = vmatpush1.msra.mxu0 0.0
        %1254 = vmatprep.subr.mxu0 0.0
        %1255 = vmatpush1.msra.mxu0 0.0
        %1256 = vmatprep.subr.mxu0 0.0
        %1257 = vmatpush1.msra.mxu0 0.0
        %1258 = vmatprep.subr.mxu0 0.0
        %1259 = vmatpush1.msra.mxu0 0.0
        %1260 = vmatprep.subr.mxu0 0.0
        %1261 = vmatpush1.msra.mxu0 0.0
        %1262 = vmatprep.subr.mxu0 0.0
        %1263 = vmatpush1.msra.mxu0 0.0
        %1264 = vmatprep.subr.mxu0 0.0
        %1265 = vmatpush1.msra.mxu0 0.0
        %1266 = vmatprep.subr.mxu0 0.0
        %1267 = vmatpush1.msra.mxu0 0.0
        %1268 = vmatprep.subr.mxu0 0.0
        %1269 = vmatpush1.msra.mxu0 0.0
        %1270 = vmatprep.subr.mxu0 0.0
        %1271 = vmatpush1.msra.mxu0 0.0
        %1272 = vmatprep.subr.mxu0 0.0
        %1273 = vmatpush1.msra.mxu0 0.0
        %1274 = vmatprep.subr.mxu0 0.0
        %1275 = vmatpush1.msra.mxu0 0.0
        %1276 = vmatprep.subr.mxu0 0.0
        %1277 = vmatpush1.msra.mxu0 0.0
        %1278 = vmatprep.subr.mxu0 0.0
        %1279 = vmatpush1.msra.mxu0 0.0
        %1280 = vmatprep.subr.mxu0 0.0
        %1281 = vmatpush1.msra.mxu0 0.0
        %1282 = vmatprep.mubr.f32.mxu0 0.0
        %1283 = vmatmul.mubr.f32.gmra.mrb[0].mxu0 %v1207
        %v1284 = vpop.f32.mrb[0].mxu0
        %v1285 = vadd.f32 %v1188, %v1284
        %v1286 = vpop.f32.mrb[0].mxu0
        %1287 = vmatprep.mubr.f32.mxu0 0.0
        %1288 = vmatmul.mubr.f32.gmra.mrb[0].mxu0 %v1210
        %v1289 = vpop.f32.mrb[0].mxu0
        %v1290 = vadd.f32 %v1193, %v1289
        %v1291 = vpop.f32.mrb[0].mxu0
        %1292 = vmatprep.mubr.f32.mxu0 0.0
        %1293 = vmatmul.mubr.f32.gmra.mrb[0].mxu0 %v1213
        %v1294 = vpop.f32.mrb[0].mxu0
        %v1295 = vadd.f32 %v1198, %v1294
        %v1296 = vpop.f32.mrb[0].mxu0
        %1297 = vmatprep.mubr.f32.mxu0 0.0
        %1298 = vmatmul.mubr.f32.gmra.mrb[0].mxu0 %v1216
        %v1299 = vpop.f32.mrb[0].mxu0
        %v1300 = vadd.f32 %v1203, %v1299
        %v1301 = vpop.f32.mrb[0].mxu0
        %1302 = vdwg.mxu0
        %v1303 = vld [vmem:[%s467] sm:$0xff]
        %v1304 = vld [vmem:[%s467 + $0x8] sm:$0xff]
        %v1305 = vld [vmem:[%s467 + $0x10] sm:$0xff]
        %v1306 = vld [vmem:[%s467 + $0x18] sm:$0xff]
        %v1307 = vadd.f32 %v1285, %v1303
        %v1308 = vadd.f32 %v1290, %v1304
        %v1309 = vadd.f32 %v1295, %v1305
        %v1310 = vadd.f32 %v1300, %v1306
        %v1311 = vsub.f32 0.0, %v1307
        %v1312 = vsub.f32 0.0, %v1308
        %v1313 = vsub.f32 0.0, %v1309
        %v1314 = vsub.f32 0.0, %v1310
        %v1315 = vmul.f32 %v1311, 1.442695
        %v1316 = vpow.pop %v1315
        %v1317 = vmul.f32 %v1312, 1.442695
        %v1318 = vpow.pop %v1317
        %v1319 = vmul.f32 %v1313, 1.442695
        %v1320 = vpow.pop %v1319
        %v1321 = vmul.f32 %v1314, 1.442695
        %v1322 = vpow.pop %v1321
        %v1323 = vadd.f32 %v1316, 1.0
        %v1324 = vadd.f32 %v1318, 1.0
        %v1325 = vadd.f32 %v1320, 1.0
        %v1326 = vadd.f32 %v1322, 1.0
        %v1327 = vrcp.pop %v1323
        %v1328 = vrcp.pop %v1324
        %v1329 = vrcp.pop %v1325
        %v1330 = vrcp.pop %v1326
        %v1331 = vmax.f32 %v1307, 0.0
        %v1332 = vmax.f32 %v1308, 0.0
        %v1333 = vmax.f32 %v1309, 0.0
        %v1334 = vmax.f32 %v1310, 0.0
        %1339 = vrot.lane.b32.xlu0 %v1331, 120
        %v1340 = vpop.permute.xlu0 %1339
        %1341 = vrot.lane.b32.xlu0 %v1332, 120
        %v1342 = vpop.permute.xlu0 %1341
        %1343 = vrot.lane.b32.xlu0 %v1333, 120
        %v1344 = vpop.permute.xlu0 %1343
        %1345 = vrot.lane.b32.xlu0 %v1334, 120
        %v1346 = vpop.permute.xlu0 %1345
        %v1351 = vmul.f32 %v1327, %v1340
        %v1352 = vmul.f32 %v1328, %v1342
        %v1353 = vmul.f32 %v1329, %v1344
        %v1354 = vmul.f32 %v1330, %v1346
        %1355 = vmatprep.subr.mxu0 0.0
        %1356 = vmatpush1.msra.mxu0 %v1351
        %1357 = vmatprep.subr.mxu0 0.0
        %1358 = vmatpush1.msra.mxu0 %v1352
        %1359 = vmatprep.subr.mxu0 0.0
        %1360 = vmatpush1.msra.mxu0 %v1353
        %1361 = vmatprep.subr.mxu0 0.0
        %1362 = vmatpush1.msra.mxu0 %v1354
        %1363 = vmatprep.subr.mxu0 0.0
        %1364 = vmatpush1.msra.mxu0 0.0
        %1365 = vmatprep.subr.mxu0 0.0
        %1366 = vmatpush1.msra.mxu0 0.0
        %1367 = vmatprep.subr.mxu0 0.0
        %1368 = vmatpush1.msra.mxu0 0.0
        %1369 = vmatprep.subr.mxu0 0.0
        %1370 = vmatpush1.msra.mxu0 0.0
        %1371 = vmatprep.subr.mxu0 0.0
        %1372 = vmatpush1.msra.mxu0 0.0
        %1373 = vmatprep.subr.mxu0 0.0
        %1374 = vmatpush1.msra.mxu0 0.0
        %1375 = vmatprep.subr.mxu0 0.0
        %1376 = vmatpush1.msra.mxu0 0.0
        %1377 = vmatprep.subr.mxu0 0.0
        %1378 = vmatpush1.msra.mxu0 0.0
        %1379 = vmatprep.subr.mxu0 0.0
        %1380 = vmatpush1.msra.mxu0 0.0
        %1381 = vmatprep.subr.mxu0 0.0
        %1382 = vmatpush1.msra.mxu0 0.0
        %1383 = vmatprep.subr.mxu0 0.0
        %1384 = vmatpush1.msra.mxu0 0.0
        %1385 = vmatprep.subr.mxu0 0.0
        %1386 = vmatpush1.msra.mxu0 0.0
        %1387 = vmatprep.subr.mxu0 0.0
        %1388 = vmatpush1.msra.mxu0 0.0
        %1389 = vmatprep.subr.mxu0 0.0
        %1390 = vmatpush1.msra.mxu0 0.0
        %1391 = vmatprep.subr.mxu0 0.0
        %1392 = vmatpush1.msra.mxu0 0.0
        %1393 = vmatprep.subr.mxu0 0.0
        %1394 = vmatpush1.msra.mxu0 0.0
        %1395 = vmatprep.subr.mxu0 0.0
        %1396 = vmatpush1.msra.mxu0 0.0
        %1397 = vmatprep.subr.mxu0 0.0
        %1398 = vmatpush1.msra.mxu0 0.0
        %1399 = vmatprep.subr.mxu0 0.0
        %1400 = vmatpush1.msra.mxu0 0.0
        %1401 = vmatprep.subr.mxu0 0.0
        %1402 = vmatpush1.msra.mxu0 0.0
        %1403 = vmatprep.subr.mxu0 0.0
        %1404 = vmatpush1.msra.mxu0 0.0
        %1405 = vmatprep.subr.mxu0 0.0
        %1406 = vmatpush1.msra.mxu0 0.0
        %1407 = vmatprep.subr.mxu0 0.0
        %1408 = vmatpush1.msra.mxu0 0.0
        %1409 = vmatprep.subr.mxu0 0.0
        %1410 = vmatpush1.msra.mxu0 0.0
        %1411 = vmatprep.subr.mxu0 0.0
        %1412 = vmatpush1.msra.mxu0 0.0
        %1413 = vmatprep.subr.mxu0 0.0
        %1414 = vmatpush1.msra.mxu0 0.0
        %1415 = vmatprep.subr.mxu0 0.0
        %1416 = vmatpush1.msra.mxu0 0.0
        %1417 = vmatprep.subr.mxu0 0.0
        %1418 = vmatpush1.msra.mxu0 0.0
        %1419 = vmatprep.mubr.f32.mxu0 0.0
        %1420 = vmatmul.mubr.f32.gmra.mrb[0].mxu0 %v919
        %v1421 = vpop.f32.mrb[0].mxu0
        %v1422 = vadd.f32 0.0, %v1421
        %v1423 = vpop.f32.mrb[0].mxu0
        %1424 = vmatprep.mubr.f32.mxu0 0.0
        %1425 = vmatmul.mubr.f32.gmra.mrb[0].mxu0 %v922
        %v1426 = vpop.f32.mrb[0].mxu0
        %v1427 = vadd.f32 0.0, %v1426
        %v1428 = vpop.f32.mrb[0].mxu0
        %1429 = vdwg.mxu0
        %v1430 = vadd.f32 %v999, %v1422
        %v1431 = vadd.f32 %v1000, %v1427
        %1432 = vmatprep.subr.mxu0 0.0
        %1433 = vmatpush1.msra.mxu0 %v1430
        %1434 = vmatprep.subr.mxu0 0.0
        %1435 = vmatpush1.msra.mxu0 %v1431
        %1436 = vmatprep.subr.mxu0 0.0
        %1437 = vmatpush1.msra.mxu0 0.0
        %1438 = vmatprep.subr.mxu0 0.0
        %1439 = vmatpush1.msra.mxu0 0.0
        %1440 = vmatprep.subr.mxu0 0.0
        %1441 = vmatpush1.msra.mxu0 0.0
        %1442 = vmatprep.subr.mxu0 0.0
        %1443 = vmatpush1.msra.mxu0 0.0
        %1444 = vmatprep.subr.mxu0 0.0
        %1445 = vmatpush1.msra.mxu0 0.0
        %1446 = vmatprep.subr.mxu0 0.0
        %1447 = vmatpush1.msra.mxu0 0.0
        %1448 = vmatprep.subr.mxu0 0.0
        %1449 = vmatpush1.msra.mxu0 0.0
        %1450 = vmatprep.subr.mxu0 0.0
        %1451 = vmatpush1.msra.mxu0 0.0
        %1452 = vmatprep.subr.mxu0 0.0
        %1453 = vmatpush1.msra.mxu0 0.0
        %1454 = vmatprep.subr.mxu0 0.0
        %1455 = vmatpush1.msra.mxu0 0.0
        %1456 = vmatprep.subr.mxu0 0.0
        %1457 = vmatpush1.msra.mxu0 0.0
        %1458 = vmatprep.subr.mxu0 0.0
        %1459 = vmatpush1.msra.mxu0 0.0
        %1460 = vmatprep.subr.mxu0 0.0
        %1461 = vmatpush1.msra.mxu0 0.0
        %1462 = vmatprep.subr.mxu0 0.0
        %1463 = vmatpush1.msra.mxu0 0.0
        %1464 = vmatprep.subr.mxu0 0.0
        %1465 = vmatpush1.msra.mxu0 0.0
        %1466 = vmatprep.subr.mxu0 0.0
        %1467 = vmatpush1.msra.mxu0 0.0
        %1468 = vmatprep.subr.mxu0 0.0
        %1469 = vmatpush1.msra.mxu0 0.0
        %1470 = vmatprep.subr.mxu0 0.0
        %1471 = vmatpush1.msra.mxu0 0.0
        %1472 = vmatprep.subr.mxu0 0.0
        %1473 = vmatpush1.msra.mxu0 0.0
        %1474 = vmatprep.subr.mxu0 0.0
        %1475 = vmatpush1.msra.mxu0 0.0
        %1476 = vmatprep.subr.mxu0 0.0
        %1477 = vmatpush1.msra.mxu0 0.0
        %1478 = vmatprep.subr.mxu0 0.0
        %1479 = vmatpush1.msra.mxu0 0.0
        %1480 = vmatprep.subr.mxu0 0.0
        %1481 = vmatpush1.msra.mxu0 0.0
        %1482 = vmatprep.subr.mxu0 0.0
        %1483 = vmatpush1.msra.mxu0 0.0
        %1484 = vmatprep.subr.mxu0 0.0
        %1485 = vmatpush1.msra.mxu0 0.0
        %1486 = vmatprep.subr.mxu0 0.0
        %1487 = vmatpush1.msra.mxu0 0.0
        %1488 = vmatprep.subr.mxu0 0.0
        %1489 = vmatpush1.msra.mxu0 0.0
        %1490 = vmatprep.subr.mxu0 0.0
        %1491 = vmatpush1.msra.mxu0 0.0
        %1492 = vmatprep.subr.mxu0 0.0
        %1493 = vmatpush1.msra.mxu0 0.0
        %1494 = vmatprep.subr.mxu0 0.0
        %1495 = vmatpush1.msra.mxu0 0.0
        %1496 = vmatprep.mubr.f32.mxu0 0.0
        %1497 = vmatmul.mubr.f32.gmra.mrb[0].mxu0 %v541
        %v1498 = vpop.f32.mrb[0].mxu0
        %v1499 = vadd.f32 0.0, %v1498
        %v1500 = vpop.f32.mrb[0].mxu0
        %1501 = vmatprep.mubr.f32.mxu0 0.0
        %1502 = vmatmul.mubr.f32.gmra.mrb[0].mxu0 %v544
        %v1503 = vpop.f32.mrb[0].mxu0
        %v1504 = vadd.f32 0.0, %v1503
        %v1505 = vpop.f32.mrb[0].mxu0
        %1506 = vmatprep.mubr.f32.mxu0 0.0
        %1507 = vmatmul.mubr.f32.gmra.mrb[0].mxu0 %v547
        %v1508 = vpop.f32.mrb[0].mxu0
        %v1509 = vadd.f32 0.0, %v1508
        %v1510 = vpop.f32.mrb[0].mxu0
        %1511 = vmatprep.mubr.f32.mxu0 0.0
        %1512 = vmatmul.mubr.f32.gmra.mrb[0].mxu0 %v550
        %v1513 = vpop.f32.mrb[0].mxu0
        %v1514 = vadd.f32 0.0, %v1513
        %v1515 = vpop.f32.mrb[0].mxu0
        %1516 = vmatprep.mubr.f32.mxu0 0.0
        %1517 = vmatmul.mubr.f32.gmra.mrb[0].mxu0 %v553
        %v1518 = vpop.f32.mrb[0].mxu0
        %v1519 = vadd.f32 0.0, %v1518
        %v1520 = vpop.f32.mrb[0].mxu0
        %1521 = vmatprep.mubr.f32.mxu0 0.0
        %1522 = vmatmul.mubr.f32.gmra.mrb[0].mxu0 %v556
        %v1523 = vpop.f32.mrb[0].mxu0
        %v1524 = vadd.f32 0.0, %v1523
        %v1525 = vpop.f32.mrb[0].mxu0
        %1526 = vmatprep.mubr.f32.mxu0 0.0
        %1527 = vmatmul.mubr.f32.gmra.mrb[0].mxu0 %v559
        %v1528 = vpop.f32.mrb[0].mxu0
        %v1529 = vadd.f32 0.0, %v1528
        %v1530 = vpop.f32.mrb[0].mxu0
        %1531 = vmatprep.mubr.f32.mxu0 0.0
        %1532 = vmatmul.mubr.f32.gmra.mrb[0].mxu0 %v562
        %v1533 = vpop.f32.mrb[0].mxu0
        %v1534 = vadd.f32 0.0, %v1533
        %v1535 = vpop.f32.mrb[0].mxu0
        %1536 = vdwg.mxu0
        %s1537 = scalar_lea.vmem %s5, 32
        %v1538 = vld [vmem:[%s1537] sm:$0xff]
        %v1539 = vld [vmem:[%s1537 + $0x8] sm:$0xff]
        %v1541 = vsel %vm348, %v1519, 0
        %v1544 = vsel %vm348, %v1524, 0
        %v1547 = vsel %vm348, %v1529, 0
        %v1550 = vsel %vm348, %v1534, 0
        %1552 = vmatprep.subr.mxu0 0.0
        %1553 = vmatpush1.msra.mxu0 %v1539
        %1554 = vmatprep.subr.mxu0 0.0
        %1555 = vmatpush1.msra.mxu0 0.0
        %1556 = vmatprep.subr.mxu0 0.0
        %1557 = vmatpush1.msra.mxu0 0.0
        %1558 = vmatprep.subr.mxu0 0.0
        %1559 = vmatpush1.msra.mxu0 0.0
        %1560 = vmatprep.subr.mxu0 0.0
        %1561 = vmatpush1.msra.mxu0 0.0
        %1562 = vmatprep.subr.mxu0 0.0
        %1563 = vmatpush1.msra.mxu0 0.0
        %1564 = vmatprep.subr.mxu0 0.0
        %1565 = vmatpush1.msra.mxu0 0.0
        %1566 = vmatprep.subr.mxu0 0.0
        %1567 = vmatpush1.msra.mxu0 0.0
        %1568 = vmatprep.subr.mxu0 0.0
        %1569 = vmatpush1.msra.mxu0 0.0
        %1570 = vmatprep.subr.mxu0 0.0
        %1571 = vmatpush1.msra.mxu0 0.0
        %1572 = vmatprep.subr.mxu0 0.0
        %1573 = vmatpush1.msra.mxu0 0.0
        %1574 = vmatprep.subr.mxu0 0.0
        %1575 = vmatpush1.msra.mxu0 0.0
        %1576 = vmatprep.subr.mxu0 0.0
        %1577 = vmatpush1.msra.mxu0 0.0
        %1578 = vmatprep.subr.mxu0 0.0
        %1579 = vmatpush1.msra.mxu0 0.0
        %1580 = vmatprep.subr.mxu0 0.0
        %1581 = vmatpush1.msra.mxu0 0.0
        %1582 = vmatprep.subr.mxu0 0.0
        %1583 = vmatpush1.msra.mxu0 0.0
        %1584 = vmatprep.subr.mxu0 0.0
        %1585 = vmatpush1.msra.mxu0 0.0
        %1586 = vmatprep.subr.mxu0 0.0
        %1587 = vmatpush1.msra.mxu0 0.0
        %1588 = vmatprep.subr.mxu0 0.0
        %1589 = vmatpush1.msra.mxu0 0.0
        %1590 = vmatprep.subr.mxu0 0.0
        %1591 = vmatpush1.msra.mxu0 0.0
        %1592 = vmatprep.subr.mxu0 0.0
        %1593 = vmatpush1.msra.mxu0 0.0
        %1594 = vmatprep.subr.mxu0 0.0
        %1595 = vmatpush1.msra.mxu0 0.0
        %1596 = vmatprep.subr.mxu0 0.0
        %1597 = vmatpush1.msra.mxu0 0.0
        %1598 = vmatprep.subr.mxu0 0.0
        %1599 = vmatpush1.msra.mxu0 0.0
        %1600 = vmatprep.subr.mxu0 0.0
        %1601 = vmatpush1.msra.mxu0 0.0
        %1602 = vmatprep.subr.mxu0 0.0
        %1603 = vmatpush1.msra.mxu0 0.0
        %1604 = vmatprep.subr.mxu0 0.0
        %1605 = vmatpush1.msra.mxu0 0.0
        %1606 = vmatprep.subr.mxu0 0.0
        %1607 = vmatpush1.msra.mxu0 0.0
        %1608 = vmatprep.subr.mxu0 0.0
        %1609 = vmatpush1.msra.mxu0 0.0
        %1610 = vmatprep.subr.mxu0 0.0
        %1611 = vmatpush1.msra.mxu0 0.0
        %1612 = vmatprep.subr.mxu0 0.0
        %1613 = vmatpush1.msra.mxu0 0.0
        %1614 = vmatprep.subr.mxu0 0.0
        %1615 = vmatpush1.msra.mxu0 0.0
        %1616 = vmatprep.mubr.f32.mxu0 0.0
        %1617 = vmatmul.mubr.f32.gmra.mrb[0].mxu0 %v1541
        %v1618 = vpop.f32.mrb[0].mxu0
        %v1619 = vadd.f32 0.0, %v1618
        %v1620 = vpop.f32.mrb[0].mxu0
        %1621 = vmatprep.mubr.f32.mxu0 0.0
        %1622 = vmatmul.mubr.f32.gmra.mrb[0].mxu0 %v1544
        %v1623 = vpop.f32.mrb[0].mxu0
        %v1624 = vadd.f32 0.0, %v1623
        %v1625 = vpop.f32.mrb[0].mxu0
        %1626 = vmatprep.mubr.f32.mxu0 0.0
        %1627 = vmatmul.mubr.f32.gmra.mrb[0].mxu0 %v1547
        %v1628 = vpop.f32.mrb[0].mxu0
        %v1629 = vadd.f32 0.0, %v1628
        %v1630 = vpop.f32.mrb[0].mxu0
        %1631 = vmatprep.mubr.f32.mxu0 0.0
        %1632 = vmatmul.mubr.f32.gmra.mrb[0].mxu0 %v1550
        %v1633 = vpop.f32.mrb[0].mxu0
        %v1634 = vadd.f32 0.0, %v1633
        %v1635 = vpop.f32.mrb[0].mxu0
        %1636 = vdwg.mxu0
        %v1638 = vsel %vm348, %v1499, 0
        %v1641 = vsel %vm348, %v1504, 0
        %v1644 = vsel %vm348, %v1509, 0
        %v1647 = vsel %vm348, %v1514, 0
        %1649 = vmatprep.subr.mxu0 0.0
        %1650 = vmatpush1.msra.mxu0 %v1538
        %1651 = vmatprep.subr.mxu0 0.0
        %1652 = vmatpush1.msra.mxu0 0.0
        %1653 = vmatprep.subr.mxu0 0.0
        %1654 = vmatpush1.msra.mxu0 0.0
        %1655 = vmatprep.subr.mxu0 0.0
        %1656 = vmatpush1.msra.mxu0 0.0
        %1657 = vmatprep.subr.mxu0 0.0
        %1658 = vmatpush1.msra.mxu0 0.0
        %1659 = vmatprep.subr.mxu0 0.0
        %1660 = vmatpush1.msra.mxu0 0.0
        %1661 = vmatprep.subr.mxu0 0.0
        %1662 = vmatpush1.msra.mxu0 0.0
        %1663 = vmatprep.subr.mxu0 0.0
        %1664 = vmatpush1.msra.mxu0 0.0
        %1665 = vmatprep.subr.mxu0 0.0
        %1666 = vmatpush1.msra.mxu0 0.0
        %1667 = vmatprep.subr.mxu0 0.0
        %1668 = vmatpush1.msra.mxu0 0.0
        %1669 = vmatprep.subr.mxu0 0.0
        %1670 = vmatpush1.msra.mxu0 0.0
        %1671 = vmatprep.subr.mxu0 0.0
        %1672 = vmatpush1.msra.mxu0 0.0
        %1673 = vmatprep.subr.mxu0 0.0
        %1674 = vmatpush1.msra.mxu0 0.0
        %1675 = vmatprep.subr.mxu0 0.0
        %1676 = vmatpush1.msra.mxu0 0.0
        %1677 = vmatprep.subr.mxu0 0.0
        %1678 = vmatpush1.msra.mxu0 0.0
        %1679 = vmatprep.subr.mxu0 0.0
        %1680 = vmatpush1.msra.mxu0 0.0
        %1681 = vmatprep.subr.mxu0 0.0
        %1682 = vmatpush1.msra.mxu0 0.0
        %1683 = vmatprep.subr.mxu0 0.0
        %1684 = vmatpush1.msra.mxu0 0.0
        %1685 = vmatprep.subr.mxu0 0.0
        %1686 = vmatpush1.msra.mxu0 0.0
        %1687 = vmatprep.subr.mxu0 0.0
        %1688 = vmatpush1.msra.mxu0 0.0
        %1689 = vmatprep.subr.mxu0 0.0
        %1690 = vmatpush1.msra.mxu0 0.0
        %1691 = vmatprep.subr.mxu0 0.0
        %1692 = vmatpush1.msra.mxu0 0.0
        %1693 = vmatprep.subr.mxu0 0.0
        %1694 = vmatpush1.msra.mxu0 0.0
        %1695 = vmatprep.subr.mxu0 0.0
        %1696 = vmatpush1.msra.mxu0 0.0
        %1697 = vmatprep.subr.mxu0 0.0
        %1698 = vmatpush1.msra.mxu0 0.0
        %1699 = vmatprep.subr.mxu0 0.0
        %1700 = vmatpush1.msra.mxu0 0.0
        %1701 = vmatprep.subr.mxu0 0.0
        %1702 = vmatpush1.msra.mxu0 0.0
        %1703 = vmatprep.subr.mxu0 0.0
        %1704 = vmatpush1.msra.mxu0 0.0
        %1705 = vmatprep.subr.mxu0 0.0
        %1706 = vmatpush1.msra.mxu0 0.0
        %1707 = vmatprep.subr.mxu0 0.0
        %1708 = vmatpush1.msra.mxu0 0.0
        %1709 = vmatprep.subr.mxu0 0.0
        %1710 = vmatpush1.msra.mxu0 0.0
        %1711 = vmatprep.subr.mxu0 0.0
        %1712 = vmatpush1.msra.mxu0 0.0
        %1713 = vmatprep.mubr.f32.mxu0 0.0
        %1714 = vmatmul.mubr.f32.gmra.mrb[0].mxu0 %v1638
        %v1715 = vpop.f32.mrb[0].mxu0
        %v1716 = vadd.f32 %v1619, %v1715
        %v1717 = vpop.f32.mrb[0].mxu0
        %1718 = vmatprep.mubr.f32.mxu0 0.0
        %1719 = vmatmul.mubr.f32.gmra.mrb[0].mxu0 %v1641
        %v1720 = vpop.f32.mrb[0].mxu0
        %v1721 = vadd.f32 %v1624, %v1720
        %v1722 = vpop.f32.mrb[0].mxu0
        %1723 = vmatprep.mubr.f32.mxu0 0.0
        %1724 = vmatmul.mubr.f32.gmra.mrb[0].mxu0 %v1644
        %v1725 = vpop.f32.mrb[0].mxu0
        %v1726 = vadd.f32 %v1629, %v1725
        %v1727 = vpop.f32.mrb[0].mxu0
        %1728 = vmatprep.mubr.f32.mxu0 0.0
        %1729 = vmatmul.mubr.f32.gmra.mrb[0].mxu0 %v1647
        %v1730 = vpop.f32.mrb[0].mxu0
        %v1731 = vadd.f32 %v1634, %v1730
        %v1732 = vpop.f32.mrb[0].mxu0
        %1733 = vdwg.mxu0
        %v1734 = vld [vmem:[%s484] sm:$0xff]
        %v1735 = vld [vmem:[%s484 + $0x8] sm:$0xff]
        %v1736 = vld [vmem:[%s484 + $0x10] sm:$0xff]
        %v1737 = vld [vmem:[%s484 + $0x18] sm:$0xff]
        %v1738 = vadd.f32 %v1716, %v1734
        %v1739 = vadd.f32 %v1721, %v1735
        %v1740 = vadd.f32 %v1726, %v1736
        %v1741 = vadd.f32 %v1731, %v1737
        %v1742 = vsub.f32 0.0, %v1738
        %v1743 = vsub.f32 0.0, %v1739
        %v1744 = vsub.f32 0.0, %v1740
        %v1745 = vsub.f32 0.0, %v1741
        %v1746 = vmul.f32 %v1742, 1.442695
        %v1747 = vpow.pop %v1746
        %v1748 = vmul.f32 %v1743, 1.442695
        %v1749 = vpow.pop %v1748
        %v1750 = vmul.f32 %v1744, 1.442695
        %v1751 = vpow.pop %v1750
        %v1752 = vmul.f32 %v1745, 1.442695
        %v1753 = vpow.pop %v1752
        %v1754 = vadd.f32 %v1747, 1.0
        %v1755 = vadd.f32 %v1749, 1.0
        %v1756 = vadd.f32 %v1751, 1.0
        %v1757 = vadd.f32 %v1753, 1.0
        %v1758 = vrcp.pop %v1754
        %v1759 = vrcp.pop %v1755
        %v1760 = vrcp.pop %v1756
        %v1761 = vrcp.pop %v1757
        %v1762 = vmax.f32 %v1738, 0.0
        %v1763 = vmax.f32 %v1739, 0.0
        %v1764 = vmax.f32 %v1740, 0.0
        %v1765 = vmax.f32 %v1741, 0.0
        %1770 = vrot.lane.b32.xlu0 %v1762, 120
        %v1771 = vpop.permute.xlu0 %1770
        %1772 = vrot.lane.b32.xlu0 %v1763, 120
        %v1773 = vpop.permute.xlu0 %1772
        %1774 = vrot.lane.b32.xlu0 %v1764, 120
        %v1775 = vpop.permute.xlu0 %1774
        %1776 = vrot.lane.b32.xlu0 %v1765, 120
        %v1777 = vpop.permute.xlu0 %1776
        %v1782 = vmul.f32 %v1758, %v1771
        %v1783 = vmul.f32 %v1759, %v1773
        %v1784 = vmul.f32 %v1760, %v1775
        %v1785 = vmul.f32 %v1761, %v1777
        %1786 = vmatprep.subr.mxu0 0.0
        %1787 = vmatpush1.msra.mxu0 %v1782
        %1788 = vmatprep.subr.mxu0 0.0
        %1789 = vmatpush1.msra.mxu0 %v1783
        %1790 = vmatprep.subr.mxu0 0.0
        %1791 = vmatpush1.msra.mxu0 %v1784
        %1792 = vmatprep.subr.mxu0 0.0
        %1793 = vmatpush1.msra.mxu0 %v1785
        %1794 = vmatprep.subr.mxu0 0.0
        %1795 = vmatpush1.msra.mxu0 0.0
        %1796 = vmatprep.subr.mxu0 0.0
        %1797 = vmatpush1.msra.mxu0 0.0
        %1798 = vmatprep.subr.mxu0 0.0
        %1799 = vmatpush1.msra.mxu0 0.0
        %1800 = vmatprep.subr.mxu0 0.0
        %1801 = vmatpush1.msra.mxu0 0.0
        %1802 = vmatprep.subr.mxu0 0.0
        %1803 = vmatpush1.msra.mxu0 0.0
        %1804 = vmatprep.subr.mxu0 0.0
        %1805 = vmatpush1.msra.mxu0 0.0
        %1806 = vmatprep.subr.mxu0 0.0
        %1807 = vmatpush1.msra.mxu0 0.0
        %1808 = vmatprep.subr.mxu0 0.0
        %1809 = vmatpush1.msra.mxu0 0.0
        %1810 = vmatprep.subr.mxu0 0.0
        %1811 = vmatpush1.msra.mxu0 0.0
        %1812 = vmatprep.subr.mxu0 0.0
        %1813 = vmatpush1.msra.mxu0 0.0
        %1814 = vmatprep.subr.mxu0 0.0
        %1815 = vmatpush1.msra.mxu0 0.0
        %1816 = vmatprep.subr.mxu0 0.0
        %1817 = vmatpush1.msra.mxu0 0.0
        %1818 = vmatprep.subr.mxu0 0.0
        %1819 = vmatpush1.msra.mxu0 0.0
        %1820 = vmatprep.subr.mxu0 0.0
        %1821 = vmatpush1.msra.mxu0 0.0
        %1822 = vmatprep.subr.mxu0 0.0
        %1823 = vmatpush1.msra.mxu0 0.0
        %1824 = vmatprep.subr.mxu0 0.0
        %1825 = vmatpush1.msra.mxu0 0.0
        %1826 = vmatprep.subr.mxu0 0.0
        %1827 = vmatpush1.msra.mxu0 0.0
        %1828 = vmatprep.subr.mxu0 0.0
        %1829 = vmatpush1.msra.mxu0 0.0
        %1830 = vmatprep.subr.mxu0 0.0
        %1831 = vmatpush1.msra.mxu0 0.0
        %1832 = vmatprep.subr.mxu0 0.0
        %1833 = vmatpush1.msra.mxu0 0.0
        %1834 = vmatprep.subr.mxu0 0.0
        %1835 = vmatpush1.msra.mxu0 0.0
        %1836 = vmatprep.subr.mxu0 0.0
        %1837 = vmatpush1.msra.mxu0 0.0
        %1838 = vmatprep.subr.mxu0 0.0
        %1839 = vmatpush1.msra.mxu0 0.0
        %1840 = vmatprep.subr.mxu0 0.0
        %1841 = vmatpush1.msra.mxu0 0.0
        %1842 = vmatprep.subr.mxu0 0.0
        %1843 = vmatpush1.msra.mxu0 0.0
        %1844 = vmatprep.subr.mxu0 0.0
        %1845 = vmatpush1.msra.mxu0 0.0
        %1846 = vmatprep.subr.mxu0 0.0
        %1847 = vmatpush1.msra.mxu0 0.0
        %1848 = vmatprep.subr.mxu0 0.0
        %1849 = vmatpush1.msra.mxu0 0.0
        %1850 = vmatprep.mubr.f32.mxu0 0.0
        %1851 = vmatmul.mubr.f32.gmra.mrb[0].mxu0 %v919
        %v1852 = vpop.f32.mrb[0].mxu0
        %v1853 = vadd.f32 0.0, %v1852
        %v1854 = vpop.f32.mrb[0].mxu0
        %1855 = vmatprep.mubr.f32.mxu0 0.0
        %1856 = vmatmul.mubr.f32.gmra.mrb[0].mxu0 %v922
        %v1857 = vpop.f32.mrb[0].mxu0
        %v1858 = vadd.f32 0.0, %v1857
        %v1859 = vpop.f32.mrb[0].mxu0
        %1860 = vdwg.mxu0
        %v1861 = vadd.f32 %v1430, %v1853
        %v1862 = vadd.f32 %v1431, %v1858
        %1863 = vmatprep.subr.mxu0 0.0
        %1864 = vmatpush1.msra.mxu0 %v1861
        %1865 = vmatprep.subr.mxu0 0.0
        %1866 = vmatpush1.msra.mxu0 %v1862
        %1867 = vmatprep.subr.mxu0 0.0
        %1868 = vmatpush1.msra.mxu0 0.0
        %1869 = vmatprep.subr.mxu0 0.0
        %1870 = vmatpush1.msra.mxu0 0.0
        %1871 = vmatprep.subr.mxu0 0.0
        %1872 = vmatpush1.msra.mxu0 0.0
        %1873 = vmatprep.subr.mxu0 0.0
        %1874 = vmatpush1.msra.mxu0 0.0
        %1875 = vmatprep.subr.mxu0 0.0
        %1876 = vmatpush1.msra.mxu0 0.0
        %1877 = vmatprep.subr.mxu0 0.0
        %1878 = vmatpush1.msra.mxu0 0.0
        %1879 = vmatprep.subr.mxu0 0.0
        %1880 = vmatpush1.msra.mxu0 0.0
        %1881 = vmatprep.subr.mxu0 0.0
        %1882 = vmatpush1.msra.mxu0 0.0
        %1883 = vmatprep.subr.mxu0 0.0
        %1884 = vmatpush1.msra.mxu0 0.0
        %1885 = vmatprep.subr.mxu0 0.0
        %1886 = vmatpush1.msra.mxu0 0.0
        %1887 = vmatprep.subr.mxu0 0.0
        %1888 = vmatpush1.msra.mxu0 0.0
        %1889 = vmatprep.subr.mxu0 0.0
        %1890 = vmatpush1.msra.mxu0 0.0
        %1891 = vmatprep.subr.mxu0 0.0
        %1892 = vmatpush1.msra.mxu0 0.0
        %1893 = vmatprep.subr.mxu0 0.0
        %1894 = vmatpush1.msra.mxu0 0.0
        %1895 = vmatprep.subr.mxu0 0.0
        %1896 = vmatpush1.msra.mxu0 0.0
        %1897 = vmatprep.subr.mxu0 0.0
        %1898 = vmatpush1.msra.mxu0 0.0
        %1899 = vmatprep.subr.mxu0 0.0
        %1900 = vmatpush1.msra.mxu0 0.0
        %1901 = vmatprep.subr.mxu0 0.0
        %1902 = vmatpush1.msra.mxu0 0.0
        %1903 = vmatprep.subr.mxu0 0.0
        %1904 = vmatpush1.msra.mxu0 0.0
        %1905 = vmatprep.subr.mxu0 0.0
        %1906 = vmatpush1.msra.mxu0 0.0
        %1907 = vmatprep.subr.mxu0 0.0
        %1908 = vmatpush1.msra.mxu0 0.0
        %1909 = vmatprep.subr.mxu0 0.0
        %1910 = vmatpush1.msra.mxu0 0.0
        %1911 = vmatprep.subr.mxu0 0.0
        %1912 = vmatpush1.msra.mxu0 0.0
        %1913 = vmatprep.subr.mxu0 0.0
        %1914 = vmatpush1.msra.mxu0 0.0
        %1915 = vmatprep.subr.mxu0 0.0
        %1916 = vmatpush1.msra.mxu0 0.0
        %1917 = vmatprep.subr.mxu0 0.0
        %1918 = vmatpush1.msra.mxu0 0.0
        %1919 = vmatprep.subr.mxu0 0.0
        %1920 = vmatpush1.msra.mxu0 0.0
        %1921 = vmatprep.subr.mxu0 0.0
        %1922 = vmatpush1.msra.mxu0 0.0
        %1923 = vmatprep.subr.mxu0 0.0
        %1924 = vmatpush1.msra.mxu0 0.0
        %1925 = vmatprep.subr.mxu0 0.0
        %1926 = vmatpush1.msra.mxu0 0.0
        %1927 = vmatprep.mubr.f32.mxu0 0.0
        %1928 = vmatmul.mubr.f32.gmra.mrb[0].mxu0 %v541
        %v1929 = vpop.f32.mrb[0].mxu0
        %v1930 = vadd.f32 0.0, %v1929
        %v1931 = vpop.f32.mrb[0].mxu0
        %1932 = vmatprep.mubr.f32.mxu0 0.0
        %1933 = vmatmul.mubr.f32.gmra.mrb[0].mxu0 %v544
        %v1934 = vpop.f32.mrb[0].mxu0
        %v1935 = vadd.f32 0.0, %v1934
        %v1936 = vpop.f32.mrb[0].mxu0
        %1937 = vmatprep.mubr.f32.mxu0 0.0
        %1938 = vmatmul.mubr.f32.gmra.mrb[0].mxu0 %v547
        %v1939 = vpop.f32.mrb[0].mxu0
        %v1940 = vadd.f32 0.0, %v1939
        %v1941 = vpop.f32.mrb[0].mxu0
        %1942 = vmatprep.mubr.f32.mxu0 0.0
        %1943 = vmatmul.mubr.f32.gmra.mrb[0].mxu0 %v550
        %v1944 = vpop.f32.mrb[0].mxu0
        %v1945 = vadd.f32 0.0, %v1944
        %v1946 = vpop.f32.mrb[0].mxu0
        %1947 = vmatprep.mubr.f32.mxu0 0.0
        %1948 = vmatmul.mubr.f32.gmra.mrb[0].mxu0 %v553
        %v1949 = vpop.f32.mrb[0].mxu0
        %v1950 = vadd.f32 0.0, %v1949
        %v1951 = vpop.f32.mrb[0].mxu0
        %1952 = vmatprep.mubr.f32.mxu0 0.0
        %1953 = vmatmul.mubr.f32.gmra.mrb[0].mxu0 %v556
        %v1954 = vpop.f32.mrb[0].mxu0
        %v1955 = vadd.f32 0.0, %v1954
        %v1956 = vpop.f32.mrb[0].mxu0
        %1957 = vmatprep.mubr.f32.mxu0 0.0
        %1958 = vmatmul.mubr.f32.gmra.mrb[0].mxu0 %v559
        %v1959 = vpop.f32.mrb[0].mxu0
        %v1960 = vadd.f32 0.0, %v1959
        %v1961 = vpop.f32.mrb[0].mxu0
        %1962 = vmatprep.mubr.f32.mxu0 0.0
        %1963 = vmatmul.mubr.f32.gmra.mrb[0].mxu0 %v562
        %v1964 = vpop.f32.mrb[0].mxu0
        %v1965 = vadd.f32 0.0, %v1964
        %v1966 = vpop.f32.mrb[0].mxu0
        %1967 = vdwg.mxu0
        %s1968 = scalar_lea.vmem %s5, 48
        %v1969 = vld [vmem:[%s1968] sm:$0xff]
        %v1970 = vld [vmem:[%s1968 + $0x8] sm:$0xff]
        %v1972 = vsel %vm348, %v1950, 0
        %v1975 = vsel %vm348, %v1955, 0
        %v1978 = vsel %vm348, %v1960, 0
        %v1981 = vsel %vm348, %v1965, 0
        %1983 = vmatprep.subr.mxu0 0.0
        %1984 = vmatpush1.msra.mxu0 %v1970
        %1985 = vmatprep.subr.mxu0 0.0
        %1986 = vmatpush1.msra.mxu0 0.0
        %1987 = vmatprep.subr.mxu0 0.0
        %1988 = vmatpush1.msra.mxu0 0.0
        %1989 = vmatprep.subr.mxu0 0.0
        %1990 = vmatpush1.msra.mxu0 0.0
        %1991 = vmatprep.subr.mxu0 0.0
        %1992 = vmatpush1.msra.mxu0 0.0
        %1993 = vmatprep.subr.mxu0 0.0
        %1994 = vmatpush1.msra.mxu0 0.0
        %1995 = vmatprep.subr.mxu0 0.0
        %1996 = vmatpush1.msra.mxu0 0.0
        %1997 = vmatprep.subr.mxu0 0.0
        %1998 = vmatpush1.msra.mxu0 0.0
        %1999 = vmatprep.subr.mxu0 0.0
        %2000 = vmatpush1.msra.mxu0 0.0
        %2001 = vmatprep.subr.mxu0 0.0
        %2002 = vmatpush1.msra.mxu0 0.0
        %2003 = vmatprep.subr.mxu0 0.0
        %2004 = vmatpush1.msra.mxu0 0.0
        %2005 = vmatprep.subr.mxu0 0.0
        %2006 = vmatpush1.msra.mxu0 0.0
        %2007 = vmatprep.subr.mxu0 0.0
        %2008 = vmatpush1.msra.mxu0 0.0
        %2009 = vmatprep.subr.mxu0 0.0
        %2010 = vmatpush1.msra.mxu0 0.0
        %2011 = vmatprep.subr.mxu0 0.0
        %2012 = vmatpush1.msra.mxu0 0.0
        %2013 = vmatprep.subr.mxu0 0.0
        %2014 = vmatpush1.msra.mxu0 0.0
        %2015 = vmatprep.subr.mxu0 0.0
        %2016 = vmatpush1.msra.mxu0 0.0
        %2017 = vmatprep.subr.mxu0 0.0
        %2018 = vmatpush1.msra.mxu0 0.0
        %2019 = vmatprep.subr.mxu0 0.0
        %2020 = vmatpush1.msra.mxu0 0.0
        %2021 = vmatprep.subr.mxu0 0.0
        %2022 = vmatpush1.msra.mxu0 0.0
        %2023 = vmatprep.subr.mxu0 0.0
        %2024 = vmatpush1.msra.mxu0 0.0
        %2025 = vmatprep.subr.mxu0 0.0
        %2026 = vmatpush1.msra.mxu0 0.0
        %2027 = vmatprep.subr.mxu0 0.0
        %2028 = vmatpush1.msra.mxu0 0.0
        %2029 = vmatprep.subr.mxu0 0.0
        %2030 = vmatpush1.msra.mxu0 0.0
        %2031 = vmatprep.subr.mxu0 0.0
        %2032 = vmatpush1.msra.mxu0 0.0
        %2033 = vmatprep.subr.mxu0 0.0
        %2034 = vmatpush1.msra.mxu0 0.0
        %2035 = vmatprep.subr.mxu0 0.0
        %2036 = vmatpush1.msra.mxu0 0.0
        %2037 = vmatprep.subr.mxu0 0.0
        %2038 = vmatpush1.msra.mxu0 0.0
        %2039 = vmatprep.subr.mxu0 0.0
        %2040 = vmatpush1.msra.mxu0 0.0
        %2041 = vmatprep.subr.mxu0 0.0
        %2042 = vmatpush1.msra.mxu0 0.0
        %2043 = vmatprep.subr.mxu0 0.0
        %2044 = vmatpush1.msra.mxu0 0.0
        %2045 = vmatprep.subr.mxu0 0.0
        %2046 = vmatpush1.msra.mxu0 0.0
        %2047 = vmatprep.mubr.f32.mxu0 0.0
        %2048 = vmatmul.mubr.f32.gmra.mrb[0].mxu0 %v1972
        %v2049 = vpop.f32.mrb[0].mxu0
        %v2050 = vadd.f32 0.0, %v2049
        %v2051 = vpop.f32.mrb[0].mxu0
        %2052 = vmatprep.mubr.f32.mxu0 0.0
        %2053 = vmatmul.mubr.f32.gmra.mrb[0].mxu0 %v1975
        %v2054 = vpop.f32.mrb[0].mxu0
        %v2055 = vadd.f32 0.0, %v2054
        %v2056 = vpop.f32.mrb[0].mxu0
        %2057 = vmatprep.mubr.f32.mxu0 0.0
        %2058 = vmatmul.mubr.f32.gmra.mrb[0].mxu0 %v1978
        %v2059 = vpop.f32.mrb[0].mxu0
        %v2060 = vadd.f32 0.0, %v2059
        %v2061 = vpop.f32.mrb[0].mxu0
        %2062 = vmatprep.mubr.f32.mxu0 0.0
        %2063 = vmatmul.mubr.f32.gmra.mrb[0].mxu0 %v1981
        %v2064 = vpop.f32.mrb[0].mxu0
        %v2065 = vadd.f32 0.0, %v2064
        %v2066 = vpop.f32.mrb[0].mxu0
        %2067 = vdwg.mxu0
        %v2069 = vsel %vm348, %v1930, 0
        %v2072 = vsel %vm348, %v1935, 0
        %v2075 = vsel %vm348, %v1940, 0
        %v2078 = vsel %vm348, %v1945, 0
        %2080 = vmatprep.subr.mxu0 0.0
        %2081 = vmatpush1.msra.mxu0 %v1969
        %2082 = vmatprep.subr.mxu0 0.0
        %2083 = vmatpush1.msra.mxu0 0.0
        %2084 = vmatprep.subr.mxu0 0.0
        %2085 = vmatpush1.msra.mxu0 0.0
        %2086 = vmatprep.subr.mxu0 0.0
        %2087 = vmatpush1.msra.mxu0 0.0
        %2088 = vmatprep.subr.mxu0 0.0
        %2089 = vmatpush1.msra.mxu0 0.0
        %2090 = vmatprep.subr.mxu0 0.0
        %2091 = vmatpush1.msra.mxu0 0.0
        %2092 = vmatprep.subr.mxu0 0.0
        %2093 = vmatpush1.msra.mxu0 0.0
        %2094 = vmatprep.subr.mxu0 0.0
        %2095 = vmatpush1.msra.mxu0 0.0
        %2096 = vmatprep.subr.mxu0 0.0
        %2097 = vmatpush1.msra.mxu0 0.0
        %2098 = vmatprep.subr.mxu0 0.0
        %2099 = vmatpush1.msra.mxu0 0.0
        %2100 = vmatprep.subr.mxu0 0.0
        %2101 = vmatpush1.msra.mxu0 0.0
        %2102 = vmatprep.subr.mxu0 0.0
        %2103 = vmatpush1.msra.mxu0 0.0
        %2104 = vmatprep.subr.mxu0 0.0
        %2105 = vmatpush1.msra.mxu0 0.0
        %2106 = vmatprep.subr.mxu0 0.0
        %2107 = vmatpush1.msra.mxu0 0.0
        %2108 = vmatprep.subr.mxu0 0.0
        %2109 = vmatpush1.msra.mxu0 0.0
        %2110 = vmatprep.subr.mxu0 0.0
        %2111 = vmatpush1.msra.mxu0 0.0
        %2112 = vmatprep.subr.mxu0 0.0
        %2113 = vmatpush1.msra.mxu0 0.0
        %2114 = vmatprep.subr.mxu0 0.0
        %2115 = vmatpush1.msra.mxu0 0.0
        %2116 = vmatprep.subr.mxu0 0.0
        %2117 = vmatpush1.msra.mxu0 0.0
        %2118 = vmatprep.subr.mxu0 0.0
        %2119 = vmatpush1.msra.mxu0 0.0
        %2120 = vmatprep.subr.mxu0 0.0
        %2121 = vmatpush1.msra.mxu0 0.0
        %2122 = vmatprep.subr.mxu0 0.0
        %2123 = vmatpush1.msra.mxu0 0.0
        %2124 = vmatprep.subr.mxu0 0.0
        %2125 = vmatpush1.msra.mxu0 0.0
        %2126 = vmatprep.subr.mxu0 0.0
        %2127 = vmatpush1.msra.mxu0 0.0
        %2128 = vmatprep.subr.mxu0 0.0
        %2129 = vmatpush1.msra.mxu0 0.0
        %2130 = vmatprep.subr.mxu0 0.0
        %2131 = vmatpush1.msra.mxu0 0.0
        %2132 = vmatprep.subr.mxu0 0.0
        %2133 = vmatpush1.msra.mxu0 0.0
        %2134 = vmatprep.subr.mxu0 0.0
        %2135 = vmatpush1.msra.mxu0 0.0
        %2136 = vmatprep.subr.mxu0 0.0
        %2137 = vmatpush1.msra.mxu0 0.0
        %2138 = vmatprep.subr.mxu0 0.0
        %2139 = vmatpush1.msra.mxu0 0.0
        %2140 = vmatprep.subr.mxu0 0.0
        %2141 = vmatpush1.msra.mxu0 0.0
        %2142 = vmatprep.subr.mxu0 0.0
        %2143 = vmatpush1.msra.mxu0 0.0
        %2144 = vmatprep.mubr.f32.mxu0 0.0
        %2145 = vmatmul.mubr.f32.gmra.mrb[0].mxu0 %v2069
        %v2146 = vpop.f32.mrb[0].mxu0
        %v2147 = vadd.f32 %v2050, %v2146
        %v2148 = vpop.f32.mrb[0].mxu0
        %2149 = vmatprep.mubr.f32.mxu0 0.0
        %2150 = vmatmul.mubr.f32.gmra.mrb[0].mxu0 %v2072
        %v2151 = vpop.f32.mrb[0].mxu0
        %v2152 = vadd.f32 %v2055, %v2151
        %v2153 = vpop.f32.mrb[0].mxu0
        %2154 = vmatprep.mubr.f32.mxu0 0.0
        %2155 = vmatmul.mubr.f32.gmra.mrb[0].mxu0 %v2075
        %v2156 = vpop.f32.mrb[0].mxu0
        %v2157 = vadd.f32 %v2060, %v2156
        %v2158 = vpop.f32.mrb[0].mxu0
        %2159 = vmatprep.mubr.f32.mxu0 0.0
        %2160 = vmatmul.mubr.f32.gmra.mrb[0].mxu0 %v2078
        %v2161 = vpop.f32.mrb[0].mxu0
        %v2162 = vadd.f32 %v2065, %v2161
        %v2163 = vpop.f32.mrb[0].mxu0
        %2164 = vdwg.mxu0
        %v2165 = vld [vmem:[%s501] sm:$0xff]
        %v2166 = vld [vmem:[%s501 + $0x8] sm:$0xff]
        %v2167 = vld [vmem:[%s501 + $0x10] sm:$0xff]
        %v2168 = vld [vmem:[%s501 + $0x18] sm:$0xff]
        %v2169 = vadd.f32 %v2147, %v2165
        %v2170 = vadd.f32 %v2152, %v2166
        %v2171 = vadd.f32 %v2157, %v2167
        %v2172 = vadd.f32 %v2162, %v2168
        %v2173 = vsub.f32 0.0, %v2169
        %v2174 = vsub.f32 0.0, %v2170
        %v2175 = vsub.f32 0.0, %v2171
        %v2176 = vsub.f32 0.0, %v2172
        %v2177 = vmul.f32 %v2173, 1.442695
        %v2178 = vpow.pop %v2177
        %v2179 = vmul.f32 %v2174, 1.442695
        %v2180 = vpow.pop %v2179
        %v2181 = vmul.f32 %v2175, 1.442695
        %v2182 = vpow.pop %v2181
        %v2183 = vmul.f32 %v2176, 1.442695
        %v2184 = vpow.pop %v2183
        %v2185 = vadd.f32 %v2178, 1.0
        %v2186 = vadd.f32 %v2180, 1.0
        %v2187 = vadd.f32 %v2182, 1.0
        %v2188 = vadd.f32 %v2184, 1.0
        %v2189 = vrcp.pop %v2185
        %v2190 = vrcp.pop %v2186
        %v2191 = vrcp.pop %v2187
        %v2192 = vrcp.pop %v2188
        %v2193 = vmax.f32 %v2169, 0.0
        %v2194 = vmax.f32 %v2170, 0.0
        %v2195 = vmax.f32 %v2171, 0.0
        %v2196 = vmax.f32 %v2172, 0.0
        %2201 = vrot.lane.b32.xlu0 %v2193, 120
        %v2202 = vpop.permute.xlu0 %2201
        %2203 = vrot.lane.b32.xlu0 %v2194, 120
        %v2204 = vpop.permute.xlu0 %2203
        %2205 = vrot.lane.b32.xlu0 %v2195, 120
        %v2206 = vpop.permute.xlu0 %2205
        %2207 = vrot.lane.b32.xlu0 %v2196, 120
        %v2208 = vpop.permute.xlu0 %2207
        %v2213 = vmul.f32 %v2189, %v2202
        %v2214 = vmul.f32 %v2190, %v2204
        %v2215 = vmul.f32 %v2191, %v2206
        %v2216 = vmul.f32 %v2192, %v2208
        %2217 = vmatprep.subr.mxu0 0.0
        %2218 = vmatpush1.msra.mxu0 %v2213
        %2219 = vmatprep.subr.mxu0 0.0
        %2220 = vmatpush1.msra.mxu0 %v2214
        %2221 = vmatprep.subr.mxu0 0.0
        %2222 = vmatpush1.msra.mxu0 %v2215
        %2223 = vmatprep.subr.mxu0 0.0
        %2224 = vmatpush1.msra.mxu0 %v2216
        %2225 = vmatprep.subr.mxu0 0.0
        %2226 = vmatpush1.msra.mxu0 0.0
        %2227 = vmatprep.subr.mxu0 0.0
        %2228 = vmatpush1.msra.mxu0 0.0
        %2229 = vmatprep.subr.mxu0 0.0
        %2230 = vmatpush1.msra.mxu0 0.0
        %2231 = vmatprep.subr.mxu0 0.0
        %2232 = vmatpush1.msra.mxu0 0.0
        %2233 = vmatprep.subr.mxu0 0.0
        %2234 = vmatpush1.msra.mxu0 0.0
        %2235 = vmatprep.subr.mxu0 0.0
        %2236 = vmatpush1.msra.mxu0 0.0
        %2237 = vmatprep.subr.mxu0 0.0
        %2238 = vmatpush1.msra.mxu0 0.0
        %2239 = vmatprep.subr.mxu0 0.0
        %2240 = vmatpush1.msra.mxu0 0.0
        %2241 = vmatprep.subr.mxu0 0.0
        %2242 = vmatpush1.msra.mxu0 0.0
        %2243 = vmatprep.subr.mxu0 0.0
        %2244 = vmatpush1.msra.mxu0 0.0
        %2245 = vmatprep.subr.mxu0 0.0
        %2246 = vmatpush1.msra.mxu0 0.0
        %2247 = vmatprep.subr.mxu0 0.0
        %2248 = vmatpush1.msra.mxu0 0.0
        %2249 = vmatprep.subr.mxu0 0.0
        %2250 = vmatpush1.msra.mxu0 0.0
        %2251 = vmatprep.subr.mxu0 0.0
        %2252 = vmatpush1.msra.mxu0 0.0
        %2253 = vmatprep.subr.mxu0 0.0
        %2254 = vmatpush1.msra.mxu0 0.0
        %2255 = vmatprep.subr.mxu0 0.0
        %2256 = vmatpush1.msra.mxu0 0.0
        %2257 = vmatprep.subr.mxu0 0.0
        %2258 = vmatpush1.msra.mxu0 0.0
        %2259 = vmatprep.subr.mxu0 0.0
        %2260 = vmatpush1.msra.mxu0 0.0
        %2261 = vmatprep.subr.mxu0 0.0
        %2262 = vmatpush1.msra.mxu0 0.0
        %2263 = vmatprep.subr.mxu0 0.0
        %2264 = vmatpush1.msra.mxu0 0.0
        %2265 = vmatprep.subr.mxu0 0.0
        %2266 = vmatpush1.msra.mxu0 0.0
        %2267 = vmatprep.subr.mxu0 0.0
        %2268 = vmatpush1.msra.mxu0 0.0
        %2269 = vmatprep.subr.mxu0 0.0
        %2270 = vmatpush1.msra.mxu0 0.0
        %2271 = vmatprep.subr.mxu0 0.0
        %2272 = vmatpush1.msra.mxu0 0.0
        %2273 = vmatprep.subr.mxu0 0.0
        %2274 = vmatpush1.msra.mxu0 0.0
        %2275 = vmatprep.subr.mxu0 0.0
        %2276 = vmatpush1.msra.mxu0 0.0
        %2277 = vmatprep.subr.mxu0 0.0
        %2278 = vmatpush1.msra.mxu0 0.0
        %2279 = vmatprep.subr.mxu0 0.0
        %2280 = vmatpush1.msra.mxu0 0.0
        %2281 = vmatprep.mubr.f32.mxu0 0.0
        %2282 = vmatmul.mubr.f32.gmra.mrb[0].mxu0 %v919
        %v2283 = vpop.f32.mrb[0].mxu0
        %v2284 = vadd.f32 0.0, %v2283
        %v2285 = vpop.f32.mrb[0].mxu0
        %2286 = vmatprep.mubr.f32.mxu0 0.0
        %2287 = vmatmul.mubr.f32.gmra.mrb[0].mxu0 %v922
        %v2288 = vpop.f32.mrb[0].mxu0
        %v2289 = vadd.f32 0.0, %v2288
        %v2290 = vpop.f32.mrb[0].mxu0
        %2291 = vdwg.mxu0
        %v2292 = vadd.f32 %v1861, %v2284
        %v2293 = vadd.f32 %v1862, %v2289
        %2294 = vmatprep.subr.mxu0 0.0
        %2295 = vmatpush1.msra.mxu0 %v2292
        %2296 = vmatprep.subr.mxu0 0.0
        %2297 = vmatpush1.msra.mxu0 %v2293
        %2298 = vmatprep.subr.mxu0 0.0
        %2299 = vmatpush1.msra.mxu0 0.0
        %2300 = vmatprep.subr.mxu0 0.0
        %2301 = vmatpush1.msra.mxu0 0.0
        %2302 = vmatprep.subr.mxu0 0.0
        %2303 = vmatpush1.msra.mxu0 0.0
        %2304 = vmatprep.subr.mxu0 0.0
        %2305 = vmatpush1.msra.mxu0 0.0
        %2306 = vmatprep.subr.mxu0 0.0
        %2307 = vmatpush1.msra.mxu0 0.0
        %2308 = vmatprep.subr.mxu0 0.0
        %2309 = vmatpush1.msra.mxu0 0.0
        %2310 = vmatprep.subr.mxu0 0.0
        %2311 = vmatpush1.msra.mxu0 0.0
        %2312 = vmatprep.subr.mxu0 0.0
        %2313 = vmatpush1.msra.mxu0 0.0
        %2314 = vmatprep.subr.mxu0 0.0
        %2315 = vmatpush1.msra.mxu0 0.0
        %2316 = vmatprep.subr.mxu0 0.0
        %2317 = vmatpush1.msra.mxu0 0.0
        %2318 = vmatprep.subr.mxu0 0.0
        %2319 = vmatpush1.msra.mxu0 0.0
        %2320 = vmatprep.subr.mxu0 0.0
        %2321 = vmatpush1.msra.mxu0 0.0
        %2322 = vmatprep.subr.mxu0 0.0
        %2323 = vmatpush1.msra.mxu0 0.0
        %2324 = vmatprep.subr.mxu0 0.0
        %2325 = vmatpush1.msra.mxu0 0.0
        %2326 = vmatprep.subr.mxu0 0.0
        %2327 = vmatpush1.msra.mxu0 0.0
        %2328 = vmatprep.subr.mxu0 0.0
        %2329 = vmatpush1.msra.mxu0 0.0
        %2330 = vmatprep.subr.mxu0 0.0
        %2331 = vmatpush1.msra.mxu0 0.0
        %2332 = vmatprep.subr.mxu0 0.0
        %2333 = vmatpush1.msra.mxu0 0.0
        %2334 = vmatprep.subr.mxu0 0.0
        %2335 = vmatpush1.msra.mxu0 0.0
        %2336 = vmatprep.subr.mxu0 0.0
        %2337 = vmatpush1.msra.mxu0 0.0
        %2338 = vmatprep.subr.mxu0 0.0
        %2339 = vmatpush1.msra.mxu0 0.0
        %2340 = vmatprep.subr.mxu0 0.0
        %2341 = vmatpush1.msra.mxu0 0.0
        %2342 = vmatprep.subr.mxu0 0.0
        %2343 = vmatpush1.msra.mxu0 0.0
        %2344 = vmatprep.subr.mxu0 0.0
        %2345 = vmatpush1.msra.mxu0 0.0
        %2346 = vmatprep.subr.mxu0 0.0
        %2347 = vmatpush1.msra.mxu0 0.0
        %2348 = vmatprep.subr.mxu0 0.0
        %2349 = vmatpush1.msra.mxu0 0.0
        %2350 = vmatprep.subr.mxu0 0.0
        %2351 = vmatpush1.msra.mxu0 0.0
        %2352 = vmatprep.subr.mxu0 0.0
        %2353 = vmatpush1.msra.mxu0 0.0
        %2354 = vmatprep.subr.mxu0 0.0
        %2355 = vmatpush1.msra.mxu0 0.0
        %2356 = vmatprep.subr.mxu0 0.0
        %2357 = vmatpush1.msra.mxu0 0.0
        %2358 = vmatprep.mubr.f32.mxu0 0.0
        %2359 = vmatmul.mubr.f32.gmra.mrb[0].mxu0 %v541
        %v2360 = vpop.f32.mrb[0].mxu0
        %v2361 = vadd.f32 0.0, %v2360
        %v2362 = vpop.f32.mrb[0].mxu0
        %2363 = vmatprep.mubr.f32.mxu0 0.0
        %2364 = vmatmul.mubr.f32.gmra.mrb[0].mxu0 %v544
        %v2365 = vpop.f32.mrb[0].mxu0
        %v2366 = vadd.f32 0.0, %v2365
        %v2367 = vpop.f32.mrb[0].mxu0
        %2368 = vmatprep.mubr.f32.mxu0 0.0
        %2369 = vmatmul.mubr.f32.gmra.mrb[0].mxu0 %v547
        %v2370 = vpop.f32.mrb[0].mxu0
        %v2371 = vadd.f32 0.0, %v2370
        %v2372 = vpop.f32.mrb[0].mxu0
        %2373 = vmatprep.mubr.f32.mxu0 0.0
        %2374 = vmatmul.mubr.f32.gmra.mrb[0].mxu0 %v550
        %v2375 = vpop.f32.mrb[0].mxu0
        %v2376 = vadd.f32 0.0, %v2375
        %v2377 = vpop.f32.mrb[0].mxu0
        %2378 = vmatprep.mubr.f32.mxu0 0.0
        %2379 = vmatmul.mubr.f32.gmra.mrb[0].mxu0 %v553
        %v2380 = vpop.f32.mrb[0].mxu0
        %v2381 = vadd.f32 0.0, %v2380
        %v2382 = vpop.f32.mrb[0].mxu0
        %2383 = vmatprep.mubr.f32.mxu0 0.0
        %2384 = vmatmul.mubr.f32.gmra.mrb[0].mxu0 %v556
        %v2385 = vpop.f32.mrb[0].mxu0
        %v2386 = vadd.f32 0.0, %v2385
        %v2387 = vpop.f32.mrb[0].mxu0
        %2388 = vmatprep.mubr.f32.mxu0 0.0
        %2389 = vmatmul.mubr.f32.gmra.mrb[0].mxu0 %v559
        %v2390 = vpop.f32.mrb[0].mxu0
        %v2391 = vadd.f32 0.0, %v2390
        %v2392 = vpop.f32.mrb[0].mxu0
        %2393 = vmatprep.mubr.f32.mxu0 0.0
        %2394 = vmatmul.mubr.f32.gmra.mrb[0].mxu0 %v562
        %v2395 = vpop.f32.mrb[0].mxu0
        %v2396 = vadd.f32 0.0, %v2395
        %v2397 = vpop.f32.mrb[0].mxu0
        %2398 = vdwg.mxu0
        %s2399 = scalar_lea.vmem %s5, 64
        %v2400 = vld [vmem:[%s2399] sm:$0xff]
        %v2401 = vld [vmem:[%s2399 + $0x8] sm:$0xff]
        %v2403 = vsel %vm348, %v2381, 0
        %v2406 = vsel %vm348, %v2386, 0
        %v2409 = vsel %vm348, %v2391, 0
        %v2412 = vsel %vm348, %v2396, 0
        %2414 = vmatprep.subr.mxu0 0.0
        %2415 = vmatpush1.msra.mxu0 %v2401
        %2416 = vmatprep.subr.mxu0 0.0
        %2417 = vmatpush1.msra.mxu0 0.0
        %2418 = vmatprep.subr.mxu0 0.0
        %2419 = vmatpush1.msra.mxu0 0.0
        %2420 = vmatprep.subr.mxu0 0.0
        %2421 = vmatpush1.msra.mxu0 0.0
        %2422 = vmatprep.subr.mxu0 0.0
        %2423 = vmatpush1.msra.mxu0 0.0
        %2424 = vmatprep.subr.mxu0 0.0
        %2425 = vmatpush1.msra.mxu0 0.0
        %2426 = vmatprep.subr.mxu0 0.0
        %2427 = vmatpush1.msra.mxu0 0.0
        %2428 = vmatprep.subr.mxu0 0.0
        %2429 = vmatpush1.msra.mxu0 0.0
        %2430 = vmatprep.subr.mxu0 0.0
        %2431 = vmatpush1.msra.mxu0 0.0
        %2432 = vmatprep.subr.mxu0 0.0
        %2433 = vmatpush1.msra.mxu0 0.0
        %2434 = vmatprep.subr.mxu0 0.0
        %2435 = vmatpush1.msra.mxu0 0.0
        %2436 = vmatprep.subr.mxu0 0.0
        %2437 = vmatpush1.msra.mxu0 0.0
        %2438 = vmatprep.subr.mxu0 0.0
        %2439 = vmatpush1.msra.mxu0 0.0
        %2440 = vmatprep.subr.mxu0 0.0
        %2441 = vmatpush1.msra.mxu0 0.0
        %2442 = vmatprep.subr.mxu0 0.0
        %2443 = vmatpush1.msra.mxu0 0.0
        %2444 = vmatprep.subr.mxu0 0.0
        %2445 = vmatpush1.msra.mxu0 0.0
        %2446 = vmatprep.subr.mxu0 0.0
        %2447 = vmatpush1.msra.mxu0 0.0
        %2448 = vmatprep.subr.mxu0 0.0
        %2449 = vmatpush1.msra.mxu0 0.0
        %2450 = vmatprep.subr.mxu0 0.0
        %2451 = vmatpush1.msra.mxu0 0.0
        %2452 = vmatprep.subr.mxu0 0.0
        %2453 = vmatpush1.msra.mxu0 0.0
        %2454 = vmatprep.subr.mxu0 0.0
        %2455 = vmatpush1.msra.mxu0 0.0
        %2456 = vmatprep.subr.mxu0 0.0
        %2457 = vmatpush1.msra.mxu0 0.0
        %2458 = vmatprep.subr.mxu0 0.0
        %2459 = vmatpush1.msra.mxu0 0.0
        %2460 = vmatprep.subr.mxu0 0.0
        %2461 = vmatpush1.msra.mxu0 0.0
        %2462 = vmatprep.subr.mxu0 0.0
        %2463 = vmatpush1.msra.mxu0 0.0
        %2464 = vmatprep.subr.mxu0 0.0
        %2465 = vmatpush1.msra.mxu0 0.0
        %2466 = vmatprep.subr.mxu0 0.0
        %2467 = vmatpush1.msra.mxu0 0.0
        %2468 = vmatprep.subr.mxu0 0.0
        %2469 = vmatpush1.msra.mxu0 0.0
        %2470 = vmatprep.subr.mxu0 0.0
        %2471 = vmatpush1.msra.mxu0 0.0
        %2472 = vmatprep.subr.mxu0 0.0
        %2473 = vmatpush1.msra.mxu0 0.0
        %2474 = vmatprep.subr.mxu0 0.0
        %2475 = vmatpush1.msra.mxu0 0.0
        %2476 = vmatprep.subr.mxu0 0.0
        %2477 = vmatpush1.msra.mxu0 0.0
        %2478 = vmatprep.mubr.f32.mxu0 0.0
        %2479 = vmatmul.mubr.f32.gmra.mrb[0].mxu0 %v2403
        %v2480 = vpop.f32.mrb[0].mxu0
        %v2481 = vadd.f32 0.0, %v2480
        %v2482 = vpop.f32.mrb[0].mxu0
        %2483 = vmatprep.mubr.f32.mxu0 0.0
        %2484 = vmatmul.mubr.f32.gmra.mrb[0].mxu0 %v2406
        %v2485 = vpop.f32.mrb[0].mxu0
        %v2486 = vadd.f32 0.0, %v2485
        %v2487 = vpop.f32.mrb[0].mxu0
        %2488 = vmatprep.mubr.f32.mxu0 0.0
        %2489 = vmatmul.mubr.f32.gmra.mrb[0].mxu0 %v2409
        %v2490 = vpop.f32.mrb[0].mxu0
        %v2491 = vadd.f32 0.0, %v2490
        %v2492 = vpop.f32.mrb[0].mxu0
        %2493 = vmatprep.mubr.f32.mxu0 0.0
        %2494 = vmatmul.mubr.f32.gmra.mrb[0].mxu0 %v2412
        %v2495 = vpop.f32.mrb[0].mxu0
        %v2496 = vadd.f32 0.0, %v2495
        %v2497 = vpop.f32.mrb[0].mxu0
        %2498 = vdwg.mxu0
        %v2500 = vsel %vm348, %v2361, 0
        %v2503 = vsel %vm348, %v2366, 0
        %v2506 = vsel %vm348, %v2371, 0
        %v2509 = vsel %vm348, %v2376, 0
        %2511 = vmatprep.subr.mxu0 0.0
        %2512 = vmatpush1.msra.mxu0 %v2400
        %2513 = vmatprep.subr.mxu0 0.0
        %2514 = vmatpush1.msra.mxu0 0.0
        %2515 = vmatprep.subr.mxu0 0.0
        %2516 = vmatpush1.msra.mxu0 0.0
        %2517 = vmatprep.subr.mxu0 0.0
        %2518 = vmatpush1.msra.mxu0 0.0
        %2519 = vmatprep.subr.mxu0 0.0
        %2520 = vmatpush1.msra.mxu0 0.0
        %2521 = vmatprep.subr.mxu0 0.0
        %2522 = vmatpush1.msra.mxu0 0.0
        %2523 = vmatprep.subr.mxu0 0.0
        %2524 = vmatpush1.msra.mxu0 0.0
        %2525 = vmatprep.subr.mxu0 0.0
        %2526 = vmatpush1.msra.mxu0 0.0
        %2527 = vmatprep.subr.mxu0 0.0
        %2528 = vmatpush1.msra.mxu0 0.0
        %2529 = vmatprep.subr.mxu0 0.0
        %2530 = vmatpush1.msra.mxu0 0.0
        %2531 = vmatprep.subr.mxu0 0.0
        %2532 = vmatpush1.msra.mxu0 0.0
        %2533 = vmatprep.subr.mxu0 0.0
        %2534 = vmatpush1.msra.mxu0 0.0
        %2535 = vmatprep.subr.mxu0 0.0
        %2536 = vmatpush1.msra.mxu0 0.0
        %2537 = vmatprep.subr.mxu0 0.0
        %2538 = vmatpush1.msra.mxu0 0.0
        %2539 = vmatprep.subr.mxu0 0.0
        %2540 = vmatpush1.msra.mxu0 0.0
        %2541 = vmatprep.subr.mxu0 0.0
        %2542 = vmatpush1.msra.mxu0 0.0
        %2543 = vmatprep.subr.mxu0 0.0
        %2544 = vmatpush1.msra.mxu0 0.0
        %2545 = vmatprep.subr.mxu0 0.0
        %2546 = vmatpush1.msra.mxu0 0.0
        %2547 = vmatprep.subr.mxu0 0.0
        %2548 = vmatpush1.msra.mxu0 0.0
        %2549 = vmatprep.subr.mxu0 0.0
        %2550 = vmatpush1.msra.mxu0 0.0
        %2551 = vmatprep.subr.mxu0 0.0
        %2552 = vmatpush1.msra.mxu0 0.0
        %2553 = vmatprep.subr.mxu0 0.0
        %2554 = vmatpush1.msra.mxu0 0.0
        %2555 = vmatprep.subr.mxu0 0.0
        %2556 = vmatpush1.msra.mxu0 0.0
        %2557 = vmatprep.subr.mxu0 0.0
        %2558 = vmatpush1.msra.mxu0 0.0
        %2559 = vmatprep.subr.mxu0 0.0
        %2560 = vmatpush1.msra.mxu0 0.0
        %2561 = vmatprep.subr.mxu0 0.0
        %2562 = vmatpush1.msra.mxu0 0.0
        %2563 = vmatprep.subr.mxu0 0.0
        %2564 = vmatpush1.msra.mxu0 0.0
        %2565 = vmatprep.subr.mxu0 0.0
        %2566 = vmatpush1.msra.mxu0 0.0
        %2567 = vmatprep.subr.mxu0 0.0
        %2568 = vmatpush1.msra.mxu0 0.0
        %2569 = vmatprep.subr.mxu0 0.0
        %2570 = vmatpush1.msra.mxu0 0.0
        %2571 = vmatprep.subr.mxu0 0.0
        %2572 = vmatpush1.msra.mxu0 0.0
        %2573 = vmatprep.subr.mxu0 0.0
        %2574 = vmatpush1.msra.mxu0 0.0
        %2575 = vmatprep.mubr.f32.mxu0 0.0
        %2576 = vmatmul.mubr.f32.gmra.mrb[0].mxu0 %v2500
        %v2577 = vpop.f32.mrb[0].mxu0
        %v2578 = vadd.f32 %v2481, %v2577
        %v2579 = vpop.f32.mrb[0].mxu0
        %2580 = vmatprep.mubr.f32.mxu0 0.0
        %2581 = vmatmul.mubr.f32.gmra.mrb[0].mxu0 %v2503
        %v2582 = vpop.f32.mrb[0].mxu0
        %v2583 = vadd.f32 %v2486, %v2582
        %v2584 = vpop.f32.mrb[0].mxu0
        %2585 = vmatprep.mubr.f32.mxu0 0.0
        %2586 = vmatmul.mubr.f32.gmra.mrb[0].mxu0 %v2506
        %v2587 = vpop.f32.mrb[0].mxu0
        %v2588 = vadd.f32 %v2491, %v2587
        %v2589 = vpop.f32.mrb[0].mxu0
        %2590 = vmatprep.mubr.f32.mxu0 0.0
        %2591 = vmatmul.mubr.f32.gmra.mrb[0].mxu0 %v2509
        %v2592 = vpop.f32.mrb[0].mxu0
        %v2593 = vadd.f32 %v2496, %v2592
        %v2594 = vpop.f32.mrb[0].mxu0
        %2595 = vdwg.mxu0
        %v2596 = vld [vmem:[%s518] sm:$0xff]
        %v2597 = vld [vmem:[%s518 + $0x8] sm:$0xff]
        %v2598 = vld [vmem:[%s518 + $0x10] sm:$0xff]
        %v2599 = vld [vmem:[%s518 + $0x18] sm:$0xff]
        %v2600 = vadd.f32 %v2578, %v2596
        %v2601 = vadd.f32 %v2583, %v2597
        %v2602 = vadd.f32 %v2588, %v2598
        %v2603 = vadd.f32 %v2593, %v2599
        %v2604 = vsub.f32 0.0, %v2600
        %v2605 = vsub.f32 0.0, %v2601
        %v2606 = vsub.f32 0.0, %v2602
        %v2607 = vsub.f32 0.0, %v2603
        %v2608 = vmul.f32 %v2604, 1.442695
        %v2609 = vpow.pop %v2608
        %v2610 = vmul.f32 %v2605, 1.442695
        %v2611 = vpow.pop %v2610
        %v2612 = vmul.f32 %v2606, 1.442695
        %v2613 = vpow.pop %v2612
        %v2614 = vmul.f32 %v2607, 1.442695
        %v2615 = vpow.pop %v2614
        %v2616 = vadd.f32 %v2609, 1.0
        %v2617 = vadd.f32 %v2611, 1.0
        %v2618 = vadd.f32 %v2613, 1.0
        %v2619 = vadd.f32 %v2615, 1.0
        %v2620 = vrcp.pop %v2616
        %v2621 = vrcp.pop %v2617
        %v2622 = vrcp.pop %v2618
        %v2623 = vrcp.pop %v2619
        %v2624 = vmax.f32 %v2600, 0.0
        %v2625 = vmax.f32 %v2601, 0.0
        %v2626 = vmax.f32 %v2602, 0.0
        %v2627 = vmax.f32 %v2603, 0.0
        %2632 = vrot.lane.b32.xlu0 %v2624, 120
        %v2633 = vpop.permute.xlu0 %2632
        %2634 = vrot.lane.b32.xlu0 %v2625, 120
        %v2635 = vpop.permute.xlu0 %2634
        %2636 = vrot.lane.b32.xlu0 %v2626, 120
        %v2637 = vpop.permute.xlu0 %2636
        %2638 = vrot.lane.b32.xlu0 %v2627, 120
        %v2639 = vpop.permute.xlu0 %2638
        %v2644 = vmul.f32 %v2620, %v2633
        %v2645 = vmul.f32 %v2621, %v2635
        %v2646 = vmul.f32 %v2622, %v2637
        %v2647 = vmul.f32 %v2623, %v2639
        %2648 = vmatprep.subr.mxu0 0.0
        %2649 = vmatpush1.msra.mxu0 %v2644
        %2650 = vmatprep.subr.mxu0 0.0
        %2651 = vmatpush1.msra.mxu0 %v2645
        %2652 = vmatprep.subr.mxu0 0.0
        %2653 = vmatpush1.msra.mxu0 %v2646
        %2654 = vmatprep.subr.mxu0 0.0
        %2655 = vmatpush1.msra.mxu0 %v2647
        %2656 = vmatprep.subr.mxu0 0.0
        %2657 = vmatpush1.msra.mxu0 0.0
        %2658 = vmatprep.subr.mxu0 0.0
        %2659 = vmatpush1.msra.mxu0 0.0
        %2660 = vmatprep.subr.mxu0 0.0
        %2661 = vmatpush1.msra.mxu0 0.0
        %2662 = vmatprep.subr.mxu0 0.0
        %2663 = vmatpush1.msra.mxu0 0.0
        %2664 = vmatprep.subr.mxu0 0.0
        %2665 = vmatpush1.msra.mxu0 0.0
        %2666 = vmatprep.subr.mxu0 0.0
        %2667 = vmatpush1.msra.mxu0 0.0
        %2668 = vmatprep.subr.mxu0 0.0
        %2669 = vmatpush1.msra.mxu0 0.0
        %2670 = vmatprep.subr.mxu0 0.0
        %2671 = vmatpush1.msra.mxu0 0.0
        %2672 = vmatprep.subr.mxu0 0.0
        %2673 = vmatpush1.msra.mxu0 0.0
        %2674 = vmatprep.subr.mxu0 0.0
        %2675 = vmatpush1.msra.mxu0 0.0
        %2676 = vmatprep.subr.mxu0 0.0
        %2677 = vmatpush1.msra.mxu0 0.0
        %2678 = vmatprep.subr.mxu0 0.0
        %2679 = vmatpush1.msra.mxu0 0.0
        %2680 = vmatprep.subr.mxu0 0.0
        %2681 = vmatpush1.msra.mxu0 0.0
        %2682 = vmatprep.subr.mxu0 0.0
        %2683 = vmatpush1.msra.mxu0 0.0
        %2684 = vmatprep.subr.mxu0 0.0
        %2685 = vmatpush1.msra.mxu0 0.0
        %2686 = vmatprep.subr.mxu0 0.0
        %2687 = vmatpush1.msra.mxu0 0.0
        %2688 = vmatprep.subr.mxu0 0.0
        %2689 = vmatpush1.msra.mxu0 0.0
        %2690 = vmatprep.subr.mxu0 0.0
        %2691 = vmatpush1.msra.mxu0 0.0
        %2692 = vmatprep.subr.mxu0 0.0
        %2693 = vmatpush1.msra.mxu0 0.0
        %2694 = vmatprep.subr.mxu0 0.0
        %2695 = vmatpush1.msra.mxu0 0.0
        %2696 = vmatprep.subr.mxu0 0.0
        %2697 = vmatpush1.msra.mxu0 0.0
        %2698 = vmatprep.subr.mxu0 0.0
        %2699 = vmatpush1.msra.mxu0 0.0
        %2700 = vmatprep.subr.mxu0 0.0
        %2701 = vmatpush1.msra.mxu0 0.0
        %2702 = vmatprep.subr.mxu0 0.0
        %2703 = vmatpush1.msra.mxu0 0.0
        %2704 = vmatprep.subr.mxu0 0.0
        %2705 = vmatpush1.msra.mxu0 0.0
        %2706 = vmatprep.subr.mxu0 0.0
        %2707 = vmatpush1.msra.mxu0 0.0
        %2708 = vmatprep.subr.mxu0 0.0
        %2709 = vmatpush1.msra.mxu0 0.0
        %2710 = vmatprep.subr.mxu0 0.0
        %2711 = vmatpush1.msra.mxu0 0.0
        %2712 = vmatprep.mubr.f32.mxu0 0.0
        %2713 = vmatmul.mubr.f32.gmra.mrb[0].mxu0 %v919
        %v2714 = vpop.f32.mrb[0].mxu0
        %v2715 = vadd.f32 0.0, %v2714
        %v2716 = vpop.f32.mrb[0].mxu0
        %2717 = vmatprep.mubr.f32.mxu0 0.0
        %2718 = vmatmul.mubr.f32.gmra.mrb[0].mxu0 %v922
        %v2719 = vpop.f32.mrb[0].mxu0
        %v2720 = vadd.f32 0.0, %v2719
        %v2721 = vpop.f32.mrb[0].mxu0
        %2722 = vdwg.mxu0
        %v2723 = vadd.f32 %v2292, %v2715
        %v2724 = vadd.f32 %v2293, %v2720
        %2725 = vmatprep.subr.mxu0 0.0
        %2726 = vmatpush1.msra.mxu0 %v2723
        %2727 = vmatprep.subr.mxu0 0.0
        %2728 = vmatpush1.msra.mxu0 %v2724
        %2729 = vmatprep.subr.mxu0 0.0
        %2730 = vmatpush1.msra.mxu0 0.0
        %2731 = vmatprep.subr.mxu0 0.0
        %2732 = vmatpush1.msra.mxu0 0.0
        %2733 = vmatprep.subr.mxu0 0.0
        %2734 = vmatpush1.msra.mxu0 0.0
        %2735 = vmatprep.subr.mxu0 0.0
        %2736 = vmatpush1.msra.mxu0 0.0
        %2737 = vmatprep.subr.mxu0 0.0
        %2738 = vmatpush1.msra.mxu0 0.0
        %2739 = vmatprep.subr.mxu0 0.0
        %2740 = vmatpush1.msra.mxu0 0.0
        %2741 = vmatprep.subr.mxu0 0.0
        %2742 = vmatpush1.msra.mxu0 0.0
        %2743 = vmatprep.subr.mxu0 0.0
        %2744 = vmatpush1.msra.mxu0 0.0
        %2745 = vmatprep.subr.mxu0 0.0
        %2746 = vmatpush1.msra.mxu0 0.0
        %2747 = vmatprep.subr.mxu0 0.0
        %2748 = vmatpush1.msra.mxu0 0.0
        %2749 = vmatprep.subr.mxu0 0.0
        %2750 = vmatpush1.msra.mxu0 0.0
        %2751 = vmatprep.subr.mxu0 0.0
        %2752 = vmatpush1.msra.mxu0 0.0
        %2753 = vmatprep.subr.mxu0 0.0
        %2754 = vmatpush1.msra.mxu0 0.0
        %2755 = vmatprep.subr.mxu0 0.0
        %2756 = vmatpush1.msra.mxu0 0.0
        %2757 = vmatprep.subr.mxu0 0.0
        %2758 = vmatpush1.msra.mxu0 0.0
        %2759 = vmatprep.subr.mxu0 0.0
        %2760 = vmatpush1.msra.mxu0 0.0
        %2761 = vmatprep.subr.mxu0 0.0
        %2762 = vmatpush1.msra.mxu0 0.0
        %2763 = vmatprep.subr.mxu0 0.0
        %2764 = vmatpush1.msra.mxu0 0.0
        %2765 = vmatprep.subr.mxu0 0.0
        %2766 = vmatpush1.msra.mxu0 0.0
        %2767 = vmatprep.subr.mxu0 0.0
        %2768 = vmatpush1.msra.mxu0 0.0
        %2769 = vmatprep.subr.mxu0 0.0
        %2770 = vmatpush1.msra.mxu0 0.0
        %2771 = vmatprep.subr.mxu0 0.0
        %2772 = vmatpush1.msra.mxu0 0.0
        %2773 = vmatprep.subr.mxu0 0.0
        %2774 = vmatpush1.msra.mxu0 0.0
        %2775 = vmatprep.subr.mxu0 0.0
        %2776 = vmatpush1.msra.mxu0 0.0
        %2777 = vmatprep.subr.mxu0 0.0
        %2778 = vmatpush1.msra.mxu0 0.0
        %2779 = vmatprep.subr.mxu0 0.0
        %2780 = vmatpush1.msra.mxu0 0.0
        %2781 = vmatprep.subr.mxu0 0.0
        %2782 = vmatpush1.msra.mxu0 0.0
        %2783 = vmatprep.subr.mxu0 0.0
        %2784 = vmatpush1.msra.mxu0 0.0
        %2785 = vmatprep.subr.mxu0 0.0
        %2786 = vmatpush1.msra.mxu0 0.0
        %2787 = vmatprep.subr.mxu0 0.0
        %2788 = vmatpush1.msra.mxu0 0.0
        %2789 = vmatprep.mubr.f32.mxu0 0.0
        %2790 = vmatmul.mubr.f32.gmra.mrb[0].mxu0 %v541
        %v2791 = vpop.f32.mrb[0].mxu0
        %v2792 = vadd.f32 0.0, %v2791
        %v2793 = vpop.f32.mrb[0].mxu0
        %2794 = vmatprep.mubr.f32.mxu0 0.0
        %2795 = vmatmul.mubr.f32.gmra.mrb[0].mxu0 %v544
        %v2796 = vpop.f32.mrb[0].mxu0
        %v2797 = vadd.f32 0.0, %v2796
        %v2798 = vpop.f32.mrb[0].mxu0
        %2799 = vmatprep.mubr.f32.mxu0 0.0
        %2800 = vmatmul.mubr.f32.gmra.mrb[0].mxu0 %v547
        %v2801 = vpop.f32.mrb[0].mxu0
        %v2802 = vadd.f32 0.0, %v2801
        %v2803 = vpop.f32.mrb[0].mxu0
        %2804 = vmatprep.mubr.f32.mxu0 0.0
        %2805 = vmatmul.mubr.f32.gmra.mrb[0].mxu0 %v550
        %v2806 = vpop.f32.mrb[0].mxu0
        %v2807 = vadd.f32 0.0, %v2806
        %v2808 = vpop.f32.mrb[0].mxu0
        %2809 = vmatprep.mubr.f32.mxu0 0.0
        %2810 = vmatmul.mubr.f32.gmra.mrb[0].mxu0 %v553
        %v2811 = vpop.f32.mrb[0].mxu0
        %v2812 = vadd.f32 0.0, %v2811
        %v2813 = vpop.f32.mrb[0].mxu0
        %2814 = vmatprep.mubr.f32.mxu0 0.0
        %2815 = vmatmul.mubr.f32.gmra.mrb[0].mxu0 %v556
        %v2816 = vpop.f32.mrb[0].mxu0
        %v2817 = vadd.f32 0.0, %v2816
        %v2818 = vpop.f32.mrb[0].mxu0
        %2819 = vmatprep.mubr.f32.mxu0 0.0
        %2820 = vmatmul.mubr.f32.gmra.mrb[0].mxu0 %v559
        %v2821 = vpop.f32.mrb[0].mxu0
        %v2822 = vadd.f32 0.0, %v2821
        %v2823 = vpop.f32.mrb[0].mxu0
        %2824 = vmatprep.mubr.f32.mxu0 0.0
        %2825 = vmatmul.mubr.f32.gmra.mrb[0].mxu0 %v562
        %v2826 = vpop.f32.mrb[0].mxu0
        %v2827 = vadd.f32 0.0, %v2826
        %v2828 = vpop.f32.mrb[0].mxu0
        %2829 = vdwg.mxu0
        %s2830 = scalar_lea.vmem %s5, 80
        %v2831 = vld [vmem:[%s2830] sm:$0xff]
        %v2832 = vld [vmem:[%s2830 + $0x8] sm:$0xff]
        %v2834 = vsel %vm348, %v2812, 0
        %v2837 = vsel %vm348, %v2817, 0
        %v2840 = vsel %vm348, %v2822, 0
        %v2843 = vsel %vm348, %v2827, 0
        %2845 = vmatprep.subr.mxu0 0.0
        %2846 = vmatpush1.msra.mxu0 %v2832
        %2847 = vmatprep.subr.mxu0 0.0
        %2848 = vmatpush1.msra.mxu0 0.0
        %2849 = vmatprep.subr.mxu0 0.0
        %2850 = vmatpush1.msra.mxu0 0.0
        %2851 = vmatprep.subr.mxu0 0.0
        %2852 = vmatpush1.msra.mxu0 0.0
        %2853 = vmatprep.subr.mxu0 0.0
        %2854 = vmatpush1.msra.mxu0 0.0
        %2855 = vmatprep.subr.mxu0 0.0
        %2856 = vmatpush1.msra.mxu0 0.0
        %2857 = vmatprep.subr.mxu0 0.0
        %2858 = vmatpush1.msra.mxu0 0.0
        %2859 = vmatprep.subr.mxu0 0.0
        %2860 = vmatpush1.msra.mxu0 0.0
        %2861 = vmatprep.subr.mxu0 0.0
        %2862 = vmatpush1.msra.mxu0 0.0
        %2863 = vmatprep.subr.mxu0 0.0
        %2864 = vmatpush1.msra.mxu0 0.0
        %2865 = vmatprep.subr.mxu0 0.0
        %2866 = vmatpush1.msra.mxu0 0.0
        %2867 = vmatprep.subr.mxu0 0.0
        %2868 = vmatpush1.msra.mxu0 0.0
        %2869 = vmatprep.subr.mxu0 0.0
        %2870 = vmatpush1.msra.mxu0 0.0
        %2871 = vmatprep.subr.mxu0 0.0
        %2872 = vmatpush1.msra.mxu0 0.0
        %2873 = vmatprep.subr.mxu0 0.0
        %2874 = vmatpush1.msra.mxu0 0.0
        %2875 = vmatprep.subr.mxu0 0.0
        %2876 = vmatpush1.msra.mxu0 0.0
        %2877 = vmatprep.subr.mxu0 0.0
        %2878 = vmatpush1.msra.mxu0 0.0
        %2879 = vmatprep.subr.mxu0 0.0
        %2880 = vmatpush1.msra.mxu0 0.0
        %2881 = vmatprep.subr.mxu0 0.0
        %2882 = vmatpush1.msra.mxu0 0.0
        %2883 = vmatprep.subr.mxu0 0.0
        %2884 = vmatpush1.msra.mxu0 0.0
        %2885 = vmatprep.subr.mxu0 0.0
        %2886 = vmatpush1.msra.mxu0 0.0
        %2887 = vmatprep.subr.mxu0 0.0
        %2888 = vmatpush1.msra.mxu0 0.0
        %2889 = vmatprep.subr.mxu0 0.0
        %2890 = vmatpush1.msra.mxu0 0.0
        %2891 = vmatprep.subr.mxu0 0.0
        %2892 = vmatpush1.msra.mxu0 0.0
        %2893 = vmatprep.subr.mxu0 0.0
        %2894 = vmatpush1.msra.mxu0 0.0
        %2895 = vmatprep.subr.mxu0 0.0
        %2896 = vmatpush1.msra.mxu0 0.0
        %2897 = vmatprep.subr.mxu0 0.0
        %2898 = vmatpush1.msra.mxu0 0.0
        %2899 = vmatprep.subr.mxu0 0.0
        %2900 = vmatpush1.msra.mxu0 0.0
        %2901 = vmatprep.subr.mxu0 0.0
        %2902 = vmatpush1.msra.mxu0 0.0
        %2903 = vmatprep.subr.mxu0 0.0
        %2904 = vmatpush1.msra.mxu0 0.0
        %2905 = vmatprep.subr.mxu0 0.0
        %2906 = vmatpush1.msra.mxu0 0.0
        %2907 = vmatprep.subr.mxu0 0.0
        %2908 = vmatpush1.msra.mxu0 0.0
        %2909 = vmatprep.mubr.f32.mxu0 0.0
        %2910 = vmatmul.mubr.f32.gmra.mrb[0].mxu0 %v2834
        %v2911 = vpop.f32.mrb[0].mxu0
        %v2912 = vadd.f32 0.0, %v2911
        %v2913 = vpop.f32.mrb[0].mxu0
        %2914 = vmatprep.mubr.f32.mxu0 0.0
        %2915 = vmatmul.mubr.f32.gmra.mrb[0].mxu0 %v2837
        %v2916 = vpop.f32.mrb[0].mxu0
        %v2917 = vadd.f32 0.0, %v2916
        %v2918 = vpop.f32.mrb[0].mxu0
        %2919 = vmatprep.mubr.f32.mxu0 0.0
        %2920 = vmatmul.mubr.f32.gmra.mrb[0].mxu0 %v2840
        %v2921 = vpop.f32.mrb[0].mxu0
        %v2922 = vadd.f32 0.0, %v2921
        %v2923 = vpop.f32.mrb[0].mxu0
        %2924 = vmatprep.mubr.f32.mxu0 0.0
        %2925 = vmatmul.mubr.f32.gmra.mrb[0].mxu0 %v2843
        %v2926 = vpop.f32.mrb[0].mxu0
        %v2927 = vadd.f32 0.0, %v2926
        %v2928 = vpop.f32.mrb[0].mxu0
        %2929 = vdwg.mxu0
        %v2931 = vsel %vm348, %v2792, 0
        %v2934 = vsel %vm348, %v2797, 0
        %v2937 = vsel %vm348, %v2802, 0
        %v2940 = vsel %vm348, %v2807, 0
        %2942 = vmatprep.subr.mxu0 0.0
        %2943 = vmatpush1.msra.mxu0 %v2831
        %2944 = vmatprep.subr.mxu0 0.0
        %2945 = vmatpush1.msra.mxu0 0.0
        %2946 = vmatprep.subr.mxu0 0.0
        %2947 = vmatpush1.msra.mxu0 0.0
        %2948 = vmatprep.subr.mxu0 0.0
        %2949 = vmatpush1.msra.mxu0 0.0
        %2950 = vmatprep.subr.mxu0 0.0
        %2951 = vmatpush1.msra.mxu0 0.0
        %2952 = vmatprep.subr.mxu0 0.0
        %2953 = vmatpush1.msra.mxu0 0.0
        %2954 = vmatprep.subr.mxu0 0.0
        %2955 = vmatpush1.msra.mxu0 0.0
        %2956 = vmatprep.subr.mxu0 0.0
        %2957 = vmatpush1.msra.mxu0 0.0
        %2958 = vmatprep.subr.mxu0 0.0
        %2959 = vmatpush1.msra.mxu0 0.0
        %2960 = vmatprep.subr.mxu0 0.0
        %2961 = vmatpush1.msra.mxu0 0.0
        %2962 = vmatprep.subr.mxu0 0.0
        %2963 = vmatpush1.msra.mxu0 0.0
        %2964 = vmatprep.subr.mxu0 0.0
        %2965 = vmatpush1.msra.mxu0 0.0
        %2966 = vmatprep.subr.mxu0 0.0
        %2967 = vmatpush1.msra.mxu0 0.0
        %2968 = vmatprep.subr.mxu0 0.0
        %2969 = vmatpush1.msra.mxu0 0.0
        %2970 = vmatprep.subr.mxu0 0.0
        %2971 = vmatpush1.msra.mxu0 0.0
        %2972 = vmatprep.subr.mxu0 0.0
        %2973 = vmatpush1.msra.mxu0 0.0
        %2974 = vmatprep.subr.mxu0 0.0
        %2975 = vmatpush1.msra.mxu0 0.0
        %2976 = vmatprep.subr.mxu0 0.0
        %2977 = vmatpush1.msra.mxu0 0.0
        %2978 = vmatprep.subr.mxu0 0.0
        %2979 = vmatpush1.msra.mxu0 0.0
        %2980 = vmatprep.subr.mxu0 0.0
        %2981 = vmatpush1.msra.mxu0 0.0
        %2982 = vmatprep.subr.mxu0 0.0
        %2983 = vmatpush1.msra.mxu0 0.0
        %2984 = vmatprep.subr.mxu0 0.0
        %2985 = vmatpush1.msra.mxu0 0.0
        %2986 = vmatprep.subr.mxu0 0.0
        %2987 = vmatpush1.msra.mxu0 0.0
        %2988 = vmatprep.subr.mxu0 0.0
        %2989 = vmatpush1.msra.mxu0 0.0
        %2990 = vmatprep.subr.mxu0 0.0
        %2991 = vmatpush1.msra.mxu0 0.0
        %2992 = vmatprep.subr.mxu0 0.0
        %2993 = vmatpush1.msra.mxu0 0.0
        %2994 = vmatprep.subr.mxu0 0.0
        %2995 = vmatpush1.msra.mxu0 0.0
        %2996 = vmatprep.subr.mxu0 0.0
        %2997 = vmatpush1.msra.mxu0 0.0
        %2998 = vmatprep.subr.mxu0 0.0
        %2999 = vmatpush1.msra.mxu0 0.0
        %3000 = vmatprep.subr.mxu0 0.0
        %3001 = vmatpush1.msra.mxu0 0.0
        %3002 = vmatprep.subr.mxu0 0.0
        %3003 = vmatpush1.msra.mxu0 0.0
        %3004 = vmatprep.subr.mxu0 0.0
        %3005 = vmatpush1.msra.mxu0 0.0
        %3006 = vmatprep.mubr.f32.mxu0 0.0
        %3007 = vmatmul.mubr.f32.gmra.mrb[0].mxu0 %v2931
        %v3008 = vpop.f32.mrb[0].mxu0
        %v3009 = vadd.f32 %v2912, %v3008
        %v3010 = vpop.f32.mrb[0].mxu0
        %3011 = vmatprep.mubr.f32.mxu0 0.0
        %3012 = vmatmul.mubr.f32.gmra.mrb[0].mxu0 %v2934
        %v3013 = vpop.f32.mrb[0].mxu0
        %v3014 = vadd.f32 %v2917, %v3013
        %v3015 = vpop.f32.mrb[0].mxu0
        %3016 = vmatprep.mubr.f32.mxu0 0.0
        %3017 = vmatmul.mubr.f32.gmra.mrb[0].mxu0 %v2937
        %v3018 = vpop.f32.mrb[0].mxu0
        %v3019 = vadd.f32 %v2922, %v3018
        %v3020 = vpop.f32.mrb[0].mxu0
        %3021 = vmatprep.mubr.f32.mxu0 0.0
        %3022 = vmatmul.mubr.f32.gmra.mrb[0].mxu0 %v2940
        %v3023 = vpop.f32.mrb[0].mxu0
        %v3024 = vadd.f32 %v2927, %v3023
        %v3025 = vpop.f32.mrb[0].mxu0
        %3026 = vdwg.mxu0
        %v3027 = vld [vmem:[%s535] sm:$0xff]
        %v3028 = vld [vmem:[%s535 + $0x8] sm:$0xff]
        %v3029 = vld [vmem:[%s535 + $0x10] sm:$0xff]
        %v3030 = vld [vmem:[%s535 + $0x18] sm:$0xff]
        %v3031 = vadd.f32 %v3009, %v3027
        %v3032 = vadd.f32 %v3014, %v3028
        %v3033 = vadd.f32 %v3019, %v3029
        %v3034 = vadd.f32 %v3024, %v3030
        %v3035 = vsub.f32 0.0, %v3031
        %v3036 = vsub.f32 0.0, %v3032
        %v3037 = vsub.f32 0.0, %v3033
        %v3038 = vsub.f32 0.0, %v3034
        %v3039 = vmul.f32 %v3035, 1.442695
        %v3040 = vpow.pop %v3039
        %v3041 = vmul.f32 %v3036, 1.442695
        %v3042 = vpow.pop %v3041
        %v3043 = vmul.f32 %v3037, 1.442695
        %v3044 = vpow.pop %v3043
        %v3045 = vmul.f32 %v3038, 1.442695
        %v3046 = vpow.pop %v3045
        %v3047 = vadd.f32 %v3040, 1.0
        %v3048 = vadd.f32 %v3042, 1.0
        %v3049 = vadd.f32 %v3044, 1.0
        %v3050 = vadd.f32 %v3046, 1.0
        %v3051 = vrcp.pop %v3047
        %v3052 = vrcp.pop %v3048
        %v3053 = vrcp.pop %v3049
        %v3054 = vrcp.pop %v3050
        %v3055 = vmax.f32 %v3031, 0.0
        %v3056 = vmax.f32 %v3032, 0.0
        %v3057 = vmax.f32 %v3033, 0.0
        %v3058 = vmax.f32 %v3034, 0.0
        %3063 = vrot.lane.b32.xlu0 %v3055, 120
        %v3064 = vpop.permute.xlu0 %3063
        %3065 = vrot.lane.b32.xlu0 %v3056, 120
        %v3066 = vpop.permute.xlu0 %3065
        %3067 = vrot.lane.b32.xlu0 %v3057, 120
        %v3068 = vpop.permute.xlu0 %3067
        %3069 = vrot.lane.b32.xlu0 %v3058, 120
        %v3070 = vpop.permute.xlu0 %3069
        %v3075 = vmul.f32 %v3051, %v3064
        %v3076 = vmul.f32 %v3052, %v3066
        %v3077 = vmul.f32 %v3053, %v3068
        %v3078 = vmul.f32 %v3054, %v3070
        %3079 = vmatprep.subr.mxu0 0.0
        %3080 = vmatpush1.msra.mxu0 %v3075
        %3081 = vmatprep.subr.mxu0 0.0
        %3082 = vmatpush1.msra.mxu0 %v3076
        %3083 = vmatprep.subr.mxu0 0.0
        %3084 = vmatpush1.msra.mxu0 %v3077
        %3085 = vmatprep.subr.mxu0 0.0
        %3086 = vmatpush1.msra.mxu0 %v3078
        %3087 = vmatprep.subr.mxu0 0.0
        %3088 = vmatpush1.msra.mxu0 0.0
        %3089 = vmatprep.subr.mxu0 0.0
        %3090 = vmatpush1.msra.mxu0 0.0
        %3091 = vmatprep.subr.mxu0 0.0
        %3092 = vmatpush1.msra.mxu0 0.0
        %3093 = vmatprep.subr.mxu0 0.0
        %3094 = vmatpush1.msra.mxu0 0.0
        %3095 = vmatprep.subr.mxu0 0.0
        %3096 = vmatpush1.msra.mxu0 0.0
        %3097 = vmatprep.subr.mxu0 0.0
        %3098 = vmatpush1.msra.mxu0 0.0
        %3099 = vmatprep.subr.mxu0 0.0
        %3100 = vmatpush1.msra.mxu0 0.0
        %3101 = vmatprep.subr.mxu0 0.0
        %3102 = vmatpush1.msra.mxu0 0.0
        %3103 = vmatprep.subr.mxu0 0.0
        %3104 = vmatpush1.msra.mxu0 0.0
        %3105 = vmatprep.subr.mxu0 0.0
        %3106 = vmatpush1.msra.mxu0 0.0
        %3107 = vmatprep.subr.mxu0 0.0
        %3108 = vmatpush1.msra.mxu0 0.0
        %3109 = vmatprep.subr.mxu0 0.0
        %3110 = vmatpush1.msra.mxu0 0.0
        %3111 = vmatprep.subr.mxu0 0.0
        %3112 = vmatpush1.msra.mxu0 0.0
        %3113 = vmatprep.subr.mxu0 0.0
        %3114 = vmatpush1.msra.mxu0 0.0
        %3115 = vmatprep.subr.mxu0 0.0
        %3116 = vmatpush1.msra.mxu0 0.0
        %3117 = vmatprep.subr.mxu0 0.0
        %3118 = vmatpush1.msra.mxu0 0.0
        %3119 = vmatprep.subr.mxu0 0.0
        %3120 = vmatpush1.msra.mxu0 0.0
        %3121 = vmatprep.subr.mxu0 0.0
        %3122 = vmatpush1.msra.mxu0 0.0
        %3123 = vmatprep.subr.mxu0 0.0
        %3124 = vmatpush1.msra.mxu0 0.0
        %3125 = vmatprep.subr.mxu0 0.0
        %3126 = vmatpush1.msra.mxu0 0.0
        %3127 = vmatprep.subr.mxu0 0.0
        %3128 = vmatpush1.msra.mxu0 0.0
        %3129 = vmatprep.subr.mxu0 0.0
        %3130 = vmatpush1.msra.mxu0 0.0
        %3131 = vmatprep.subr.mxu0 0.0
        %3132 = vmatpush1.msra.mxu0 0.0
        %3133 = vmatprep.subr.mxu0 0.0
        %3134 = vmatpush1.msra.mxu0 0.0
        %3135 = vmatprep.subr.mxu0 0.0
        %3136 = vmatpush1.msra.mxu0 0.0
        %3137 = vmatprep.subr.mxu0 0.0
        %3138 = vmatpush1.msra.mxu0 0.0
        %3139 = vmatprep.subr.mxu0 0.0
        %3140 = vmatpush1.msra.mxu0 0.0
        %3141 = vmatprep.subr.mxu0 0.0
        %3142 = vmatpush1.msra.mxu0 0.0
        %3143 = vmatprep.mubr.f32.mxu0 0.0
        %3144 = vmatmul.mubr.f32.gmra.mrb[0].mxu0 %v919
        %v3145 = vpop.f32.mrb[0].mxu0
        %v3146 = vadd.f32 0.0, %v3145
        %v3147 = vpop.f32.mrb[0].mxu0
        %3148 = vmatprep.mubr.f32.mxu0 0.0
        %3149 = vmatmul.mubr.f32.gmra.mrb[0].mxu0 %v922
        %v3150 = vpop.f32.mrb[0].mxu0
        %v3151 = vadd.f32 0.0, %v3150
        %v3152 = vpop.f32.mrb[0].mxu0
        %3153 = vdwg.mxu0
        %v3154 = vadd.f32 %v2723, %v3146
        %v3155 = vadd.f32 %v2724, %v3151
        %v3156 = vld [vmem:[%s2] sm:$0x3]
        %v3158 = vsel %vm446, %v3156, 0
        %3160 = vmatprep.subr.mxu0 0.0
        %3161 = vmatpush1.msra.mxu0 %v3154
        %3162 = vmatprep.subr.mxu0 0.0
        %3163 = vmatpush1.msra.mxu0 %v3155
        %3164 = vmatprep.subr.mxu0 0.0
        %3165 = vmatpush1.msra.mxu0 0.0
        %3166 = vmatprep.subr.mxu0 0.0
        %3167 = vmatpush1.msra.mxu0 0.0
        %3168 = vmatprep.subr.mxu0 0.0
        %3169 = vmatpush1.msra.mxu0 0.0
        %3170 = vmatprep.subr.mxu0 0.0
        %3171 = vmatpush1.msra.mxu0 0.0
        %3172 = vmatprep.subr.mxu0 0.0
        %3173 = vmatpush1.msra.mxu0 0.0
        %3174 = vmatprep.subr.mxu0 0.0
        %3175 = vmatpush1.msra.mxu0 0.0
        %3176 = vmatprep.subr.mxu0 0.0
        %3177 = vmatpush1.msra.mxu0 0.0
        %3178 = vmatprep.subr.mxu0 0.0
        %3179 = vmatpush1.msra.mxu0 0.0
        %3180 = vmatprep.subr.mxu0 0.0
        %3181 = vmatpush1.msra.mxu0 0.0
        %3182 = vmatprep.subr.mxu0 0.0
        %3183 = vmatpush1.msra.mxu0 0.0
        %3184 = vmatprep.subr.mxu0 0.0
        %3185 = vmatpush1.msra.mxu0 0.0
        %3186 = vmatprep.subr.mxu0 0.0
        %3187 = vmatpush1.msra.mxu0 0.0
        %3188 = vmatprep.subr.mxu0 0.0
        %3189 = vmatpush1.msra.mxu0 0.0
        %3190 = vmatprep.subr.mxu0 0.0
        %3191 = vmatpush1.msra.mxu0 0.0
        %3192 = vmatprep.subr.mxu0 0.0
        %3193 = vmatpush1.msra.mxu0 0.0
        %3194 = vmatprep.subr.mxu0 0.0
        %3195 = vmatpush1.msra.mxu0 0.0
        %3196 = vmatprep.subr.mxu0 0.0
        %3197 = vmatpush1.msra.mxu0 0.0
        %3198 = vmatprep.subr.mxu0 0.0
        %3199 = vmatpush1.msra.mxu0 0.0
        %3200 = vmatprep.subr.mxu0 0.0
        %3201 = vmatpush1.msra.mxu0 0.0
        %3202 = vmatprep.subr.mxu0 0.0
        %3203 = vmatpush1.msra.mxu0 0.0
        %3204 = vmatprep.subr.mxu0 0.0
        %3205 = vmatpush1.msra.mxu0 0.0
        %3206 = vmatprep.subr.mxu0 0.0
        %3207 = vmatpush1.msra.mxu0 0.0
        %3208 = vmatprep.subr.mxu0 0.0
        %3209 = vmatpush1.msra.mxu0 0.0
        %3210 = vmatprep.subr.mxu0 0.0
        %3211 = vmatpush1.msra.mxu0 0.0
        %3212 = vmatprep.subr.mxu0 0.0
        %3213 = vmatpush1.msra.mxu0 0.0
        %3214 = vmatprep.subr.mxu0 0.0
        %3215 = vmatpush1.msra.mxu0 0.0
        %3216 = vmatprep.subr.mxu0 0.0
        %3217 = vmatpush1.msra.mxu0 0.0
        %3218 = vmatprep.subr.mxu0 0.0
        %3219 = vmatpush1.msra.mxu0 0.0
        %3220 = vmatprep.subr.mxu0 0.0
        %3221 = vmatpush1.msra.mxu0 0.0
        %3222 = vmatprep.subr.mxu0 0.0
        %3223 = vmatpush1.msra.mxu0 0.0
        %3224 = vmatprep.mubr.f32.mxu0 0.0
        %3225 = vmatmul.mubr.f32.gmra.mrb[0].mxu0 %v3158
        %v3226 = vpop.f32.mrb[0].mxu0
        %v3227 = vadd.f32 0.0, %v3226
        %v3228 = vpop.f32.mrb[0].mxu0
        %3229 = vdwg.mxu0
        %vm3230 = vcmask 58368
        %3231 = vst.msk [vmem:[%s313] sm:$0x3] %vm3230, %v3227
        %s3232 = sand.u32 %s208, 1
        %s3233 = scalar_lea.sflag [#allocation4], %s3232
        %s3234 = sand.u32 %s208, 1
        %s3235 = smul.addr %s3234, 2
        %s3236 = scalar_lea.vmem [#allocation3], %s3235
        // Predicated region
        $region53: #{tpu_custom_call.1} parent=51 // pred_check
          %p3237 = pneg %p218
        $region54: #{tpu_custom_call.1} parent=51 // pred_check_branch
          %3239 = sbr.rel (%p3237) target = $region56
        $region55: #{tpu_custom_call.1} parent=51 // pred_region
          %s3241 = ssub.s32 32, 32
          %3242 = vsyncadd %s3233, %s3241
          %s3243 = smul.addr %s22, 32
          %s3244 = scalar_lea.hbm %s8, %s3243
          %s3246 = sshll.u32 %s3236, 4
          %s3247 = int_to_ptr.vmem [resolvable:$true] %s3246
          %3249 = dma.vmem_to_hbm [thread:$0]  %s3247, 32, %s3244, %s3233
        $region56: #{tpu_custom_call.1} parent=51 // pred_fallthru
          _
      $region52: #{tpu_custom_call.1} parent=5 // pred_fallthru
        _
      %p3250 = scmp.le.s32.totalorder 2, %s17
      // Predicated region
      $region57: #{tpu_custom_call.1} parent=5 // pred_check
        %p3251 = pneg %p3250
      $region58: #{tpu_custom_call.1} parent=5 // pred_check_branch
        %3253 = sbr.rel (%p3251) target = $region60
      $region59: #{tpu_custom_call.1} parent=5 // pred_region
        %s3254 = ssub.s32 %s17, 2
        // Predicated region
        $region61: #{tpu_custom_call.1} parent=59 // pred_check
          %p3255 = pneg %p224
        $region62: #{tpu_custom_call.1} parent=59 // pred_check_branch
          %3257 = sbr.rel (%p3255) target = $region64
        $region63: #{tpu_custom_call.1} parent=59 // pred_region
          %s3258 = sand.u32 %s209, 1
          %s3259 = scalar_lea.sflag [#allocation4], %s3258
          %s3260 = sand.u32 %s209, 1
          %s3261 = smul.addr %s3260, 2
          %s3262 = scalar_lea.vmem [#allocation3], %s3261
          %3263 = dma.done %s3259, 32
        $region64: #{tpu_custom_call.1} parent=59 // pred_fallthru
          _
      $region60: #{tpu_custom_call.1} parent=5 // pred_fallthru
        _
    $region6: #{tpu_custom_call.1} parent=1 // loop_footer
      %s21 = sadd.s32 1, %s17
    $region7: #{tpu_custom_call.1} parent=1 // loop_footer_branch
      %16 = sbr.rel target = $region3
    $region8: #{tpu_custom_call.1} parent=1 // loop_exit
      _
    %3264 = vsyncpa [#allocation4], 1
    %s3265 = scalar_lea.sflag [#allocation4], 1
    %3266 = vsyncpa %s3265, 1

</llo_original>
